<compile_context>
chip_gen: v7x
topology: tpu7x:2x2x1
jax: 0.10.0
libtpu: 0.0.40
codegen_flags: <defaults>
</compile_context>

<pallas_src>
import functools

import jax
import jax.numpy as jnp
from jax import lax
from jax.experimental import pallas as pl
from jax.experimental.pallas import tpu as pltpu


def _gelu(x, approximate=False):
    if approximate:
        # tanh-approx GELU: one tanh per element on the EUP (v5e relief).
        c = 0.7978845608028654  # sqrt(2/pi)
        return 0.5 * x * (1.0 + jnp.tanh(c * (x + 0.044715 * x * x * x)))
    # Exact (erf) GELU matching torch.nn.GELU().  erf via Abramowitz & Stegun
    # 7.1.26 (|err| < 1.5e-7); the divide is an EUP approx-reciprocal refined
    # with one Newton step (keeps VALU slots free).
    z = x * 0.7071067811865476
    a1, a2, a3, a4, a5 = (0.254829592, -0.284496736, 1.421413741,
                          -1.453152027, 1.061405429)
    p = 0.3275911
    sign = jnp.where(z >= 0.0, 1.0, -1.0)
    az = jnp.abs(z)
    den = 1.0 + p * az
    r = pl.reciprocal(den, approx=True)
    t = r * (2.0 - den * r)                    # one Newton step
    poly = ((((a5 * t + a4) * t + a3) * t + a2) * t + a1) * t
    erf = sign * (1.0 - poly * jnp.exp(-az * az))
    return 0.5 * x * (1.0 + erf)


def _group_norm(y, mask, gmap, gamma, beta, eps):
    """GroupNorm in [C, P] layout (P = row-restricted padded-grid pixels).

    mask : [1, P]  1.0 on valid columns, 0.0 on halo columns (excluded from stats)
    gmap : [C, C]  same-group indicator / (group_size * n_valid_pixels)
    gamma, beta : [C, 1]
    Two-pass (centered) variance; per-channel scale rsqrt(var)*gamma is folded
    so the apply is a single [C,P] mul + add.
    """
    sum_c = jnp.sum(y * mask, axis=1, keepdims=True)                    # [C,1]
    mean_c = jnp.dot(gmap, sum_c, preferred_element_type=jnp.float32)   # [C,1]
    d = y - mean_c
    ss_c = jnp.sum(d * d * mask, axis=1, keepdims=True)                 # [C,1]
    var_c = jnp.dot(gmap, ss_c, preferred_element_type=jnp.float32)     # [C,1]
    scale = lax.rsqrt(var_c + eps) * gamma                              # [C,1]
    return d * scale + beta


def _dilated_block_kernel(x_ref, w_ref, mask_ref, g1_ref, b1_ref, gm1_ref,
                          wf_ref, g2_ref, b2_ref, gm2_ref, o_ref, patch_ref,
                          *, offsets, cin, n_pix, eps, approx_gelu):
    # x_ref    : [Cin, Next]     once-padded, flattened, flat-extended input
    # w_ref    : [Cout, T*Cin]   merged per-(branch, tap) conv weights
    # patch_ref: [T*Cin, n_pix]  VMEM im2col scratch (built below)
    # mask_ref : [1, n_pix]      1.0 on valid (non-halo-column) pixels
    # gm*_ref  : [Cout, Cout]    scaled same-group matrices
    # g*/b*    : [Cout, 1]       GroupNorm affine params
    # wf_ref   : [Cout, Cout]    1x1 fusion conv weight
    # o_ref    : [Cout, n_pix]   lane-dense output block

    # ---- one-time im2col build: T static-offset window copies --------------
    # (folds the per-tap unaligned lane slices into a single scratch build)
    for i, off in enumerate(offsets):                  # static unroll
        patch_ref[i * cin:(i + 1) * cin, :] = x_ref[:, off:off + n_pix]

    # ---- all 4 dilated 3x3 convs as ONE MXU contraction (K = T*Cin) --------
    y = jnp.dot(w_ref[...], patch_ref[...], preferred_element_type=jnp.float32)

    mask = mask_ref[...]
    # ---- branch GroupNorm + GELU (branches = disjoint channel groups) ------
    y = _group_norm(y, mask, gm1_ref[...], g1_ref[...], b1_ref[...], eps)
    y = _gelu(y, approx_gelu)

    # ---- 1x1 fusion conv + GroupNorm + GELU (f32 throughout) ---------------
    y = jnp.dot(wf_ref[...], y, preferred_element_type=jnp.float32)
    y = _group_norm(y, mask, gm2_ref[...], g2_ref[...], b2_ref[...], eps)
    y = _gelu(y, approx_gelu)

    # Dropout(0.0) is an identity -> omitted.
    o_ref[...] = y.astype(o_ref.dtype)


def dilated_conv_block(x, params, *, dilations=(1, 2, 4, 8), eps=1e-5,
                       mxu_dtype=jnp.bfloat16, approx_gelu=False):
    """x: [B, Cin, H, W] (NCHW, like PyTorch). Returns [B, Cout, H, W]."""
    B, Cin, H, W = x.shape
    n_br = len(dilations)
    w_br = params["branch_conv_w"]                   # [n_br, Cb, Cin, 3, 3]
    Cb = w_br.shape[1]
    Cout = Cb * n_br
    mp = max(dilations)                              # single halo = max dilation
    Hp, Wp = H + 2 * mp, W + 2 * mp
    n_pix = H * Wp                                   # valid rows only (x halo cols)
    n_valid = H * W
    # flat extension of `mp` on each side keeps every tap slice in-bounds;
    # pad the extended flat length up to a lane-tile multiple.
    next_ = pl.cdiv(Hp * Wp + 2 * mp, 128) * 128
    base = mp + mp * Wp                              # start of first valid row

    # --- input prep: pad once, flatten spatial, extend flat ends ------------
    xp = jnp.pad(x, ((0, 0), (0, 0), (mp, mp), (mp, mp)))
    x_ext = jnp.pad(xp.reshape(B, Cin, Hp * Wp),
                    ((0, 0), (0, 0), (mp, next_ - Hp * Wp - mp))
                    ).astype(mxu_dtype)

    # --- merged per-(branch, tap) weight [Cout, T*Cin] + static offsets -----
    T = n_br * 9
    K = T * Cin
    w_all = jnp.zeros((Cout, K), jnp.float32)
    offsets = []
    t = 0
    for bi, d in enumerate(dilations):
        for kh in range(3):
            for kw in range(3):
                w_all = w_all.at[bi * Cb:(bi + 1) * Cb,
                                 t * Cin:(t + 1) * Cin].set(
                    w_br[bi, :, :, kh, kw].astype(jnp.float32))
                offsets.append(base + (kh - 1) * d * Wp + (kw - 1) * d)
                t += 1
    w_all = w_all.astype(mxu_dtype)

    # --- validity mask: halo columns excluded from GN statistics ------------
    col = jnp.arange(n_pix, dtype=jnp.int32) % Wp
    mask = ((col >= mp) & (col < mp + W)).astype(jnp.float32).reshape(1, n_pix)

    # --- GroupNorm group maps (scaled same-group indicator matrices) --------
    def _num_groups(c):
        return min(32, c // 4) if c >= 4 else 1

    cid = jnp.arange(Cout)
    g1 = _num_groups(Cb)                             # per-branch GroupNorm
    cg1 = Cb // g1
    gid1 = (cid // Cb) * g1 + (cid % Cb) // cg1
    gmap1 = (gid1[:, None] == gid1[None, :]).astype(jnp.float32) / float(cg1 * n_valid)

    g2 = _num_groups(Cout)                           # fusion GroupNorm
    cg2 = Cout // g2
    gid2 = cid // cg2
    gmap2 = (gid2[:, None] == gid2[None, :]).astype(jnp.float32) / float(cg2 * n_valid)

    gamma1 = params["branch_gn_gamma"].reshape(Cout, 1).astype(jnp.float32)
    beta1 = params["branch_gn_beta"].reshape(Cout, 1).astype(jnp.float32)
    wf = params["fuse_conv_w"].reshape(Cout, Cout).astype(jnp.float32)
    gamma2 = params["fuse_gn_gamma"].reshape(Cout, 1).astype(jnp.float32)
    beta2 = params["fuse_gn_beta"].reshape(Cout, 1).astype(jnp.float32)

    # --- VMEM budget (cap <= half of per-TensorCore VMEM; 32 MiB on v7x) ----
    isz = jnp.dtype(mxu_dtype).itemsize
    osz = jnp.dtype(x.dtype).itemsize
    est = (2 * Cin * next_ * isz + 2 * Cout * n_pix * osz     # in/out dbl-buf
           + K * n_pix * isz                                  # im2col scratch
           + (Cout * K) * isz                                 # merged weight
           + 4 * (3 * Cout * Cout + 4 * Cout + n_pix)         # small consts
           + 4 * Cout * n_pix * 4)                            # f32 temps headroom
    try:
        vmem_cap = pltpu.get_tpu_info().vmem_capacity_bytes // 2
    except Exception:
        vmem_cap = 32 << 20                                   # v7x-safe default
    vmem_limit = int(min(vmem_cap, max(4 * est, 16 << 20)))

    # --- advisory cost estimate (useful work only, per review) --------------
    macs = B * n_valid * (9 * Cin * Cout + Cout * Cout)
    cost = pl.CostEstimate(
        flops=int(2 * macs + 30 * B * n_pix * Cout),
        transcendentals=int(2 * B * n_pix * Cout),
        bytes_accessed=int(B * Cin * next_ * isz + Cout * K * isz
                           + B * Cout * n_pix * osz
                           + 4 * (3 * Cout * Cout + 4 * Cout + n_pix)))

    kernel = functools.partial(_dilated_block_kernel, offsets=tuple(offsets),
                               cin=Cin, n_pix=n_pix, eps=eps,
                               approx_gelu=approx_gelu)

    out = pl.pallas_call(
        kernel,
        out_shape=jax.ShapeDtypeStruct((B, Cout, n_pix), x.dtype),
        grid_spec=pltpu.PrefetchScalarGridSpec(
            num_scalar_prefetch=0,
            grid=(B,),
            in_specs=[
                pl.BlockSpec((None, Cin, next_), lambda b: (b, 0, 0)),
                pl.BlockSpec((Cout, K), lambda b: (0, 0)),
                pl.BlockSpec((1, n_pix), lambda b: (0, 0)),
                pl.BlockSpec((Cout, 1), lambda b: (0, 0)),
                pl.BlockSpec((Cout, 1), lambda b: (0, 0)),
                pl.BlockSpec((Cout, Cout), lambda b: (0, 0)),
                pl.BlockSpec((Cout, Cout), lambda b: (0, 0)),
                pl.BlockSpec((Cout, 1), lambda b: (0, 0)),
                pl.BlockSpec((Cout, 1), lambda b: (0, 0)),
                pl.BlockSpec((Cout, Cout), lambda b: (0, 0)),
            ],
            out_specs=pl.BlockSpec((None, Cout, n_pix), lambda b: (b, 0, 0)),
            scratch_shapes=[pltpu.VMEM((K, n_pix), mxu_dtype)],
        ),
        compiler_params=pltpu.CompilerParams(
            dimension_semantics=("parallel",),
            vmem_limit_bytes=vmem_limit),
        cost_estimate=cost,
    )(x_ext, w_all, mask, gamma1, beta1, gmap1, wf, gamma2, beta2, gmap2)

    # Channel-major already: reshape rows back and drop the halo columns.
    return out.reshape(B, Cout, H, Wp)[:, :, :, mp:mp + W]


def _reference(x, params, *, dilations=(1, 2, 4, 8), eps=1e-5):
    """Pure-JAX (XLA) reference of the same forward pass."""
    n_br = len(dilations)
    w_br = params["branch_conv_w"]
    Cb = w_br.shape[1]
    Cout = Cb * n_br

    def num_groups(c):
        return min(32, c // 4) if c >= 4 else 1

    def group_norm(y, groups, gamma, beta):
        B, C, H, W = y.shape
        yg = y.reshape(B, groups, C // groups, H, W)
        mean = yg.mean(axis=(2, 3, 4), keepdims=True)
        var = ((yg - mean) ** 2).mean(axis=(2, 3, 4), keepdims=True)
        yn = ((yg - mean) / jnp.sqrt(var + eps)).reshape(B, C, H, W)
        return yn * gamma.reshape(1, C, 1, 1) + beta.reshape(1, C, 1, 1)

    feats = []
    for bi, d in enumerate(dilations):
        y = lax.conv_general_dilated(
            x, w_br[bi], (1, 1), ((d, d), (d, d)), rhs_dilation=(d, d),
            dimension_numbers=("NCHW", "OIHW", "NCHW"),
            precision=lax.Precision.HIGHEST)
        y = group_norm(y, num_groups(Cb),
                       params["branch_gn_gamma"][bi],
                       params["branch_gn_beta"][bi])
        feats.append(jax.nn.gelu(y, approximate=False))
    f = jnp.concatenate(feats, axis=1)
    y = lax.conv_general_dilated(
        f, params["fuse_conv_w"], (1, 1), ((0, 0), (0, 0)),
        dimension_numbers=("NCHW", "OIHW", "NCHW"),
        precision=lax.Precision.HIGHEST)
    y = group_norm(y, num_groups(Cout),
                   params["fuse_gn_gamma"], params["fuse_gn_beta"])
    return jax.nn.gelu(y, approximate=False)


if __name__ == "__main__":
    B, Cin, Cout, H, W = 2, 4, 16, 16, 16
    dilations = (1, 2, 4, 8)
    n_br = len(dilations)
    Cb = Cout // n_br

    key = jax.random.PRNGKey(0)
    ks = jax.random.split(key, 7)
    params = {
        "branch_conv_w": 0.15 * jax.random.normal(
            ks[0], (n_br, Cb, Cin, 3, 3), jnp.float32),
        "branch_gn_gamma": 1.0 + 0.05 * jax.random.normal(
            ks[1], (n_br, Cb), jnp.float32),
        "branch_gn_beta": 0.05 * jax.random.normal(ks[2], (n_br, Cb), jnp.float32),
        "fuse_conv_w": 0.2 * jax.random.normal(
            ks[3], (Cout, Cout, 1, 1), jnp.float32),
        "fuse_gn_gamma": 1.0 + 0.05 * jax.random.normal(ks[4], (Cout,), jnp.float32),
        "fuse_gn_beta": 0.05 * jax.random.normal(ks[5], (Cout,), jnp.float32),
    }
    x = jax.random.normal(ks[6], (B, Cin, H, W), jnp.float32)

    ref = jax.block_until_ready(_reference(x, params, dilations=dilations))

    # f32 MXU path: tight correctness check (typical max |err| ~1e-5).
    out_f32 = jax.block_until_ready(
        dilated_conv_block(x, params, dilations=dilations,
                           mxu_dtype=jnp.float32))
    assert out_f32.shape == (B, Cout, H, W), out_f32.shape
    assert bool(jnp.all(jnp.isfinite(out_f32)))
    assert jnp.allclose(out_f32, ref, atol=2e-3, rtol=2e-3), float(
        jnp.max(jnp.abs(out_f32 - ref)))

    # bf16-input MXU path (the performance default on v6e/v7x): bf16 inputs /
    # weights with f32 accumulation; typical max |err| ~1e-2 from the bf16
    # input rounding, so the tolerance is correspondingly looser.
    out = jax.block_until_ready(
        dilated_conv_block(x, params, dilations=dilations))
    assert out.shape == (B, Cout, H, W), out.shape
    assert bool(jnp.all(jnp.isfinite(out)))
    assert jnp.allclose(out, ref, atol=6e-2, rtol=6e-2), float(
        jnp.max(jnp.abs(out - ref)))

    print("KERNEL_OK")
</pallas_src>

<mosaic_0001>
module attributes {stable_mosaic.version = 11 : i64} {
  func.func @_dilated_block_kernel(%arg0: i32, %arg1: memref<1x4x1152xf32, #tpu.memory_space<vmem>>, %arg2: memref<16x144xf32, #tpu.memory_space<vmem>>, %arg3: memref<1x512xf32, #tpu.memory_space<vmem>>, %arg4: memref<16x1xf32, #tpu.memory_space<vmem>>, %arg5: memref<16x1xf32, #tpu.memory_space<vmem>>, %arg6: memref<16x16xf32, #tpu.memory_space<vmem>>, %arg7: memref<16x16xf32, #tpu.memory_space<vmem>>, %arg8: memref<16x1xf32, #tpu.memory_space<vmem>>, %arg9: memref<16x1xf32, #tpu.memory_space<vmem>>, %arg10: memref<16x16xf32, #tpu.memory_space<vmem>>, %arg11: memref<1x16x512xf32, #tpu.memory_space<vmem>>, %arg12: memref<144x512xf32, #tpu.memory_space<vmem>>) attributes {dimension_semantics = [#tpu.dimension_semantics<parallel>], iteration_bounds = array<i64: 2>, scalar_prefetch = 0 : i64, scratch_operands = 1 : i64, tpu.core_type = #tpu.core_type<tc>, window_params = [{transform_indices = @transform_0, window_bounds = array<i64: 1, 4, 1152>}, {pipeline_mode = #tpu.pipeline_mode<synchronous>, transform_indices = @transform_1, window_bounds = array<i64: 16, 144>}, {pipeline_mode = #tpu.pipeline_mode<synchronous>, transform_indices = @transform_2, window_bounds = array<i64: 1, 512>}, {pipeline_mode = #tpu.pipeline_mode<synchronous>, transform_indices = @transform_3, window_bounds = array<i64: 16, 1>}, {pipeline_mode = #tpu.pipeline_mode<synchronous>, transform_indices = @transform_4, window_bounds = array<i64: 16, 1>}, {pipeline_mode = #tpu.pipeline_mode<synchronous>, transform_indices = @transform_5, window_bounds = array<i64: 16, 16>}, {pipeline_mode = #tpu.pipeline_mode<synchronous>, transform_indices = @transform_6, window_bounds = array<i64: 16, 16>}, {pipeline_mode = #tpu.pipeline_mode<synchronous>, transform_indices = @transform_7, window_bounds = array<i64: 16, 1>}, {pipeline_mode = #tpu.pipeline_mode<synchronous>, transform_indices = @transform_8, window_bounds = array<i64: 16, 1>}, {pipeline_mode = #tpu.pipeline_mode<synchronous>, transform_indices = @transform_9, window_bounds = array<i64: 16, 16>}, {transform_indices = @transform_10, window_bounds = array<i64: 1, 16, 512>}]} {
    %c0 = arith.constant 0 : index
    %c0_0 = arith.constant 0 : index
    %c231 = arith.constant 231 : index
    %0 = vector.load %arg1[%c0, %c0_0, %c231] : memref<1x4x1152xf32, #tpu.memory_space<vmem>>, vector<1x4x512xf32>
    %1 = vector.shape_cast %0 : vector<1x4x512xf32> to vector<4x512xf32>
    %c0_1 = arith.constant 0 : index
    %c0_2 = arith.constant 0 : index
    %2 = vector.load %arg12[%c0_1, %c0_2] : memref<144x512xf32, #tpu.memory_space<vmem>>, vector<4x512xf32>
    tpu.vector_store %arg12[%c0_1, %c0_2], %1 {strides = array<i32>} : memref<144x512xf32, #tpu.memory_space<vmem>>, vector<4x512xf32>,
    %c0_3 = arith.constant 0 : index
    %c0_4 = arith.constant 0 : index
    %c232 = arith.constant 232 : index
    %3 = vector.load %arg1[%c0_3, %c0_4, %c232] : memref<1x4x1152xf32, #tpu.memory_space<vmem>>, vector<1x4x512xf32>
    %4 = vector.shape_cast %3 : vector<1x4x512xf32> to vector<4x512xf32>
    %c4 = arith.constant 4 : index
    %c0_5 = arith.constant 0 : index
    %5 = vector.load %arg12[%c4, %c0_5] : memref<144x512xf32, #tpu.memory_space<vmem>>, vector<4x512xf32>
    tpu.vector_store %arg12[%c4, %c0_5], %4 {strides = array<i32>} : memref<144x512xf32, #tpu.memory_space<vmem>>, vector<4x512xf32>,
    %c0_6 = arith.constant 0 : index
    %c0_7 = arith.constant 0 : index
    %c233 = arith.constant 233 : index
    %6 = vector.load %arg1[%c0_6, %c0_7, %c233] : memref<1x4x1152xf32, #tpu.memory_space<vmem>>, vector<1x4x512xf32>
    %7 = vector.shape_cast %6 : vector<1x4x512xf32> to vector<4x512xf32>
    %c8 = arith.constant 8 : index
    %c0_8 = arith.constant 0 : index
    %8 = vector.load %arg12[%c8, %c0_8] : memref<144x512xf32, #tpu.memory_space<vmem>>, vector<4x512xf32>
    tpu.vector_store %arg12[%c8, %c0_8], %7 {strides = array<i32>} : memref<144x512xf32, #tpu.memory_space<vmem>>, vector<4x512xf32>,
    %c0_9 = arith.constant 0 : index
    %c0_10 = arith.constant 0 : index
    %c263 = arith.constant 263 : index
    %9 = vector.load %arg1[%c0_9, %c0_10, %c263] : memref<1x4x1152xf32, #tpu.memory_space<vmem>>, vector<1x4x512xf32>
    %10 = vector.shape_cast %9 : vector<1x4x512xf32> to vector<4x512xf32>
    %c12 = arith.constant 12 : index
    %c0_11 = arith.constant 0 : index
    %11 = vector.load %arg12[%c12, %c0_11] : memref<144x512xf32, #tpu.memory_space<vmem>>, vector<4x512xf32>
    tpu.vector_store %arg12[%c12, %c0_11], %10 {strides = array<i32>} : memref<144x512xf32, #tpu.memory_space<vmem>>, vector<4x512xf32>,
    %c0_12 = arith.constant 0 : index
    %c0_13 = arith.constant 0 : index
    %c264 = arith.constant 264 : index
    %12 = vector.load %arg1[%c0_12, %c0_13, %c264] : memref<1x4x1152xf32, #tpu.memory_space<vmem>>, vector<1x4x512xf32>
    %13 = vector.shape_cast %12 : vector<1x4x512xf32> to vector<4x512xf32>
    %c16 = arith.constant 16 : index
    %c0_14 = arith.constant 0 : index
    %14 = vector.load %arg12[%c16, %c0_14] : memref<144x512xf32, #tpu.memory_space<vmem>>, vector<4x512xf32>
    tpu.vector_store %arg12[%c16, %c0_14], %13 {strides = array<i32>} : memref<144x512xf32, #tpu.memory_space<vmem>>, vector<4x512xf32>,
    %c0_15 = arith.constant 0 : index
    %c0_16 = arith.constant 0 : index
    %c265 = arith.constant 265 : index
    %15 = vector.load %arg1[%c0_15, %c0_16, %c265] : memref<1x4x1152xf32, #tpu.memory_space<vmem>>, vector<1x4x512xf32>
    %16 = vector.shape_cast %15 : vector<1x4x512xf32> to vector<4x512xf32>
    %c20 = arith.constant 20 : index
    %c0_17 = arith.constant 0 : index
    %17 = vector.load %arg12[%c20, %c0_17] : memref<144x512xf32, #tpu.memory_space<vmem>>, vector<4x512xf32>
    tpu.vector_store %arg12[%c20, %c0_17], %16 {strides = array<i32>} : memref<144x512xf32, #tpu.memory_space<vmem>>, vector<4x512xf32>,
    %c0_18 = arith.constant 0 : index
    %c0_19 = arith.constant 0 : index
    %c295 = arith.constant 295 : index
    %18 = vector.load %arg1[%c0_18, %c0_19, %c295] : memref<1x4x1152xf32, #tpu.memory_space<vmem>>, vector<1x4x512xf32>
    %19 = vector.shape_cast %18 : vector<1x4x512xf32> to vector<4x512xf32>
    %c24 = arith.constant 24 : index
    %c0_20 = arith.constant 0 : index
    %20 = vector.load %arg12[%c24, %c0_20] : memref<144x512xf32, #tpu.memory_space<vmem>>, vector<4x512xf32>
    tpu.vector_store %arg12[%c24, %c0_20], %19 {strides = array<i32>} : memref<144x512xf32, #tpu.memory_space<vmem>>, vector<4x512xf32>,
    %c0_21 = arith.constant 0 : index
    %c0_22 = arith.constant 0 : index
    %c296 = arith.constant 296 : index
    %21 = vector.load %arg1[%c0_21, %c0_22, %c296] : memref<1x4x1152xf32, #tpu.memory_space<vmem>>, vector<1x4x512xf32>
    %22 = vector.shape_cast %21 : vector<1x4x512xf32> to vector<4x512xf32>
    %c28 = arith.constant 28 : index
    %c0_23 = arith.constant 0 : index
    %23 = vector.load %arg12[%c28, %c0_23] : memref<144x512xf32, #tpu.memory_space<vmem>>, vector<4x512xf32>
    tpu.vector_store %arg12[%c28, %c0_23], %22 {strides = array<i32>} : memref<144x512xf32, #tpu.memory_space<vmem>>, vector<4x512xf32>,
    %c0_24 = arith.constant 0 : index
    %c0_25 = arith.constant 0 : index
    %c297 = arith.constant 297 : index
    %24 = vector.load %arg1[%c0_24, %c0_25, %c297] : memref<1x4x1152xf32, #tpu.memory_space<vmem>>, vector<1x4x512xf32>
    %25 = vector.shape_cast %24 : vector<1x4x512xf32> to vector<4x512xf32>
    %c32 = arith.constant 32 : index
    %c0_26 = arith.constant 0 : index
    %26 = vector.load %arg12[%c32, %c0_26] : memref<144x512xf32, #tpu.memory_space<vmem>>, vector<4x512xf32>
    tpu.vector_store %arg12[%c32, %c0_26], %25 {strides = array<i32>} : memref<144x512xf32, #tpu.memory_space<vmem>>, vector<4x512xf32>,
    %c0_27 = arith.constant 0 : index
    %c0_28 = arith.constant 0 : index
    %c198 = arith.constant 198 : index
    %27 = vector.load %arg1[%c0_27, %c0_28, %c198] : memref<1x4x1152xf32, #tpu.memory_space<vmem>>, vector<1x4x512xf32>
    %28 = vector.shape_cast %27 : vector<1x4x512xf32> to vector<4x512xf32>
    %c36 = arith.constant 36 : index
    %c0_29 = arith.constant 0 : index
    %29 = vector.load %arg12[%c36, %c0_29] : memref<144x512xf32, #tpu.memory_space<vmem>>, vector<4x512xf32>
    tpu.vector_store %arg12[%c36, %c0_29], %28 {strides = array<i32>} : memref<144x512xf32, #tpu.memory_space<vmem>>, vector<4x512xf32>,
    %c0_30 = arith.constant 0 : index
    %c0_31 = arith.constant 0 : index
    %c200 = arith.constant 200 : index
    %30 = vector.load %arg1[%c0_30, %c0_31, %c200] : memref<1x4x1152xf32, #tpu.memory_space<vmem>>, vector<1x4x512xf32>
    %31 = vector.shape_cast %30 : vector<1x4x512xf32> to vector<4x512xf32>
    %c40 = arith.constant 40 : index
    %c0_32 = arith.constant 0 : index
    %32 = vector.load %arg12[%c40, %c0_32] : memref<144x512xf32, #tpu.memory_space<vmem>>, vector<4x512xf32>
    tpu.vector_store %arg12[%c40, %c0_32], %31 {strides = array<i32>} : memref<144x512xf32, #tpu.memory_space<vmem>>, vector<4x512xf32>,
    %c0_33 = arith.constant 0 : index
    %c0_34 = arith.constant 0 : index
    %c202 = arith.constant 202 : index
    %33 = vector.load %arg1[%c0_33, %c0_34, %c202] : memref<1x4x1152xf32, #tpu.memory_space<vmem>>, vector<1x4x512xf32>
    %34 = vector.shape_cast %33 : vector<1x4x512xf32> to vector<4x512xf32>
    %c44 = arith.constant 44 : index
    %c0_35 = arith.constant 0 : index
    %35 = vector.load %arg12[%c44, %c0_35] : memref<144x512xf32, #tpu.memory_space<vmem>>, vector<4x512xf32>
    tpu.vector_store %arg12[%c44, %c0_35], %34 {strides = array<i32>} : memref<144x512xf32, #tpu.memory_space<vmem>>, vector<4x512xf32>,
    %c0_36 = arith.constant 0 : index
    %c0_37 = arith.constant 0 : index
    %c262 = arith.constant 262 : index
    %36 = vector.load %arg1[%c0_36, %c0_37, %c262] : memref<1x4x1152xf32, #tpu.memory_space<vmem>>, vector<1x4x512xf32>
    %37 = vector.shape_cast %36 : vector<1x4x512xf32> to vector<4x512xf32>
    %c48 = arith.constant 48 : index
    %c0_38 = arith.constant 0 : index
    %38 = vector.load %arg12[%c48, %c0_38] : memref<144x512xf32, #tpu.memory_space<vmem>>, vector<4x512xf32>
    tpu.vector_store %arg12[%c48, %c0_38], %37 {strides = array<i32>} : memref<144x512xf32, #tpu.memory_space<vmem>>, vector<4x512xf32>,
    %c0_39 = arith.constant 0 : index
    %c0_40 = arith.constant 0 : index
    %c264_41 = arith.constant 264 : index
    %39 = vector.load %arg1[%c0_39, %c0_40, %c264_41] : memref<1x4x1152xf32, #tpu.memory_space<vmem>>, vector<1x4x512xf32>
    %40 = vector.shape_cast %39 : vector<1x4x512xf32> to vector<4x512xf32>
    %c52 = arith.constant 52 : index
    %c0_42 = arith.constant 0 : index
    %41 = vector.load %arg12[%c52, %c0_42] : memref<144x512xf32, #tpu.memory_space<vmem>>, vector<4x512xf32>
    tpu.vector_store %arg12[%c52, %c0_42], %40 {strides = array<i32>} : memref<144x512xf32, #tpu.memory_space<vmem>>, vector<4x512xf32>,
    %c0_43 = arith.constant 0 : index
    %c0_44 = arith.constant 0 : index
    %c266 = arith.constant 266 : index
    %42 = vector.load %arg1[%c0_43, %c0_44, %c266] : memref<1x4x1152xf32, #tpu.memory_space<vmem>>, vector<1x4x512xf32>
    %43 = vector.shape_cast %42 : vector<1x4x512xf32> to vector<4x512xf32>
    %c56 = arith.constant 56 : index
    %c0_45 = arith.constant 0 : index
    %44 = vector.load %arg12[%c56, %c0_45] : memref<144x512xf32, #tpu.memory_space<vmem>>, vector<4x512xf32>
    tpu.vector_store %arg12[%c56, %c0_45], %43 {strides = array<i32>} : memref<144x512xf32, #tpu.memory_space<vmem>>, vector<4x512xf32>,
    %c0_46 = arith.constant 0 : index
    %c0_47 = arith.constant 0 : index
    %c326 = arith.constant 326 : index
    %45 = vector.load %arg1[%c0_46, %c0_47, %c326] : memref<1x4x1152xf32, #tpu.memory_space<vmem>>, vector<1x4x512xf32>
    %46 = vector.shape_cast %45 : vector<1x4x512xf32> to vector<4x512xf32>
    %c60 = arith.constant 60 : index
    %c0_48 = arith.constant 0 : index
    %47 = vector.load %arg12[%c60, %c0_48] : memref<144x512xf32, #tpu.memory_space<vmem>>, vector<4x512xf32>
    tpu.vector_store %arg12[%c60, %c0_48], %46 {strides = array<i32>} : memref<144x512xf32, #tpu.memory_space<vmem>>, vector<4x512xf32>,
    %c0_49 = arith.constant 0 : index
    %c0_50 = arith.constant 0 : index
    %c328 = arith.constant 328 : index
    %48 = vector.load %arg1[%c0_49, %c0_50, %c328] : memref<1x4x1152xf32, #tpu.memory_space<vmem>>, vector<1x4x512xf32>
    %49 = vector.shape_cast %48 : vector<1x4x512xf32> to vector<4x512xf32>
    %c64 = arith.constant 64 : index
    %c0_51 = arith.constant 0 : index
    %50 = vector.load %arg12[%c64, %c0_51] : memref<144x512xf32, #tpu.memory_space<vmem>>, vector<4x512xf32>
    tpu.vector_store %arg12[%c64, %c0_51], %49 {strides = array<i32>} : memref<144x512xf32, #tpu.memory_space<vmem>>, vector<4x512xf32>,
    %c0_52 = arith.constant 0 : index
    %c0_53 = arith.constant 0 : index
    %c330 = arith.constant 330 : index
    %51 = vector.load %arg1[%c0_52, %c0_53, %c330] : memref<1x4x1152xf32, #tpu.memory_space<vmem>>, vector<1x4x512xf32>
    %52 = vector.shape_cast %51 : vector<1x4x512xf32> to vector<4x512xf32>
    %c68 = arith.constant 68 : index
    %c0_54 = arith.constant 0 : index
    %53 = vector.load %arg12[%c68, %c0_54] : memref<144x512xf32, #tpu.memory_space<vmem>>, vector<4x512xf32>
    tpu.vector_store %arg12[%c68, %c0_54], %52 {strides = array<i32>} : memref<144x512xf32, #tpu.memory_space<vmem>>, vector<4x512xf32>,
    %c0_55 = arith.constant 0 : index
    %c0_56 = arith.constant 0 : index
    %c132 = arith.constant 132 : index
    %54 = vector.load %arg1[%c0_55, %c0_56, %c132] : memref<1x4x1152xf32, #tpu.memory_space<vmem>>, vector<1x4x512xf32>
    %55 = vector.shape_cast %54 : vector<1x4x512xf32> to vector<4x512xf32>
    %c72 = arith.constant 72 : index
    %c0_57 = arith.constant 0 : index
    %56 = vector.load %arg12[%c72, %c0_57] : memref<144x512xf32, #tpu.memory_space<vmem>>, vector<4x512xf32>
    tpu.vector_store %arg12[%c72, %c0_57], %55 {strides = array<i32>} : memref<144x512xf32, #tpu.memory_space<vmem>>, vector<4x512xf32>,
    %c0_58 = arith.constant 0 : index
    %c0_59 = arith.constant 0 : index
    %c136 = arith.constant 136 : index
    %57 = vector.load %arg1[%c0_58, %c0_59, %c136] : memref<1x4x1152xf32, #tpu.memory_space<vmem>>, vector<1x4x512xf32>
    %58 = vector.shape_cast %57 : vector<1x4x512xf32> to vector<4x512xf32>
    %c76 = arith.constant 76 : index
    %c0_60 = arith.constant 0 : index
    %59 = vector.load %arg12[%c76, %c0_60] : memref<144x512xf32, #tpu.memory_space<vmem>>, vector<4x512xf32>
    tpu.vector_store %arg12[%c76, %c0_60], %58 {strides = array<i32>} : memref<144x512xf32, #tpu.memory_space<vmem>>, vector<4x512xf32>,
    %c0_61 = arith.constant 0 : index
    %c0_62 = arith.constant 0 : index
    %c140 = arith.constant 140 : index
    %60 = vector.load %arg1[%c0_61, %c0_62, %c140] : memref<1x4x1152xf32, #tpu.memory_space<vmem>>, vector<1x4x512xf32>
    %61 = vector.shape_cast %60 : vector<1x4x512xf32> to vector<4x512xf32>
    %c80 = arith.constant 80 : index
    %c0_63 = arith.constant 0 : index
    %62 = vector.load %arg12[%c80, %c0_63] : memref<144x512xf32, #tpu.memory_space<vmem>>, vector<4x512xf32>
    tpu.vector_store %arg12[%c80, %c0_63], %61 {strides = array<i32>} : memref<144x512xf32, #tpu.memory_space<vmem>>, vector<4x512xf32>,
    %c0_64 = arith.constant 0 : index
    %c0_65 = arith.constant 0 : index
    %c260 = arith.constant 260 : index
    %63 = vector.load %arg1[%c0_64, %c0_65, %c260] : memref<1x4x1152xf32, #tpu.memory_space<vmem>>, vector<1x4x512xf32>
    %64 = vector.shape_cast %63 : vector<1x4x512xf32> to vector<4x512xf32>
    %c84 = arith.constant 84 : index
    %c0_66 = arith.constant 0 : index
    %65 = vector.load %arg12[%c84, %c0_66] : memref<144x512xf32, #tpu.memory_space<vmem>>, vector<4x512xf32>
    tpu.vector_store %arg12[%c84, %c0_66], %64 {strides = array<i32>} : memref<144x512xf32, #tpu.memory_space<vmem>>, vector<4x512xf32>,
    %c0_67 = arith.constant 0 : index
    %c0_68 = arith.constant 0 : index
    %c264_69 = arith.constant 264 : index
    %66 = vector.load %arg1[%c0_67, %c0_68, %c264_69] : memref<1x4x1152xf32, #tpu.memory_space<vmem>>, vector<1x4x512xf32>
    %67 = vector.shape_cast %66 : vector<1x4x512xf32> to vector<4x512xf32>
    %c88 = arith.constant 88 : index
    %c0_70 = arith.constant 0 : index
    %68 = vector.load %arg12[%c88, %c0_70] : memref<144x512xf32, #tpu.memory_space<vmem>>, vector<4x512xf32>
    tpu.vector_store %arg12[%c88, %c0_70], %67 {strides = array<i32>} : memref<144x512xf32, #tpu.memory_space<vmem>>, vector<4x512xf32>,
    %c0_71 = arith.constant 0 : index
    %c0_72 = arith.constant 0 : index
    %c268 = arith.constant 268 : index
    %69 = vector.load %arg1[%c0_71, %c0_72, %c268] : memref<1x4x1152xf32, #tpu.memory_space<vmem>>, vector<1x4x512xf32>
    %70 = vector.shape_cast %69 : vector<1x4x512xf32> to vector<4x512xf32>
    %c92 = arith.constant 92 : index
    %c0_73 = arith.constant 0 : index
    %71 = vector.load %arg12[%c92, %c0_73] : memref<144x512xf32, #tpu.memory_space<vmem>>, vector<4x512xf32>
    tpu.vector_store %arg12[%c92, %c0_73], %70 {strides = array<i32>} : memref<144x512xf32, #tpu.memory_space<vmem>>, vector<4x512xf32>,
    %c0_74 = arith.constant 0 : index
    %c0_75 = arith.constant 0 : index
    %c388 = arith.constant 388 : index
    %72 = vector.load %arg1[%c0_74, %c0_75, %c388] : memref<1x4x1152xf32, #tpu.memory_space<vmem>>, vector<1x4x512xf32>
    %73 = vector.shape_cast %72 : vector<1x4x512xf32> to vector<4x512xf32>
    %c96 = arith.constant 96 : index
    %c0_76 = arith.constant 0 : index
    %74 = vector.load %arg12[%c96, %c0_76] : memref<144x512xf32, #tpu.memory_space<vmem>>, vector<4x512xf32>
    tpu.vector_store %arg12[%c96, %c0_76], %73 {strides = array<i32>} : memref<144x512xf32, #tpu.memory_space<vmem>>, vector<4x512xf32>,
    %c0_77 = arith.constant 0 : index
    %c0_78 = arith.constant 0 : index
    %c392 = arith.constant 392 : index
    %75 = vector.load %arg1[%c0_77, %c0_78, %c392] : memref<1x4x1152xf32, #tpu.memory_space<vmem>>, vector<1x4x512xf32>
    %76 = vector.shape_cast %75 : vector<1x4x512xf32> to vector<4x512xf32>
    %c100 = arith.constant 100 : index
    %c0_79 = arith.constant 0 : index
    %77 = vector.load %arg12[%c100, %c0_79] : memref<144x512xf32, #tpu.memory_space<vmem>>, vector<4x512xf32>
    tpu.vector_store %arg12[%c100, %c0_79], %76 {strides = array<i32>} : memref<144x512xf32, #tpu.memory_space<vmem>>, vector<4x512xf32>,
    %c0_80 = arith.constant 0 : index
    %c0_81 = arith.constant 0 : index
    %c396 = arith.constant 396 : index
    %78 = vector.load %arg1[%c0_80, %c0_81, %c396] : memref<1x4x1152xf32, #tpu.memory_space<vmem>>, vector<1x4x512xf32>
    %79 = vector.shape_cast %78 : vector<1x4x512xf32> to vector<4x512xf32>
    %c104 = arith.constant 104 : index
    %c0_82 = arith.constant 0 : index
    %80 = vector.load %arg12[%c104, %c0_82] : memref<144x512xf32, #tpu.memory_space<vmem>>, vector<4x512xf32>
    tpu.vector_store %arg12[%c104, %c0_82], %79 {strides = array<i32>} : memref<144x512xf32, #tpu.memory_space<vmem>>, vector<4x512xf32>,
    %c0_83 = arith.constant 0 : index
    %c0_84 = arith.constant 0 : index
    %c0_85 = arith.constant 0 : index
    %81 = vector.load %arg1[%c0_83, %c0_84, %c0_85] : memref<1x4x1152xf32, #tpu.memory_space<vmem>>, vector<1x4x512xf32>
    %82 = vector.shape_cast %81 : vector<1x4x512xf32> to vector<4x512xf32>
    %c108 = arith.constant 108 : index
    %c0_86 = arith.constant 0 : index
    %83 = vector.load %arg12[%c108, %c0_86] : memref<144x512xf32, #tpu.memory_space<vmem>>, vector<4x512xf32>
    tpu.vector_store %arg12[%c108, %c0_86], %82 {strides = array<i32>} : memref<144x512xf32, #tpu.memory_space<vmem>>, vector<4x512xf32>,
    %c0_87 = arith.constant 0 : index
    %c0_88 = arith.constant 0 : index
    %c8_89 = arith.constant 8 : index
    %84 = vector.load %arg1[%c0_87, %c0_88, %c8_89] : memref<1x4x1152xf32, #tpu.memory_space<vmem>>, vector<1x4x512xf32>
    %85 = vector.shape_cast %84 : vector<1x4x512xf32> to vector<4x512xf32>
    %c112 = arith.constant 112 : index
    %c0_90 = arith.constant 0 : index
    %86 = vector.load %arg12[%c112, %c0_90] : memref<144x512xf32, #tpu.memory_space<vmem>>, vector<4x512xf32>
    tpu.vector_store %arg12[%c112, %c0_90], %85 {strides = array<i32>} : memref<144x512xf32, #tpu.memory_space<vmem>>, vector<4x512xf32>,
    %c0_91 = arith.constant 0 : index
    %c0_92 = arith.constant 0 : index
    %c16_93 = arith.constant 16 : index
    %87 = vector.load %arg1[%c0_91, %c0_92, %c16_93] : memref<1x4x1152xf32, #tpu.memory_space<vmem>>, vector<1x4x512xf32>
    %88 = vector.shape_cast %87 : vector<1x4x512xf32> to vector<4x512xf32>
    %c116 = arith.constant 116 : index
    %c0_94 = arith.constant 0 : index
    %89 = vector.load %arg12[%c116, %c0_94] : memref<144x512xf32, #tpu.memory_space<vmem>>, vector<4x512xf32>
    tpu.vector_store %arg12[%c116, %c0_94], %88 {strides = array<i32>} : memref<144x512xf32, #tpu.memory_space<vmem>>, vector<4x512xf32>,
    %c0_95 = arith.constant 0 : index
    %c0_96 = arith.constant 0 : index
    %c256 = arith.constant 256 : index
    %90 = vector.load %arg1[%c0_95, %c0_96, %c256] : memref<1x4x1152xf32, #tpu.memory_space<vmem>>, vector<1x4x512xf32>
    %91 = vector.shape_cast %90 : vector<1x4x512xf32> to vector<4x512xf32>
    %c120 = arith.constant 120 : index
    %c0_97 = arith.constant 0 : index
    %92 = vector.load %arg12[%c120, %c0_97] : memref<144x512xf32, #tpu.memory_space<vmem>>, vector<4x512xf32>
    tpu.vector_store %arg12[%c120, %c0_97], %91 {strides = array<i32>} : memref<144x512xf32, #tpu.memory_space<vmem>>, vector<4x512xf32>,
    %c0_98 = arith.constant 0 : index
    %c0_99 = arith.constant 0 : index
    %c264_100 = arith.constant 264 : index
    %93 = vector.load %arg1[%c0_98, %c0_99, %c264_100] : memref<1x4x1152xf32, #tpu.memory_space<vmem>>, vector<1x4x512xf32>
    %94 = vector.shape_cast %93 : vector<1x4x512xf32> to vector<4x512xf32>
    %c124 = arith.constant 124 : index
    %c0_101 = arith.constant 0 : index
    %95 = vector.load %arg12[%c124, %c0_101] : memref<144x512xf32, #tpu.memory_space<vmem>>, vector<4x512xf32>
    tpu.vector_store %arg12[%c124, %c0_101], %94 {strides = array<i32>} : memref<144x512xf32, #tpu.memory_space<vmem>>, vector<4x512xf32>,
    %c0_102 = arith.constant 0 : index
    %c0_103 = arith.constant 0 : index
    %c272 = arith.constant 272 : index
    %96 = vector.load %arg1[%c0_102, %c0_103, %c272] : memref<1x4x1152xf32, #tpu.memory_space<vmem>>, vector<1x4x512xf32>
    %97 = vector.shape_cast %96 : vector<1x4x512xf32> to vector<4x512xf32>
    %c128 = arith.constant 128 : index
    %c0_104 = arith.constant 0 : index
    %98 = vector.load %arg12[%c128, %c0_104] : memref<144x512xf32, #tpu.memory_space<vmem>>, vector<4x512xf32>
    tpu.vector_store %arg12[%c128, %c0_104], %97 {strides = array<i32>} : memref<144x512xf32, #tpu.memory_space<vmem>>, vector<4x512xf32>,
    %c0_105 = arith.constant 0 : index
    %c0_106 = arith.constant 0 : index
    %c512 = arith.constant 512 : index
    %99 = vector.load %arg1[%c0_105, %c0_106, %c512] : memref<1x4x1152xf32, #tpu.memory_space<vmem>>, vector<1x4x512xf32>
    %100 = vector.shape_cast %99 : vector<1x4x512xf32> to vector<4x512xf32>
    %c132_107 = arith.constant 132 : index
    %c0_108 = arith.constant 0 : index
    %101 = vector.load %arg12[%c132_107, %c0_108] : memref<144x512xf32, #tpu.memory_space<vmem>>, vector<4x512xf32>
    tpu.vector_store %arg12[%c132_107, %c0_108], %100 {strides = array<i32>} : memref<144x512xf32, #tpu.memory_space<vmem>>, vector<4x512xf32>,
    %c0_109 = arith.constant 0 : index
    %c0_110 = arith.constant 0 : index
    %c520 = arith.constant 520 : index
    %102 = vector.load %arg1[%c0_109, %c0_110, %c520] : memref<1x4x1152xf32, #tpu.memory_space<vmem>>, vector<1x4x512xf32>
    %103 = vector.shape_cast %102 : vector<1x4x512xf32> to vector<4x512xf32>
    %c136_111 = arith.constant 136 : index
    %c0_112 = arith.constant 0 : index
    %104 = vector.load %arg12[%c136_111, %c0_112] : memref<144x512xf32, #tpu.memory_space<vmem>>, vector<4x512xf32>
    tpu.vector_store %arg12[%c136_111, %c0_112], %103 {strides = array<i32>} : memref<144x512xf32, #tpu.memory_space<vmem>>, vector<4x512xf32>,
    %c0_113 = arith.constant 0 : index
    %c0_114 = arith.constant 0 : index
    %c528 = arith.constant 528 : index
    %105 = vector.load %arg1[%c0_113, %c0_114, %c528] : memref<1x4x1152xf32, #tpu.memory_space<vmem>>, vector<1x4x512xf32>
    %106 = vector.shape_cast %105 : vector<1x4x512xf32> to vector<4x512xf32>
    %c140_115 = arith.constant 140 : index
    %c0_116 = arith.constant 0 : index
    %107 = vector.load %arg12[%c140_115, %c0_116] : memref<144x512xf32, #tpu.memory_space<vmem>>, vector<4x512xf32>
    tpu.vector_store %arg12[%c140_115, %c0_116], %106 {strides = array<i32>} : memref<144x512xf32, #tpu.memory_space<vmem>>, vector<4x512xf32>,
    %c0_117 = arith.constant 0 : index
    %c0_118 = arith.constant 0 : index
    %108 = vector.load %arg2[%c0_117, %c0_118] : memref<16x144xf32, #tpu.memory_space<vmem>>, vector<16x144xf32>
    %c0_119 = arith.constant 0 : index
    %c0_120 = arith.constant 0 : index
    %109 = vector.load %arg12[%c0_119, %c0_120] : memref<144x512xf32, #tpu.memory_space<vmem>>, vector<144x512xf32>
    %cst = arith.constant dense<0.000000e+00> : vector<16x512xf32>
    %110 = tpu.matmul %108, %109, %cst {dimension_numbers = #tpu.dot_dimension_numbers<[1], [0], [0], [1], [0, 0, 1, 1], [], []>} : vector<16x144xf32>, vector<144x512xf32>, vector<16x512xf32> -> vector<16x512xf32>
    %c0_121 = arith.constant 0 : index
    %c0_122 = arith.constant 0 : index
    %111 = vector.load %arg3[%c0_121, %c0_122] : memref<1x512xf32, #tpu.memory_space<vmem>>, vector<1x512xf32>
    %c0_123 = arith.constant 0 : index
    %c0_124 = arith.constant 0 : index
    %112 = vector.load %arg6[%c0_123, %c0_124] : memref<16x16xf32, #tpu.memory_space<vmem>>, vector<16x16xf32>
    %c0_125 = arith.constant 0 : index
    %c0_126 = arith.constant 0 : index
    %113 = vector.load %arg4[%c0_125, %c0_126] : memref<16x1xf32, #tpu.memory_space<vmem>>, vector<16x1xf32>
    %c0_127 = arith.constant 0 : index
    %c0_128 = arith.constant 0 : index
    %114 = vector.load %arg5[%c0_127, %c0_128] : memref<16x1xf32, #tpu.memory_space<vmem>>, vector<16x1xf32>
    %115 = vector.broadcast %111 : vector<1x512xf32> to vector<16x512xf32>
    %116 = arith.mulf %110, %115 : vector<16x512xf32>
    %cst_129 = arith.constant dense<0.000000e+00> : vector<16xf32>
    %117 = vector.multi_reduction <add>, %116, %cst_129 [1] : vector<16x512xf32> to vector<16xf32>
    %118 = vector.shape_cast %117 : vector<16xf32> to vector<16x1xf32>
    %cst_130 = arith.constant dense<0.000000e+00> : vector<16x1xf32>
    %119 = tpu.matmul %112, %118, %cst_130 {dimension_numbers = #tpu.dot_dimension_numbers<[1], [0], [0], [1], [0, 0, 1, 1], [], []>} : vector<16x16xf32>, vector<16x1xf32>, vector<16x1xf32> -> vector<16x1xf32>
    %120 = vector.broadcast %119 : vector<16x1xf32> to vector<16x512xf32>
    %121 = arith.subf %110, %120 : vector<16x512xf32>
    %122 = arith.mulf %121, %121 : vector<16x512xf32>
    %123 = vector.broadcast %111 : vector<1x512xf32> to vector<16x512xf32>
    %124 = arith.mulf %122, %123 : vector<16x512xf32>
    %cst_131 = arith.constant dense<0.000000e+00> : vector<16xf32>
    %125 = vector.multi_reduction <add>, %124, %cst_131 [1] : vector<16x512xf32> to vector<16xf32>
    %126 = vector.shape_cast %125 : vector<16xf32> to vector<16x1xf32>
    %cst_132 = arith.constant dense<0.000000e+00> : vector<16x1xf32>
    %127 = tpu.matmul %112, %126, %cst_132 {dimension_numbers = #tpu.dot_dimension_numbers<[1], [0], [0], [1], [0, 0, 1, 1], [], []>} : vector<16x16xf32>, vector<16x1xf32>, vector<16x1xf32> -> vector<16x1xf32>
    %cst_133 = arith.constant 9.99999974E-6 : f32
    %128 = vector.broadcast %cst_133 : f32 to vector<16x1xf32>
    %129 = arith.addf %127, %128 : vector<16x1xf32>
    %130 = math.rsqrt %129 : vector<16x1xf32>
    %131 = arith.mulf %130, %113 : vector<16x1xf32>
    %132 = vector.broadcast %131 : vector<16x1xf32> to vector<16x512xf32>
    %133 = arith.mulf %121, %132 : vector<16x512xf32>
    %134 = vector.broadcast %114 : vector<16x1xf32> to vector<16x512xf32>
    %135 = arith.addf %133, %134 : vector<16x512xf32>
    %cst_134 = arith.constant 0.707106769 : f32
    %136 = vector.broadcast %cst_134 : f32 to vector<16x512xf32>
    %137 = arith.mulf %135, %136 : vector<16x512xf32>
    %cst_135 = arith.constant 0.000000e+00 : f32
    %138 = vector.broadcast %cst_135 : f32 to vector<16x512xf32>
    %139 = arith.cmpf oge, %137, %138 : vector<16x512xf32>
    %cst_136 = arith.constant 1.000000e+00 : f32
    %cst_137 = arith.constant -1.000000e+00 : f32
    %140 = vector.broadcast %cst_136 : f32 to vector<16x512xf32>
    %141 = vector.broadcast %cst_137 : f32 to vector<16x512xf32>
    %142 = arith.select %139, %140, %141 : vector<16x512xi1>, vector<16x512xf32>
    %143 = math.absf %137 : vector<16x512xf32>
    %cst_138 = arith.constant 0.327591091 : f32
    %144 = vector.broadcast %cst_138 : f32 to vector<16x512xf32>
    %145 = arith.mulf %144, %143 : vector<16x512xf32>
    %cst_139 = arith.constant 1.000000e+00 : f32
    %146 = vector.broadcast %cst_139 : f32 to vector<16x512xf32>
    %147 = arith.addf %146, %145 : vector<16x512xf32>
    %148 = tpu.reciprocal %147 {approx = true} : vector<16x512xf32> -> vector<16x512xf32>
    %149 = arith.mulf %147, %148 : vector<16x512xf32>
    %cst_140 = arith.constant 2.000000e+00 : f32
    %150 = vector.broadcast %cst_140 : f32 to vector<16x512xf32>
    %151 = arith.subf %150, %149 : vector<16x512xf32>
    %152 = arith.mulf %148, %151 : vector<16x512xf32>
    %cst_141 = arith.constant 1.06140542 : f32
    %153 = vector.broadcast %cst_141 : f32 to vector<16x512xf32>
    %154 = arith.mulf %153, %152 : vector<16x512xf32>
    %cst_142 = arith.constant -1.45315206 : f32
    %155 = vector.broadcast %cst_142 : f32 to vector<16x512xf32>
    %156 = arith.addf %154, %155 : vector<16x512xf32>
    %157 = arith.mulf %156, %152 : vector<16x512xf32>
    %cst_143 = arith.constant 1.42141378 : f32
    %158 = vector.broadcast %cst_143 : f32 to vector<16x512xf32>
    %159 = arith.addf %157, %158 : vector<16x512xf32>
    %160 = arith.mulf %159, %152 : vector<16x512xf32>
    %cst_144 = arith.constant -0.284496725 : f32
    %161 = vector.broadcast %cst_144 : f32 to vector<16x512xf32>
    %162 = arith.addf %160, %161 : vector<16x512xf32>
    %163 = arith.mulf %162, %152 : vector<16x512xf32>
    %cst_145 = arith.constant 0.254829586 : f32
    %164 = vector.broadcast %cst_145 : f32 to vector<16x512xf32>
    %165 = arith.addf %163, %164 : vector<16x512xf32>
    %166 = arith.mulf %165, %152 : vector<16x512xf32>
    %cst_146 = arith.constant 0.000000e+00 : f32
    %167 = vector.broadcast %cst_146 : f32 to vector<16x512xf32>
    %168 = arith.subf %167, %143 : vector<16x512xf32>
    %169 = arith.mulf %168, %143 : vector<16x512xf32>
    %170 = math.exp %169 : vector<16x512xf32>
    %171 = arith.mulf %166, %170 : vector<16x512xf32>
    %cst_147 = arith.constant 1.000000e+00 : f32
    %172 = vector.broadcast %cst_147 : f32 to vector<16x512xf32>
    %173 = arith.subf %172, %171 : vector<16x512xf32>
    %174 = arith.mulf %142, %173 : vector<16x512xf32>
    %cst_148 = arith.constant 5.000000e-01 : f32
    %175 = vector.broadcast %cst_148 : f32 to vector<16x512xf32>
    %176 = arith.mulf %175, %135 : vector<16x512xf32>
    %cst_149 = arith.constant 1.000000e+00 : f32
    %177 = vector.broadcast %cst_149 : f32 to vector<16x512xf32>
    %178 = arith.addf %177, %174 : vector<16x512xf32>
    %179 = arith.mulf %176, %178 : vector<16x512xf32>
    %c0_150 = arith.constant 0 : index
    %c0_151 = arith.constant 0 : index
    %180 = vector.load %arg7[%c0_150, %c0_151] : memref<16x16xf32, #tpu.memory_space<vmem>>, vector<16x16xf32>
    %cst_152 = arith.constant dense<0.000000e+00> : vector<16x512xf32>
    %181 = tpu.matmul %180, %179, %cst_152 {dimension_numbers = #tpu.dot_dimension_numbers<[1], [0], [0], [1], [0, 0, 1, 1], [], []>} : vector<16x16xf32>, vector<16x512xf32>, vector<16x512xf32> -> vector<16x512xf32>
    %c0_153 = arith.constant 0 : index
    %c0_154 = arith.constant 0 : index
    %182 = vector.load %arg10[%c0_153, %c0_154] : memref<16x16xf32, #tpu.memory_space<vmem>>, vector<16x16xf32>
    %c0_155 = arith.constant 0 : index
    %c0_156 = arith.constant 0 : index
    %183 = vector.load %arg8[%c0_155, %c0_156] : memref<16x1xf32, #tpu.memory_space<vmem>>, vector<16x1xf32>
    %c0_157 = arith.constant 0 : index
    %c0_158 = arith.constant 0 : index
    %184 = vector.load %arg9[%c0_157, %c0_158] : memref<16x1xf32, #tpu.memory_space<vmem>>, vector<16x1xf32>
    %185 = vector.broadcast %111 : vector<1x512xf32> to vector<16x512xf32>
    %186 = arith.mulf %181, %185 : vector<16x512xf32>
    %cst_159 = arith.constant dense<0.000000e+00> : vector<16xf32>
    %187 = vector.multi_reduction <add>, %186, %cst_159 [1] : vector<16x512xf32> to vector<16xf32>
    %188 = vector.shape_cast %187 : vector<16xf32> to vector<16x1xf32>
    %cst_160 = arith.constant dense<0.000000e+00> : vector<16x1xf32>
    %189 = tpu.matmul %182, %188, %cst_160 {dimension_numbers = #tpu.dot_dimension_numbers<[1], [0], [0], [1], [0, 0, 1, 1], [], []>} : vector<16x16xf32>, vector<16x1xf32>, vector<16x1xf32> -> vector<16x1xf32>
    %190 = vector.broadcast %189 : vector<16x1xf32> to vector<16x512xf32>
    %191 = arith.subf %181, %190 : vector<16x512xf32>
    %192 = arith.mulf %191, %191 : vector<16x512xf32>
    %193 = vector.broadcast %111 : vector<1x512xf32> to vector<16x512xf32>
    %194 = arith.mulf %192, %193 : vector<16x512xf32>
    %cst_161 = arith.constant dense<0.000000e+00> : vector<16xf32>
    %195 = vector.multi_reduction <add>, %194, %cst_161 [1] : vector<16x512xf32> to vector<16xf32>
    %196 = vector.shape_cast %195 : vector<16xf32> to vector<16x1xf32>
    %cst_162 = arith.constant dense<0.000000e+00> : vector<16x1xf32>
    %197 = tpu.matmul %182, %196, %cst_162 {dimension_numbers = #tpu.dot_dimension_numbers<[1], [0], [0], [1], [0, 0, 1, 1], [], []>} : vector<16x16xf32>, vector<16x1xf32>, vector<16x1xf32> -> vector<16x1xf32>
    %cst_163 = arith.constant 9.99999974E-6 : f32
    %198 = vector.broadcast %cst_163 : f32 to vector<16x1xf32>
    %199 = arith.addf %197, %198 : vector<16x1xf32>
    %200 = math.rsqrt %199 : vector<16x1xf32>
    %201 = arith.mulf %200, %183 : vector<16x1xf32>
    %202 = vector.broadcast %201 : vector<16x1xf32> to vector<16x512xf32>
    %203 = arith.mulf %191, %202 : vector<16x512xf32>
    %204 = vector.broadcast %184 : vector<16x1xf32> to vector<16x512xf32>
    %205 = arith.addf %203, %204 : vector<16x512xf32>
    %cst_164 = arith.constant 0.707106769 : f32
    %206 = vector.broadcast %cst_164 : f32 to vector<16x512xf32>
    %207 = arith.mulf %205, %206 : vector<16x512xf32>
    %cst_165 = arith.constant 0.000000e+00 : f32
    %208 = vector.broadcast %cst_165 : f32 to vector<16x512xf32>
    %209 = arith.cmpf oge, %207, %208 : vector<16x512xf32>
    %cst_166 = arith.constant 1.000000e+00 : f32
    %cst_167 = arith.constant -1.000000e+00 : f32
    %210 = vector.broadcast %cst_166 : f32 to vector<16x512xf32>
    %211 = vector.broadcast %cst_167 : f32 to vector<16x512xf32>
    %212 = arith.select %209, %210, %211 : vector<16x512xi1>, vector<16x512xf32>
    %213 = math.absf %207 : vector<16x512xf32>
    %cst_168 = arith.constant 0.327591091 : f32
    %214 = vector.broadcast %cst_168 : f32 to vector<16x512xf32>
    %215 = arith.mulf %214, %213 : vector<16x512xf32>
    %cst_169 = arith.constant 1.000000e+00 : f32
    %216 = vector.broadcast %cst_169 : f32 to vector<16x512xf32>
    %217 = arith.addf %216, %215 : vector<16x512xf32>
    %218 = tpu.reciprocal %217 {approx = true} : vector<16x512xf32> -> vector<16x512xf32>
    %219 = arith.mulf %217, %218 : vector<16x512xf32>
    %cst_170 = arith.constant 2.000000e+00 : f32
    %220 = vector.broadcast %cst_170 : f32 to vector<16x512xf32>
    %221 = arith.subf %220, %219 : vector<16x512xf32>
    %222 = arith.mulf %218, %221 : vector<16x512xf32>
    %cst_171 = arith.constant 1.06140542 : f32
    %223 = vector.broadcast %cst_171 : f32 to vector<16x512xf32>
    %224 = arith.mulf %223, %222 : vector<16x512xf32>
    %cst_172 = arith.constant -1.45315206 : f32
    %225 = vector.broadcast %cst_172 : f32 to vector<16x512xf32>
    %226 = arith.addf %224, %225 : vector<16x512xf32>
    %227 = arith.mulf %226, %222 : vector<16x512xf32>
    %cst_173 = arith.constant 1.42141378 : f32
    %228 = vector.broadcast %cst_173 : f32 to vector<16x512xf32>
    %229 = arith.addf %227, %228 : vector<16x512xf32>
    %230 = arith.mulf %229, %222 : vector<16x512xf32>
    %cst_174 = arith.constant -0.284496725 : f32
    %231 = vector.broadcast %cst_174 : f32 to vector<16x512xf32>
    %232 = arith.addf %230, %231 : vector<16x512xf32>
    %233 = arith.mulf %232, %222 : vector<16x512xf32>
    %cst_175 = arith.constant 0.254829586 : f32
    %234 = vector.broadcast %cst_175 : f32 to vector<16x512xf32>
    %235 = arith.addf %233, %234 : vector<16x512xf32>
    %236 = arith.mulf %235, %222 : vector<16x512xf32>
    %cst_176 = arith.constant 0.000000e+00 : f32
    %237 = vector.broadcast %cst_176 : f32 to vector<16x512xf32>
    %238 = arith.subf %237, %213 : vector<16x512xf32>
    %239 = arith.mulf %238, %213 : vector<16x512xf32>
    %240 = math.exp %239 : vector<16x512xf32>
    %241 = arith.mulf %236, %240 : vector<16x512xf32>
    %cst_177 = arith.constant 1.000000e+00 : f32
    %242 = vector.broadcast %cst_177 : f32 to vector<16x512xf32>
    %243 = arith.subf %242, %241 : vector<16x512xf32>
    %244 = arith.mulf %212, %243 : vector<16x512xf32>
    %cst_178 = arith.constant 5.000000e-01 : f32
    %245 = vector.broadcast %cst_178 : f32 to vector<16x512xf32>
    %246 = arith.mulf %245, %205 : vector<16x512xf32>
    %cst_179 = arith.constant 1.000000e+00 : f32
    %247 = vector.broadcast %cst_179 : f32 to vector<16x512xf32>
    %248 = arith.addf %247, %244 : vector<16x512xf32>
    %249 = arith.mulf %246, %248 : vector<16x512xf32>
    %c0_180 = arith.constant 0 : index
    %c0_181 = arith.constant 0 : index
    %c0_182 = arith.constant 0 : index
    %250 = vector.load %arg11[%c0_180, %c0_181, %c0_182] : memref<1x16x512xf32, #tpu.memory_space<vmem>>, vector<1x16x512xf32>
    %251 = vector.shape_cast %250 : vector<1x16x512xf32> to vector<16x512xf32>
    %252 = vector.shape_cast %249 : vector<16x512xf32> to vector<1x16x512xf32>
    tpu.vector_store %arg11[%c0_180, %c0_181, %c0_182], %252 {strides = array<i32>} : memref<1x16x512xf32, #tpu.memory_space<vmem>>, vector<1x16x512xf32>,
    return
  }
  func.func @transform_0(%arg0: i32) -> (i32, i32, i32) {
    %c0_i32 = arith.constant 0 : i32
    %c0_i32_0 = arith.constant 0 : i32
    %c0_i32_1 = arith.constant 0 : i32
    return %arg0, %c0_i32, %c0_i32_0 : i32, i32, i32
  }
  func.func @transform_1(%arg0: i32) -> (i32, i32) {
    %c0_i32 = arith.constant 0 : i32
    %c0_i32_0 = arith.constant 0 : i32
    %c0_i32_1 = arith.constant 0 : i32
    return %c0_i32, %c0_i32_0 : i32, i32
  }
  func.func @transform_2(%arg0: i32) -> (i32, i32) {
    %c0_i32 = arith.constant 0 : i32
    %c0_i32_0 = arith.constant 0 : i32
    %c0_i32_1 = arith.constant 0 : i32
    return %c0_i32, %c0_i32_0 : i32, i32
  }
  func.func @transform_3(%arg0: i32) -> (i32, i32) {
    %c0_i32 = arith.constant 0 : i32
    %c0_i32_0 = arith.constant 0 : i32
    %c0_i32_1 = arith.constant 0 : i32
    return %c0_i32, %c0_i32_0 : i32, i32
  }
  func.func @transform_4(%arg0: i32) -> (i32, i32) {
    %c0_i32 = arith.constant 0 : i32
    %c0_i32_0 = arith.constant 0 : i32
    %c0_i32_1 = arith.constant 0 : i32
    return %c0_i32, %c0_i32_0 : i32, i32
  }
  func.func @transform_5(%arg0: i32) -> (i32, i32) {
    %c0_i32 = arith.constant 0 : i32
    %c0_i32_0 = arith.constant 0 : i32
    %c0_i32_1 = arith.constant 0 : i32
    return %c0_i32, %c0_i32_0 : i32, i32
  }
  func.func @transform_6(%arg0: i32) -> (i32, i32) {
    %c0_i32 = arith.constant 0 : i32
    %c0_i32_0 = arith.constant 0 : i32
    %c0_i32_1 = arith.constant 0 : i32
    return %c0_i32, %c0_i32_0 : i32, i32
  }
  func.func @transform_7(%arg0: i32) -> (i32, i32) {
    %c0_i32 = arith.constant 0 : i32
    %c0_i32_0 = arith.constant 0 : i32
    %c0_i32_1 = arith.constant 0 : i32
    return %c0_i32, %c0_i32_0 : i32, i32
  }
  func.func @transform_8(%arg0: i32) -> (i32, i32) {
    %c0_i32 = arith.constant 0 : i32
    %c0_i32_0 = arith.constant 0 : i32
    %c0_i32_1 = arith.constant 0 : i32
    return %c0_i32, %c0_i32_0 : i32, i32
  }
  func.func @transform_9(%arg0: i32) -> (i32, i32) {
    %c0_i32 = arith.constant 0 : i32
    %c0_i32_0 = arith.constant 0 : i32
    %c0_i32_1 = arith.constant 0 : i32
    return %c0_i32, %c0_i32_0 : i32, i32
  }
  func.func @transform_10(%arg0: i32) -> (i32, i32, i32) {
    %c0_i32 = arith.constant 0 : i32
    %c0_i32_0 = arith.constant 0 : i32
    %c0_i32_1 = arith.constant 0 : i32
    return %arg0, %c0_i32, %c0_i32_0 : i32, i32, i32
  }
}

</mosaic_0001>

<llo_original>
// kernel: tpu_custom_call.1
$region0: #{tpu_custom_call.1}
  #allocation0 [shape = 'u32[]', space=smem, size = 0x4, offset = 0x4, fixed_abs, tag = 'smem constant byte address 0x4 - core index']
  #allocation1 [shape = 'u32[144,128]{1,0:T(1,128)}', space=vmem, size = 0x12000, scoped, tag = 'internal scratch']
  #allocation2 [shape = 'f32[144,512]{1,0:T(8,128)}', space=vmem, size = 0x48000, scoped, tag = 'scratch operand']
  %s0 = inlined_call_operand.hbm [shape: f32[2,4,1152], index: 0, kind: input, shape index: {}]
  %s1 = inlined_call_operand.vmem [shape: f32[16,144], index: 1, kind: input, shape index: {}]
  %s2 = inlined_call_operand.hbm [shape: f32[1,512], index: 2, kind: input, shape index: {}]
  %s3 = inlined_call_operand.vmem [shape: f32[16,1], index: 3, kind: input, shape index: {}]
  %s4 = inlined_call_operand.vmem [shape: f32[16,1], index: 4, kind: input, shape index: {}]
  %s5 = inlined_call_operand.vmem [shape: f32[16,16], index: 5, kind: input, shape index: {}]
  %s6 = inlined_call_operand.vmem [shape: f32[16,16], index: 6, kind: input, shape index: {}]
  %s7 = inlined_call_operand.vmem [shape: f32[16,1], index: 7, kind: input, shape index: {}]
  %s8 = inlined_call_operand.vmem [shape: f32[16,1], index: 8, kind: input, shape index: {}]
  %s9 = inlined_call_operand.vmem [shape: f32[16,16], index: 9, kind: input, shape index: {}]
  %s10 = inlined_call_operand.hbm [shape: f32[2,16,512], index: 10, kind: output, shape index: {}]
  %s11 = sld [smem:[#allocation0]]
  $region81: #{tpu_custom_call.1} parent=0
    _
  %s13 = ssub.s32 1, %s11
  %s14 = scalar_select 0, %s13, %s11
  $region1: #{tpu_custom_call.1} parent=0
    #allocation3 [shape = 'u8[36864]{0}', space=vmem, size = 0x9000, scoped, tag = 'input window, operand 0']
    #allocation4 [shape = 's32[2]{0}', space=sflag, size = 0x8, scoped, tag = 'scoped memory for tpu_custom_call.1']
    #allocation5 [shape = 's32[2]{0}', space=sflag, size = 0x8, scoped, tag = 'scoped memory for tpu_custom_call.1']
    #allocation6 [shape = 'u8[2048]{0}', space=vmem, size = 0x800, scoped, tag = 'input window, operand 2, single buffered']
    #allocation7 [shape = 's32[1]{0}', space=sflag, size = 0x4, scoped, tag = 'scoped memory for tpu_custom_call.1']
    #allocation8 [shape = 'u8[65536]{0}', space=vmem, size = 0x10000, scoped, tag = 'output window, operand 0']
    %15 = vsyncpa [#allocation4], 0
    %s16 = scalar_lea.sflag [#allocation4], 1
    %17 = vsyncpa %s16, 0
    %18 = vsyncpa [#allocation7], 0
    %19 = vsyncpa [#allocation5], 0
    %s20 = scalar_lea.sflag [#allocation5], 1
    %21 = vsyncpa %s20, 0
    loop: start=0, step=1, limit=4
    $region2: #{tpu_custom_call.1} parent=1 // loop_pre_header
      _
    $region3: #{tpu_custom_call.1} parent=1 // loop_header
      %s23 = sphi 0, %s27
      %p24 = scmp.ge.s32.totalorder %s23, 4
      %s33 = sphi 0, %s35
      %s36 = sphi 0, %s33
      %s37 = sphi 0, %s36
      %s53 = sphi 0, %s37
      %s57 = sphi 0, %s57
      %s59 = sphi 0, %s57
      %s60 = sphi 0, %s59
      %s74 = sphi 0, %s60
      %s78 = sphi 0, %s78
      %s80 = sphi 0, %s78
      %s81 = sphi 0, %s80
      %s95 = sphi 0, %s81
      %s99 = sphi 0, %s99
      %s101 = sphi 0, %s99
      %s102 = sphi 0, %s101
      %s116 = sphi 0, %s102
      %s120 = sphi 0, %s120
      %s122 = sphi 0, %s120
      %s123 = sphi 0, %s122
      %s137 = sphi 0, %s123
      %s141 = sphi 0, %s141
      %s143 = sphi 0, %s141
      %s144 = sphi 0, %s143
      %s158 = sphi 0, %s144
      %s162 = sphi 0, %s162
      %s164 = sphi 0, %s162
      %s165 = sphi 0, %s164
      %s179 = sphi 0, %s165
      %s183 = sphi 0, %s183
      %s185 = sphi 0, %s183
      %s186 = sphi 0, %s185
      %s200 = sphi 0, %s186
      %s204 = sphi 0, %s204
      %s206 = sphi 0, %s204
      %s207 = sphi 0, %s206
      %s221 = sphi 0, %s207
      %s225 = sphi 0, %s225
      %s227 = sphi 0, %s225
      %s228 = sphi 0, %s227
      %s242 = sphi 0, %s228
      %s248 = sphi 0, %s250
      %s251 = sphi 0, %s248
      %s252 = sphi 0, %s251
      %s268 = sphi 0, %s252
    $region4: #{tpu_custom_call.1} parent=1 // loop_header_branch
      %26 = sbr.rel (%p24) target = $region8
    $region5: #{tpu_custom_call.1} parent=1 // loop_body
      %s28 = ssub.s32 %s23, 1
      %s29 = ssub.s32 %s23, 2
      %s30 = sadd.s32 %s23, 1
      %s31 = ssub.s32 %s23, %s30
      %p32 = scmp.eq.s32.totalorder %s31, 0
      %s34 = sadd.s32 %s33, 1
      %s35 = scalar_select %p32, %s33, %s34
      %p38 = pneg %p32
      %p39 = scmp.eq.s32.totalorder %s23, 1
      %p40 = por %p38, %p39
      %p41 = scmp.ne.s32.totalorder %s33, %s36
      %p42 = scmp.eq.s32.totalorder %s23, 0
      %p43 = por %p41, %p42
      %p44 = scmp.ne.s32.totalorder %s33, %s36
      %p45 = scmp.eq.s32.totalorder %s28, 1
      %p46 = por %p44, %p45
      %p47 = scmp.ne.s32.totalorder %s36, %s37
      %p48 = scmp.eq.s32.totalorder %s28, 0
      %p49 = por %p47, %p48
      %p50 = scmp.ne.s32.totalorder %s36, %s37
      %p51 = scmp.eq.s32.totalorder %s29, 1
      %p52 = por %p50, %p51
      %p54 = scmp.ne.s32.totalorder %s37, %s53
      %p55 = scmp.eq.s32.totalorder %s29, 0
      %p56 = por %p54, %p55
      %s58 = sadd.s32 %s57, 1
      %p61 = scmp.eq.s32.totalorder %s23, 1
      %p62 = scmp.ne.s32.totalorder %s57, %s59
      %p63 = scmp.eq.s32.totalorder %s23, 0
      %p64 = por %p62, %p63
      %p65 = scmp.ne.s32.totalorder %s57, %s59
      %p66 = scmp.eq.s32.totalorder %s28, 1
      %p67 = por %p65, %p66
      %p68 = scmp.ne.s32.totalorder %s59, %s60
      %p69 = scmp.eq.s32.totalorder %s28, 0
      %p70 = por %p68, %p69
      %p71 = scmp.ne.s32.totalorder %s59, %s60
      %p72 = scmp.eq.s32.totalorder %s29, 1
      %p73 = por %p71, %p72
      %p75 = scmp.ne.s32.totalorder %s60, %s74
      %p76 = scmp.eq.s32.totalorder %s29, 0
      %p77 = por %p75, %p76
      %s79 = sadd.s32 %s78, 1
      %p82 = scmp.eq.s32.totalorder %s23, 1
      %p83 = scmp.ne.s32.totalorder %s78, %s80
      %p84 = scmp.eq.s32.totalorder %s23, 0
      %p85 = por %p83, %p84
      %p86 = scmp.ne.s32.totalorder %s78, %s80
      %p87 = scmp.eq.s32.totalorder %s28, 1
      %p88 = por %p86, %p87
      %p89 = scmp.ne.s32.totalorder %s80, %s81
      %p90 = scmp.eq.s32.totalorder %s28, 0
      %p91 = por %p89, %p90
      %p92 = scmp.ne.s32.totalorder %s80, %s81
      %p93 = scmp.eq.s32.totalorder %s29, 1
      %p94 = por %p92, %p93
      %p96 = scmp.ne.s32.totalorder %s81, %s95
      %p97 = scmp.eq.s32.totalorder %s29, 0
      %p98 = por %p96, %p97
      %s100 = sadd.s32 %s99, 1
      %p103 = scmp.eq.s32.totalorder %s23, 1
      %p104 = scmp.ne.s32.totalorder %s99, %s101
      %p105 = scmp.eq.s32.totalorder %s23, 0
      %p106 = por %p104, %p105
      %p107 = scmp.ne.s32.totalorder %s99, %s101
      %p108 = scmp.eq.s32.totalorder %s28, 1
      %p109 = por %p107, %p108
      %p110 = scmp.ne.s32.totalorder %s101, %s102
      %p111 = scmp.eq.s32.totalorder %s28, 0
      %p112 = por %p110, %p111
      %p113 = scmp.ne.s32.totalorder %s101, %s102
      %p114 = scmp.eq.s32.totalorder %s29, 1
      %p115 = por %p113, %p114
      %p117 = scmp.ne.s32.totalorder %s102, %s116
      %p118 = scmp.eq.s32.totalorder %s29, 0
      %p119 = por %p117, %p118
      %s121 = sadd.s32 %s120, 1
      %p124 = scmp.eq.s32.totalorder %s23, 1
      %p125 = scmp.ne.s32.totalorder %s120, %s122
      %p126 = scmp.eq.s32.totalorder %s23, 0
      %p127 = por %p125, %p126
      %p128 = scmp.ne.s32.totalorder %s120, %s122
      %p129 = scmp.eq.s32.totalorder %s28, 1
      %p130 = por %p128, %p129
      %p131 = scmp.ne.s32.totalorder %s122, %s123
      %p132 = scmp.eq.s32.totalorder %s28, 0
      %p133 = por %p131, %p132
      %p134 = scmp.ne.s32.totalorder %s122, %s123
      %p135 = scmp.eq.s32.totalorder %s29, 1
      %p136 = por %p134, %p135
      %p138 = scmp.ne.s32.totalorder %s123, %s137
      %p139 = scmp.eq.s32.totalorder %s29, 0
      %p140 = por %p138, %p139
      %s142 = sadd.s32 %s141, 1
      %p145 = scmp.eq.s32.totalorder %s23, 1
      %p146 = scmp.ne.s32.totalorder %s141, %s143
      %p147 = scmp.eq.s32.totalorder %s23, 0
      %p148 = por %p146, %p147
      %p149 = scmp.ne.s32.totalorder %s141, %s143
      %p150 = scmp.eq.s32.totalorder %s28, 1
      %p151 = por %p149, %p150
      %p152 = scmp.ne.s32.totalorder %s143, %s144
      %p153 = scmp.eq.s32.totalorder %s28, 0
      %p154 = por %p152, %p153
      %p155 = scmp.ne.s32.totalorder %s143, %s144
      %p156 = scmp.eq.s32.totalorder %s29, 1
      %p157 = por %p155, %p156
      %p159 = scmp.ne.s32.totalorder %s144, %s158
      %p160 = scmp.eq.s32.totalorder %s29, 0
      %p161 = por %p159, %p160
      %s163 = sadd.s32 %s162, 1
      %p166 = scmp.eq.s32.totalorder %s23, 1
      %p167 = scmp.ne.s32.totalorder %s162, %s164
      %p168 = scmp.eq.s32.totalorder %s23, 0
      %p169 = por %p167, %p168
      %p170 = scmp.ne.s32.totalorder %s162, %s164
      %p171 = scmp.eq.s32.totalorder %s28, 1
      %p172 = por %p170, %p171
      %p173 = scmp.ne.s32.totalorder %s164, %s165
      %p174 = scmp.eq.s32.totalorder %s28, 0
      %p175 = por %p173, %p174
      %p176 = scmp.ne.s32.totalorder %s164, %s165
      %p177 = scmp.eq.s32.totalorder %s29, 1
      %p178 = por %p176, %p177
      %p180 = scmp.ne.s32.totalorder %s165, %s179
      %p181 = scmp.eq.s32.totalorder %s29, 0
      %p182 = por %p180, %p181
      %s184 = sadd.s32 %s183, 1
      %p187 = scmp.eq.s32.totalorder %s23, 1
      %p188 = scmp.ne.s32.totalorder %s183, %s185
      %p189 = scmp.eq.s32.totalorder %s23, 0
      %p190 = por %p188, %p189
      %p191 = scmp.ne.s32.totalorder %s183, %s185
      %p192 = scmp.eq.s32.totalorder %s28, 1
      %p193 = por %p191, %p192
      %p194 = scmp.ne.s32.totalorder %s185, %s186
      %p195 = scmp.eq.s32.totalorder %s28, 0
      %p196 = por %p194, %p195
      %p197 = scmp.ne.s32.totalorder %s185, %s186
      %p198 = scmp.eq.s32.totalorder %s29, 1
      %p199 = por %p197, %p198
      %p201 = scmp.ne.s32.totalorder %s186, %s200
      %p202 = scmp.eq.s32.totalorder %s29, 0
      %p203 = por %p201, %p202
      %s205 = sadd.s32 %s204, 1
      %p208 = scmp.eq.s32.totalorder %s23, 1
      %p209 = scmp.ne.s32.totalorder %s204, %s206
      %p210 = scmp.eq.s32.totalorder %s23, 0
      %p211 = por %p209, %p210
      %p212 = scmp.ne.s32.totalorder %s204, %s206
      %p213 = scmp.eq.s32.totalorder %s28, 1
      %p214 = por %p212, %p213
      %p215 = scmp.ne.s32.totalorder %s206, %s207
      %p216 = scmp.eq.s32.totalorder %s28, 0
      %p217 = por %p215, %p216
      %p218 = scmp.ne.s32.totalorder %s206, %s207
      %p219 = scmp.eq.s32.totalorder %s29, 1
      %p220 = por %p218, %p219
      %p222 = scmp.ne.s32.totalorder %s207, %s221
      %p223 = scmp.eq.s32.totalorder %s29, 0
      %p224 = por %p222, %p223
      %s226 = sadd.s32 %s225, 1
      %p229 = scmp.eq.s32.totalorder %s23, 1
      %p230 = scmp.ne.s32.totalorder %s225, %s227
      %p231 = scmp.eq.s32.totalorder %s23, 0
      %p232 = por %p230, %p231
      %p233 = scmp.ne.s32.totalorder %s225, %s227
      %p234 = scmp.eq.s32.totalorder %s28, 1
      %p235 = por %p233, %p234
      %p236 = scmp.ne.s32.totalorder %s227, %s228
      %p237 = scmp.eq.s32.totalorder %s28, 0
      %p238 = por %p236, %p237
      %p239 = scmp.ne.s32.totalorder %s227, %s228
      %p240 = scmp.eq.s32.totalorder %s29, 1
      %p241 = por %p239, %p240
      %p243 = scmp.ne.s32.totalorder %s228, %s242
      %p244 = scmp.eq.s32.totalorder %s29, 0
      %p245 = por %p243, %p244
      %s246 = ssub.s32 %s23, %s30
      %p247 = scmp.eq.s32.totalorder %s246, 0
      %s249 = sadd.s32 %s248, 1
      %s250 = scalar_select %p247, %s248, %s249
      %p253 = pneg %p247
      %p254 = scmp.eq.s32.totalorder %s23, 1
      %p255 = por %p253, %p254
      %p256 = scmp.ne.s32.totalorder %s248, %s251
      %p257 = scmp.eq.s32.totalorder %s23, 0
      %p258 = por %p256, %p257
      %p259 = scmp.ne.s32.totalorder %s248, %s251
      %p260 = scmp.eq.s32.totalorder %s28, 1
      %p261 = por %p259, %p260
      %p262 = scmp.ne.s32.totalorder %s251, %s252
      %p263 = scmp.eq.s32.totalorder %s28, 0
      %p264 = por %p262, %p263
      %p265 = scmp.ne.s32.totalorder %s251, %s252
      %p266 = scmp.eq.s32.totalorder %s29, 1
      %p267 = por %p265, %p266
      %p269 = scmp.ne.s32.totalorder %s252, %s268
      %p270 = scmp.eq.s32.totalorder %s29, 0
      %p271 = por %p269, %p270
      %p272 = scmp.le.s32.totalorder 1, %s23
      %p273 = scmp.lt.s32.totalorder %s23, 3
      %p274 = pnand %p272, %p273
      %p275 = pneg %p274
      // Predicated region
      $region9: #{tpu_custom_call.1} parent=5 // pred_check
        _
      $region10: #{tpu_custom_call.1} parent=5 // pred_check_branch
        %277 = sbr.rel (%p274) target = $region12
      $region11: #{tpu_custom_call.1} parent=5 // pred_region
        %s278 = ssub.s32 %s23, 1
        // Predicated region
        $region13: #{tpu_custom_call.1} parent=11 // pred_check
          %p279 = pneg %p70
        $region14: #{tpu_custom_call.1} parent=11 // pred_check_branch
          %281 = sbr.rel (%p279) target = $region16
        $region15: #{tpu_custom_call.1} parent=11 // pred_region
          _
        $region16: #{tpu_custom_call.1} parent=11 // pred_fallthru
          _
        // Predicated region
        $region17: #{tpu_custom_call.1} parent=11 // pred_check
          %p282 = pneg %p91
        $region18: #{tpu_custom_call.1} parent=11 // pred_check_branch
          %284 = sbr.rel (%p282) target = $region20
        $region19: #{tpu_custom_call.1} parent=11 // pred_region
          %s286 = ssub.s32 64, 64
          %287 = vsyncadd [#allocation7], %s286
          %s289 = sshll.u32 [#allocation6], 4
          %s290 = int_to_ptr.vmem [resolvable:$true] %s289
          %292 = dma.hbm_to_vmem [thread:$0]  %s2, 64, %s290, [#allocation7]
        $region20: #{tpu_custom_call.1} parent=11 // pred_fallthru
          _
        // Predicated region
        $region21: #{tpu_custom_call.1} parent=11 // pred_check
          %p293 = pneg %p112
        $region22: #{tpu_custom_call.1} parent=11 // pred_check_branch
          %295 = sbr.rel (%p293) target = $region24
        $region23: #{tpu_custom_call.1} parent=11 // pred_region
          _
        $region24: #{tpu_custom_call.1} parent=11 // pred_fallthru
          _
        // Predicated region
        $region25: #{tpu_custom_call.1} parent=11 // pred_check
          %p296 = pneg %p133
        $region26: #{tpu_custom_call.1} parent=11 // pred_check_branch
          %298 = sbr.rel (%p296) target = $region28
        $region27: #{tpu_custom_call.1} parent=11 // pred_region
          _
        $region28: #{tpu_custom_call.1} parent=11 // pred_fallthru
          _
        // Predicated region
        $region29: #{tpu_custom_call.1} parent=11 // pred_check
          %p299 = pneg %p154
        $region30: #{tpu_custom_call.1} parent=11 // pred_check_branch
          %301 = sbr.rel (%p299) target = $region32
        $region31: #{tpu_custom_call.1} parent=11 // pred_region
          _
        $region32: #{tpu_custom_call.1} parent=11 // pred_fallthru
          _
        // Predicated region
        $region33: #{tpu_custom_call.1} parent=11 // pred_check
          %p302 = pneg %p175
        $region34: #{tpu_custom_call.1} parent=11 // pred_check_branch
          %304 = sbr.rel (%p302) target = $region36
        $region35: #{tpu_custom_call.1} parent=11 // pred_region
          _
        $region36: #{tpu_custom_call.1} parent=11 // pred_fallthru
          _
        // Predicated region
        $region37: #{tpu_custom_call.1} parent=11 // pred_check
          %p305 = pneg %p196
        $region38: #{tpu_custom_call.1} parent=11 // pred_check_branch
          %307 = sbr.rel (%p305) target = $region40
        $region39: #{tpu_custom_call.1} parent=11 // pred_region
          _
        $region40: #{tpu_custom_call.1} parent=11 // pred_fallthru
          _
        // Predicated region
        $region41: #{tpu_custom_call.1} parent=11 // pred_check
          %p308 = pneg %p217
        $region42: #{tpu_custom_call.1} parent=11 // pred_check_branch
          %310 = sbr.rel (%p308) target = $region44
        $region43: #{tpu_custom_call.1} parent=11 // pred_region
          _
        $region44: #{tpu_custom_call.1} parent=11 // pred_fallthru
          _
        // Predicated region
        $region45: #{tpu_custom_call.1} parent=11 // pred_check
          %p311 = pneg %p238
        $region46: #{tpu_custom_call.1} parent=11 // pred_check_branch
          %313 = sbr.rel (%p311) target = $region48
        $region47: #{tpu_custom_call.1} parent=11 // pred_region
          _
        $region48: #{tpu_custom_call.1} parent=11 // pred_fallthru
          _
      $region12: #{tpu_custom_call.1} parent=5 // pred_fallthru
        _
      %p314 = scmp.lt.s32.totalorder %s23, 2
      // Predicated region
      $region49: #{tpu_custom_call.1} parent=5 // pred_check
        %p315 = pneg %p314
      $region50: #{tpu_custom_call.1} parent=5 // pred_check_branch
        %317 = sbr.rel (%p315) target = $region52
      $region51: #{tpu_custom_call.1} parent=5 // pred_region
        // Predicated region
        $region53: #{tpu_custom_call.1} parent=51 // pred_check
          %p318 = pneg %p43
        $region54: #{tpu_custom_call.1} parent=51 // pred_check_branch
          %320 = sbr.rel (%p318) target = $region56
        $region55: #{tpu_custom_call.1} parent=51 // pred_region
          %s321 = sand.u32 %s33, 1
          %s322 = scalar_lea.sflag [#allocation4], %s321
          %s323 = sand.u32 %s33, 1
          %s324 = smul.addr %s323, 36
          %s325 = scalar_lea.vmem [#allocation3], %s324
          %s327 = ssub.s32 576, 576
          %328 = vsyncadd %s322, %s327
          %s329 = smul.addr %s23, 9
          %s330 = smul.addr %s329, 64
          %s331 = scalar_lea.hbm %s0, %s330
          %s333 = sshll.u32 %s325, 4
          %s334 = int_to_ptr.vmem [resolvable:$true] %s333
          %336 = dma.hbm_to_vmem [thread:$0]  %s331, 576, %s334, %s322
        $region56: #{tpu_custom_call.1} parent=51 // pred_fallthru
          _
      $region52: #{tpu_custom_call.1} parent=5 // pred_fallthru
        _
      %p337 = scmp.le.s32.totalorder 1, %s23
      %p338 = scmp.lt.s32.totalorder %s23, 3
      %p339 = pnand %p337, %p338
      %p340 = pneg %p339
      // Predicated region
      $region57: #{tpu_custom_call.1} parent=5 // pred_check
        _
      $region58: #{tpu_custom_call.1} parent=5 // pred_check_branch
        %342 = sbr.rel (%p339) target = $region60
      $region59: #{tpu_custom_call.1} parent=5 // pred_region
        %s343 = ssub.s32 %s23, 1
        %s344 = sand.u32 %s36, 1
        %s345 = scalar_lea.sflag [#allocation4], %s344
        %s346 = sand.u32 %s36, 1
        %s347 = smul.addr %s346, 36
        %s348 = scalar_lea.vmem [#allocation3], %s347
        // Predicated region
        $region61: #{tpu_custom_call.1} parent=59 // pred_check
          %p349 = pneg %p49
        $region62: #{tpu_custom_call.1} parent=59 // pred_check_branch
          %351 = sbr.rel (%p349) target = $region64
        $region63: #{tpu_custom_call.1} parent=59 // pred_region
          %352 = dma.done %s345, 576
        $region64: #{tpu_custom_call.1} parent=59 // pred_fallthru
          _
        // Predicated region
        $region65: #{tpu_custom_call.1} parent=59 // pred_check
          %p353 = pneg %p91
        $region66: #{tpu_custom_call.1} parent=59 // pred_check_branch
          %355 = sbr.rel (%p353) target = $region68
        $region67: #{tpu_custom_call.1} parent=59 // pred_region
          %356 = dma.done [#allocation7], 64
        $region68: #{tpu_custom_call.1} parent=59 // pred_fallthru
          _
        %s357 = sand.u32 %s36, 1
        %s358 = scalar_lea.sflag [#allocation4], %s357
        %s359 = sand.u32 %s36, 1
        %s360 = smul.addr %s359, 36
        %s361 = scalar_lea.vmem [#allocation3], %s360
        %p362 = pneg %p49
        %p363 = pneg %p46
        %p364 = pneg %p70
        %p365 = pneg %p67
        %p366 = pneg %p91
        %p367 = pneg %p88
        %p368 = pneg %p112
        %p369 = pneg %p109
        %p370 = pneg %p133
        %p371 = pneg %p130
        %p372 = pneg %p154
        %p373 = pneg %p151
        %p374 = pneg %p175
        %p375 = pneg %p172
        %p376 = pneg %p196
        %p377 = pneg %p193
        %p378 = pneg %p217
        %p379 = pneg %p214
        %p380 = pneg %p238
        %p381 = pneg %p235
        %p382 = pneg %p264
        %p383 = pneg %p261
        %s384 = sand.u32 %s251, 1
        %s385 = scalar_lea.sflag [#allocation5], %s384
        %s386 = sand.u32 %s251, 1
        %s387 = smul.addr %s386, 64
        %s388 = scalar_lea.vmem [#allocation8], %s387
        %v389 = vld [vmem:[%s348 + $0x4] sm:$0xff]
        %v390 = vld [vmem:[%s348 + $0xc] sm:$0xff]
        %v391 = vld [vmem:[%s348 + $0x14] sm:$0xf]
        %v395 = vcombine.high %v389, %v389
        %v396 = vcombine.high %v390, %v390
        %397 = vrot.lane.b32.xlu0 %v389, 25
        %v398 = vpop.permute.xlu0 %397
        %399 = vrot.lane.b32.xlu0 %v395, 25
        %v400 = vpop.permute.xlu0 %399
        %401 = vrot.lane.b32.xlu0 %v390, 25
        %v402 = vpop.permute.xlu0 %401
        %403 = vrot.lane.b32.xlu0 %v396, 25
        %v404 = vpop.permute.xlu0 %403
        %405 = vrot.lane.b32.xlu0 %v391, 25
        %v406 = vpop.permute.xlu0 %405
        %vm407 = vcmask 203776
        %v408 = vsel %vm407, %v398, %v400
        %v409 = vsel %vm407, %v400, %v402
        %v410 = vsel %vm407, %v402, %v404
        %v411 = vsel %vm407, %v404, %v406
        %416 = vst [vmem:[#allocation2] sm:$0xf] %v408
        %417 = vst [vmem:[#allocation2 + $0x8] sm:$0xf] %v409
        %418 = vst [vmem:[#allocation2 + $0x10] sm:$0xf] %v410
        %419 = vst [vmem:[#allocation2 + $0x18] sm:$0xf] %v411
        %v420 = vld [vmem:[%s348 + $0x4] sm:$0xff]
        %v421 = vld [vmem:[%s348 + $0xc] sm:$0xff]
        %v422 = vld [vmem:[%s348 + $0x14] sm:$0xf]
        %v426 = vcombine.low %v420, %v420
        %v427 = vcombine.low %v421, %v421
        %v428 = vcombine.low %v422, %v422
        %429 = vrot.lane.b32.xlu0 %v426, 24
        %v430 = vpop.permute.xlu0 %429
        %431 = vrot.lane.b32.xlu0 %v420, 24
        %v432 = vpop.permute.xlu0 %431
        %433 = vrot.lane.b32.xlu0 %v427, 24
        %v434 = vpop.permute.xlu0 %433
        %435 = vrot.lane.b32.xlu0 %v421, 24
        %v436 = vpop.permute.xlu0 %435
        %437 = vrot.lane.b32.xlu0 %v428, 24
        %v438 = vpop.permute.xlu0 %437
        %vm439 = vcmask 195584
        %v440 = vsel %vm439, %v430, %v432
        %v441 = vsel %vm439, %v432, %v434
        %v442 = vsel %vm439, %v434, %v436
        %v443 = vsel %vm439, %v436, %v438
        %448 = vst [vmem:[#allocation2] sm:$0xf0] %v440
        %449 = vst [vmem:[#allocation2 + $0x8] sm:$0xf0] %v441
        %450 = vst [vmem:[#allocation2 + $0x10] sm:$0xf0] %v442
        %451 = vst [vmem:[#allocation2 + $0x18] sm:$0xf0] %v443
        %v452 = vld [vmem:[%s348 + $0x4] sm:$0xff]
        %v453 = vld [vmem:[%s348 + $0xc] sm:$0xff]
        %v454 = vld [vmem:[%s348 + $0x14] sm:$0xf]
        %v458 = vcombine.high %v452, %v452
        %v459 = vcombine.high %v453, %v453
        %460 = vrot.lane.b32.xlu0 %v452, 23
        %v461 = vpop.permute.xlu0 %460
        %462 = vrot.lane.b32.xlu0 %v458, 23
        %v463 = vpop.permute.xlu0 %462
        %464 = vrot.lane.b32.xlu0 %v453, 23
        %v465 = vpop.permute.xlu0 %464
        %466 = vrot.lane.b32.xlu0 %v459, 23
        %v467 = vpop.permute.xlu0 %466
        %468 = vrot.lane.b32.xlu0 %v454, 23
        %v469 = vpop.permute.xlu0 %468
        %vm470 = vcmask 187392
        %v471 = vsel %vm470, %v461, %v463
        %v472 = vsel %vm470, %v463, %v465
        %v473 = vsel %vm470, %v465, %v467
        %v474 = vsel %vm470, %v467, %v469
        %479 = vst [vmem:[#allocation2 + $0x20] sm:$0xf] %v471
        %480 = vst [vmem:[#allocation2 + $0x28] sm:$0xf] %v472
        %481 = vst [vmem:[#allocation2 + $0x30] sm:$0xf] %v473
        %482 = vst [vmem:[#allocation2 + $0x38] sm:$0xf] %v474
        %v483 = vld [vmem:[%s348 + $0x8] sm:$0xff]
        %v484 = vld [vmem:[%s348 + $0x10] sm:$0xff]
        %v485 = vld [vmem:[%s348 + $0x18] sm:$0xf]
        %v489 = vcombine.low %v483, %v483
        %v490 = vcombine.low %v484, %v484
        %v491 = vcombine.low %v485, %v485
        %492 = vrot.lane.b32.xlu0 %v489, 121
        %v493 = vpop.permute.xlu0 %492
        %494 = vrot.lane.b32.xlu0 %v483, 121
        %v495 = vpop.permute.xlu0 %494
        %496 = vrot.lane.b32.xlu0 %v490, 121
        %v497 = vpop.permute.xlu0 %496
        %498 = vrot.lane.b32.xlu0 %v484, 121
        %v499 = vpop.permute.xlu0 %498
        %500 = vrot.lane.b32.xlu0 %v491, 121
        %v501 = vpop.permute.xlu0 %500
        %vm502 = vcmask 990208
        %v503 = vsel %vm502, %v493, %v495
        %v504 = vsel %vm502, %v495, %v497
        %v505 = vsel %vm502, %v497, %v499
        %v506 = vsel %vm502, %v499, %v501
        %511 = vst [vmem:[#allocation2 + $0x20] sm:$0xf0] %v503
        %512 = vst [vmem:[#allocation2 + $0x28] sm:$0xf0] %v504
        %513 = vst [vmem:[#allocation2 + $0x30] sm:$0xf0] %v505
        %514 = vst [vmem:[#allocation2 + $0x38] sm:$0xf0] %v506
        %v515 = vld [vmem:[%s348 + $0x8] sm:$0xff]
        %v516 = vld [vmem:[%s348 + $0x10] sm:$0xff]
        %v517 = vld [vmem:[%s348 + $0x18] sm:$0xf]
        %v521 = vcombine.high %v515, %v515
        %v522 = vcombine.high %v516, %v516
        %523 = vrot.lane.b32.xlu0 %v515, 120
        %v524 = vpop.permute.xlu0 %523
        %525 = vrot.lane.b32.xlu0 %v521, 120
        %v526 = vpop.permute.xlu0 %525
        %527 = vrot.lane.b32.xlu0 %v516, 120
        %v528 = vpop.permute.xlu0 %527
        %529 = vrot.lane.b32.xlu0 %v522, 120
        %v530 = vpop.permute.xlu0 %529
        %531 = vrot.lane.b32.xlu0 %v517, 120
        %v532 = vpop.permute.xlu0 %531
        %vm533 = vcmask 982016
        %v534 = vsel %vm533, %v524, %v526
        %v535 = vsel %vm533, %v526, %v528
        %v536 = vsel %vm533, %v528, %v530
        %v537 = vsel %vm533, %v530, %v532
        %542 = vst [vmem:[#allocation2 + $0x40] sm:$0xf] %v534
        %543 = vst [vmem:[#allocation2 + $0x48] sm:$0xf] %v535
        %544 = vst [vmem:[#allocation2 + $0x50] sm:$0xf] %v536
        %545 = vst [vmem:[#allocation2 + $0x58] sm:$0xf] %v537
        %v546 = vld [vmem:[%s348 + $0x8] sm:$0xff]
        %v547 = vld [vmem:[%s348 + $0x10] sm:$0xff]
        %v548 = vld [vmem:[%s348 + $0x18] sm:$0xf]
        %v552 = vcombine.low %v546, %v546
        %v553 = vcombine.low %v547, %v547
        %v554 = vcombine.low %v548, %v548
        %555 = vrot.lane.b32.xlu0 %v552, 119
        %v556 = vpop.permute.xlu0 %555
        %557 = vrot.lane.b32.xlu0 %v546, 119
        %v558 = vpop.permute.xlu0 %557
        %559 = vrot.lane.b32.xlu0 %v553, 119
        %v560 = vpop.permute.xlu0 %559
        %561 = vrot.lane.b32.xlu0 %v547, 119
        %v562 = vpop.permute.xlu0 %561
        %563 = vrot.lane.b32.xlu0 %v554, 119
        %v564 = vpop.permute.xlu0 %563
        %vm565 = vcmask 973824
        %v566 = vsel %vm565, %v556, %v558
        %v567 = vsel %vm565, %v558, %v560
        %v568 = vsel %vm565, %v560, %v562
        %v569 = vsel %vm565, %v562, %v564
        %574 = vst [vmem:[#allocation2 + $0x40] sm:$0xf0] %v566
        %575 = vst [vmem:[#allocation2 + $0x48] sm:$0xf0] %v567
        %576 = vst [vmem:[#allocation2 + $0x50] sm:$0xf0] %v568
        %577 = vst [vmem:[#allocation2 + $0x58] sm:$0xf0] %v569
        %v578 = vld [vmem:[%s348 + $0x8] sm:$0xff]
        %v579 = vld [vmem:[%s348 + $0x10] sm:$0xff]
        %v580 = vld [vmem:[%s348 + $0x18] sm:$0xf]
        %v584 = vcombine.high %v578, %v578
        %v585 = vcombine.high %v579, %v579
        %586 = vrot.lane.b32.xlu0 %v578, 89
        %v587 = vpop.permute.xlu0 %586
        %588 = vrot.lane.b32.xlu0 %v584, 89
        %v589 = vpop.permute.xlu0 %588
        %590 = vrot.lane.b32.xlu0 %v579, 89
        %v591 = vpop.permute.xlu0 %590
        %592 = vrot.lane.b32.xlu0 %v585, 89
        %v593 = vpop.permute.xlu0 %592
        %594 = vrot.lane.b32.xlu0 %v580, 89
        %v595 = vpop.permute.xlu0 %594
        %vm596 = vcmask 728064
        %v597 = vsel %vm596, %v587, %v589
        %v598 = vsel %vm596, %v589, %v591
        %v599 = vsel %vm596, %v591, %v593
        %v600 = vsel %vm596, %v593, %v595
        %605 = vst [vmem:[#allocation2 + $0x60] sm:$0xf] %v597
        %606 = vst [vmem:[#allocation2 + $0x68] sm:$0xf] %v598
        %607 = vst [vmem:[#allocation2 + $0x70] sm:$0xf] %v599
        %608 = vst [vmem:[#allocation2 + $0x78] sm:$0xf] %v600
        %v609 = vld [vmem:[%s348 + $0x8] sm:$0xff]
        %v610 = vld [vmem:[%s348 + $0x10] sm:$0xff]
        %v611 = vld [vmem:[%s348 + $0x18] sm:$0xf]
        %v615 = vcombine.low %v609, %v609
        %v616 = vcombine.low %v610, %v610
        %v617 = vcombine.low %v611, %v611
        %618 = vrot.lane.b32.xlu0 %v615, 88
        %v619 = vpop.permute.xlu0 %618
        %620 = vrot.lane.b32.xlu0 %v609, 88
        %v621 = vpop.permute.xlu0 %620
        %622 = vrot.lane.b32.xlu0 %v616, 88
        %v623 = vpop.permute.xlu0 %622
        %624 = vrot.lane.b32.xlu0 %v610, 88
        %v625 = vpop.permute.xlu0 %624
        %626 = vrot.lane.b32.xlu0 %v617, 88
        %v627 = vpop.permute.xlu0 %626
        %vm628 = vcmask 719872
        %v629 = vsel %vm628, %v619, %v621
        %v630 = vsel %vm628, %v621, %v623
        %v631 = vsel %vm628, %v623, %v625
        %v632 = vsel %vm628, %v625, %v627
        %637 = vst [vmem:[#allocation2 + $0x60] sm:$0xf0] %v629
        %638 = vst [vmem:[#allocation2 + $0x68] sm:$0xf0] %v630
        %639 = vst [vmem:[#allocation2 + $0x70] sm:$0xf0] %v631
        %640 = vst [vmem:[#allocation2 + $0x78] sm:$0xf0] %v632
        %v641 = vld [vmem:[%s348 + $0x8] sm:$0xff]
        %v642 = vld [vmem:[%s348 + $0x10] sm:$0xff]
        %v643 = vld [vmem:[%s348 + $0x18] sm:$0xf]
        %v647 = vcombine.high %v641, %v641
        %v648 = vcombine.high %v642, %v642
        %649 = vrot.lane.b32.xlu0 %v641, 87
        %v650 = vpop.permute.xlu0 %649
        %651 = vrot.lane.b32.xlu0 %v647, 87
        %v652 = vpop.permute.xlu0 %651
        %653 = vrot.lane.b32.xlu0 %v642, 87
        %v654 = vpop.permute.xlu0 %653
        %655 = vrot.lane.b32.xlu0 %v648, 87
        %v656 = vpop.permute.xlu0 %655
        %657 = vrot.lane.b32.xlu0 %v643, 87
        %v658 = vpop.permute.xlu0 %657
        %vm659 = vcmask 711680
        %v660 = vsel %vm659, %v650, %v652
        %v661 = vsel %vm659, %v652, %v654
        %v662 = vsel %vm659, %v654, %v656
        %v663 = vsel %vm659, %v656, %v658
        %668 = vst [vmem:[#allocation2 + $0x80] sm:$0xf] %v660
        %669 = vst [vmem:[#allocation2 + $0x88] sm:$0xf] %v661
        %670 = vst [vmem:[#allocation2 + $0x90] sm:$0xf] %v662
        %671 = vst [vmem:[#allocation2 + $0x98] sm:$0xf] %v663
        %v672 = vld [vmem:[%s348 + $0x4] sm:$0xff]
        %v673 = vld [vmem:[%s348 + $0xc] sm:$0xff]
        %v674 = vld [vmem:[%s348 + $0x14] sm:$0xf]
        %v678 = vcombine.low %v672, %v672
        %v679 = vcombine.low %v673, %v673
        %v680 = vcombine.low %v674, %v674
        %681 = vrot.lane.b32.xlu0 %v678, 58
        %v682 = vpop.permute.xlu0 %681
        %683 = vrot.lane.b32.xlu0 %v672, 58
        %v684 = vpop.permute.xlu0 %683
        %685 = vrot.lane.b32.xlu0 %v679, 58
        %v686 = vpop.permute.xlu0 %685
        %687 = vrot.lane.b32.xlu0 %v673, 58
        %v688 = vpop.permute.xlu0 %687
        %689 = vrot.lane.b32.xlu0 %v680, 58
        %v690 = vpop.permute.xlu0 %689
        %vm691 = vcmask 474112
        %v692 = vsel %vm691, %v682, %v684
        %v693 = vsel %vm691, %v684, %v686
        %v694 = vsel %vm691, %v686, %v688
        %v695 = vsel %vm691, %v688, %v690
        %700 = vst [vmem:[#allocation2 + $0x80] sm:$0xf0] %v692
        %701 = vst [vmem:[#allocation2 + $0x88] sm:$0xf0] %v693
        %702 = vst [vmem:[#allocation2 + $0x90] sm:$0xf0] %v694
        %703 = vst [vmem:[#allocation2 + $0x98] sm:$0xf0] %v695
        %v704 = vld [vmem:[%s348 + $0x4] sm:$0xff]
        %v705 = vld [vmem:[%s348 + $0xc] sm:$0xff]
        %v706 = vld [vmem:[%s348 + $0x14] sm:$0xf]
        %v710 = vcombine.high %v704, %v704
        %v711 = vcombine.high %v705, %v705
        %712 = vrot.lane.b32.xlu0 %v704, 56
        %v713 = vpop.permute.xlu0 %712
        %714 = vrot.lane.b32.xlu0 %v710, 56
        %v715 = vpop.permute.xlu0 %714
        %716 = vrot.lane.b32.xlu0 %v705, 56
        %v717 = vpop.permute.xlu0 %716
        %718 = vrot.lane.b32.xlu0 %v711, 56
        %v719 = vpop.permute.xlu0 %718
        %720 = vrot.lane.b32.xlu0 %v706, 56
        %v721 = vpop.permute.xlu0 %720
        %vm722 = vcmask 457728
        %v723 = vsel %vm722, %v713, %v715
        %v724 = vsel %vm722, %v715, %v717
        %v725 = vsel %vm722, %v717, %v719
        %v726 = vsel %vm722, %v719, %v721
        %731 = vst [vmem:[#allocation2 + $0xa0] sm:$0xf] %v723
        %732 = vst [vmem:[#allocation2 + $0xa8] sm:$0xf] %v724
        %733 = vst [vmem:[#allocation2 + $0xb0] sm:$0xf] %v725
        %734 = vst [vmem:[#allocation2 + $0xb8] sm:$0xf] %v726
        %v735 = vld [vmem:[%s348 + $0x4] sm:$0xff]
        %v736 = vld [vmem:[%s348 + $0xc] sm:$0xff]
        %v737 = vld [vmem:[%s348 + $0x14] sm:$0xf]
        %v741 = vcombine.low %v735, %v735
        %v742 = vcombine.low %v736, %v736
        %v743 = vcombine.low %v737, %v737
        %744 = vrot.lane.b32.xlu0 %v741, 54
        %v745 = vpop.permute.xlu0 %744
        %746 = vrot.lane.b32.xlu0 %v735, 54
        %v747 = vpop.permute.xlu0 %746
        %748 = vrot.lane.b32.xlu0 %v742, 54
        %v749 = vpop.permute.xlu0 %748
        %750 = vrot.lane.b32.xlu0 %v736, 54
        %v751 = vpop.permute.xlu0 %750
        %752 = vrot.lane.b32.xlu0 %v743, 54
        %v753 = vpop.permute.xlu0 %752
        %vm754 = vcmask 441344
        %v755 = vsel %vm754, %v745, %v747
        %v756 = vsel %vm754, %v747, %v749
        %v757 = vsel %vm754, %v749, %v751
        %v758 = vsel %vm754, %v751, %v753
        %763 = vst [vmem:[#allocation2 + $0xa0] sm:$0xf0] %v755
        %764 = vst [vmem:[#allocation2 + $0xa8] sm:$0xf0] %v756
        %765 = vst [vmem:[#allocation2 + $0xb0] sm:$0xf0] %v757
        %766 = vst [vmem:[#allocation2 + $0xb8] sm:$0xf0] %v758
        %v767 = vld [vmem:[%s348 + $0x8] sm:$0xff]
        %v768 = vld [vmem:[%s348 + $0x10] sm:$0xff]
        %v769 = vld [vmem:[%s348 + $0x18] sm:$0xf]
        %v773 = vcombine.high %v767, %v767
        %v774 = vcombine.high %v768, %v768
        %775 = vrot.lane.b32.xlu0 %v767, 122
        %v776 = vpop.permute.xlu0 %775
        %777 = vrot.lane.b32.xlu0 %v773, 122
        %v778 = vpop.permute.xlu0 %777
        %779 = vrot.lane.b32.xlu0 %v768, 122
        %v780 = vpop.permute.xlu0 %779
        %781 = vrot.lane.b32.xlu0 %v774, 122
        %v782 = vpop.permute.xlu0 %781
        %783 = vrot.lane.b32.xlu0 %v769, 122
        %v784 = vpop.permute.xlu0 %783
        %vm785 = vcmask 998400
        %v786 = vsel %vm785, %v776, %v778
        %v787 = vsel %vm785, %v778, %v780
        %v788 = vsel %vm785, %v780, %v782
        %v789 = vsel %vm785, %v782, %v784
        %794 = vst [vmem:[#allocation2 + $0xc0] sm:$0xf] %v786
        %795 = vst [vmem:[#allocation2 + $0xc8] sm:$0xf] %v787
        %796 = vst [vmem:[#allocation2 + $0xd0] sm:$0xf] %v788
        %797 = vst [vmem:[#allocation2 + $0xd8] sm:$0xf] %v789
        %v798 = vld [vmem:[%s348 + $0x8] sm:$0xff]
        %v799 = vld [vmem:[%s348 + $0x10] sm:$0xff]
        %v800 = vld [vmem:[%s348 + $0x18] sm:$0xf]
        %v804 = vcombine.low %v798, %v798
        %v805 = vcombine.low %v799, %v799
        %v806 = vcombine.low %v800, %v800
        %807 = vrot.lane.b32.xlu0 %v804, 120
        %v808 = vpop.permute.xlu0 %807
        %809 = vrot.lane.b32.xlu0 %v798, 120
        %v810 = vpop.permute.xlu0 %809
        %811 = vrot.lane.b32.xlu0 %v805, 120
        %v812 = vpop.permute.xlu0 %811
        %813 = vrot.lane.b32.xlu0 %v799, 120
        %v814 = vpop.permute.xlu0 %813
        %815 = vrot.lane.b32.xlu0 %v806, 120
        %v816 = vpop.permute.xlu0 %815
        %v817 = vsel %vm533, %v808, %v810
        %v818 = vsel %vm533, %v810, %v812
        %v819 = vsel %vm533, %v812, %v814
        %v820 = vsel %vm533, %v814, %v816
        %825 = vst [vmem:[#allocation2 + $0xc0] sm:$0xf0] %v817
        %826 = vst [vmem:[#allocation2 + $0xc8] sm:$0xf0] %v818
        %827 = vst [vmem:[#allocation2 + $0xd0] sm:$0xf0] %v819
        %828 = vst [vmem:[#allocation2 + $0xd8] sm:$0xf0] %v820
        %v829 = vld [vmem:[%s348 + $0x8] sm:$0xff]
        %v830 = vld [vmem:[%s348 + $0x10] sm:$0xff]
        %v831 = vld [vmem:[%s348 + $0x18] sm:$0xf]
        %v835 = vcombine.high %v829, %v829
        %v836 = vcombine.high %v830, %v830
        %837 = vrot.lane.b32.xlu0 %v829, 118
        %v838 = vpop.permute.xlu0 %837
        %839 = vrot.lane.b32.xlu0 %v835, 118
        %v840 = vpop.permute.xlu0 %839
        %841 = vrot.lane.b32.xlu0 %v830, 118
        %v842 = vpop.permute.xlu0 %841
        %843 = vrot.lane.b32.xlu0 %v836, 118
        %v844 = vpop.permute.xlu0 %843
        %845 = vrot.lane.b32.xlu0 %v831, 118
        %v846 = vpop.permute.xlu0 %845
        %vm847 = vcmask 965632
        %v848 = vsel %vm847, %v838, %v840
        %v849 = vsel %vm847, %v840, %v842
        %v850 = vsel %vm847, %v842, %v844
        %v851 = vsel %vm847, %v844, %v846
        %856 = vst [vmem:[#allocation2 + $0xe0] sm:$0xf] %v848
        %857 = vst [vmem:[#allocation2 + $0xe8] sm:$0xf] %v849
        %858 = vst [vmem:[#allocation2 + $0xf0] sm:$0xf] %v850
        %859 = vst [vmem:[#allocation2 + $0xf8] sm:$0xf] %v851
        %v860 = vld [vmem:[%s348 + $0x8] sm:$0xff]
        %v861 = vld [vmem:[%s348 + $0x10] sm:$0xff]
        %v862 = vld [vmem:[%s348 + $0x18] sm:$0xf]
        %v866 = vcombine.low %v860, %v860
        %v867 = vcombine.low %v861, %v861
        %v868 = vcombine.low %v862, %v862
        %869 = vrot.lane.b32.xlu0 %v866, 58
        %v870 = vpop.permute.xlu0 %869
        %871 = vrot.lane.b32.xlu0 %v860, 58
        %v872 = vpop.permute.xlu0 %871
        %873 = vrot.lane.b32.xlu0 %v867, 58
        %v874 = vpop.permute.xlu0 %873
        %875 = vrot.lane.b32.xlu0 %v861, 58
        %v876 = vpop.permute.xlu0 %875
        %877 = vrot.lane.b32.xlu0 %v868, 58
        %v878 = vpop.permute.xlu0 %877
        %v879 = vsel %vm691, %v870, %v872
        %v880 = vsel %vm691, %v872, %v874
        %v881 = vsel %vm691, %v874, %v876
        %v882 = vsel %vm691, %v876, %v878
        %887 = vst [vmem:[#allocation2 + $0xe0] sm:$0xf0] %v879
        %888 = vst [vmem:[#allocation2 + $0xe8] sm:$0xf0] %v880
        %889 = vst [vmem:[#allocation2 + $0xf0] sm:$0xf0] %v881
        %890 = vst [vmem:[#allocation2 + $0xf8] sm:$0xf0] %v882
        %v891 = vld [vmem:[%s348 + $0x8] sm:$0xff]
        %v892 = vld [vmem:[%s348 + $0x10] sm:$0xff]
        %v893 = vld [vmem:[%s348 + $0x18] sm:$0xf]
        %v897 = vcombine.high %v891, %v891
        %v898 = vcombine.high %v892, %v892
        %899 = vrot.lane.b32.xlu0 %v891, 56
        %v900 = vpop.permute.xlu0 %899
        %901 = vrot.lane.b32.xlu0 %v897, 56
        %v902 = vpop.permute.xlu0 %901
        %903 = vrot.lane.b32.xlu0 %v892, 56
        %v904 = vpop.permute.xlu0 %903
        %905 = vrot.lane.b32.xlu0 %v898, 56
        %v906 = vpop.permute.xlu0 %905
        %907 = vrot.lane.b32.xlu0 %v893, 56
        %v908 = vpop.permute.xlu0 %907
        %v909 = vsel %vm722, %v900, %v902
        %v910 = vsel %vm722, %v902, %v904
        %v911 = vsel %vm722, %v904, %v906
        %v912 = vsel %vm722, %v906, %v908
        %917 = vst [vmem:[#allocation2 + $0x100] sm:$0xf] %v909
        %918 = vst [vmem:[#allocation2 + $0x108] sm:$0xf] %v910
        %919 = vst [vmem:[#allocation2 + $0x110] sm:$0xf] %v911
        %920 = vst [vmem:[#allocation2 + $0x118] sm:$0xf] %v912
        %v921 = vld [vmem:[%s348 + $0x8] sm:$0xff]
        %v922 = vld [vmem:[%s348 + $0x10] sm:$0xff]
        %v923 = vld [vmem:[%s348 + $0x18] sm:$0xf]
        %v927 = vcombine.low %v921, %v921
        %v928 = vcombine.low %v922, %v922
        %v929 = vcombine.low %v923, %v923
        %930 = vrot.lane.b32.xlu0 %v927, 54
        %v931 = vpop.permute.xlu0 %930
        %932 = vrot.lane.b32.xlu0 %v921, 54
        %v933 = vpop.permute.xlu0 %932
        %934 = vrot.lane.b32.xlu0 %v928, 54
        %v935 = vpop.permute.xlu0 %934
        %936 = vrot.lane.b32.xlu0 %v922, 54
        %v937 = vpop.permute.xlu0 %936
        %938 = vrot.lane.b32.xlu0 %v929, 54
        %v939 = vpop.permute.xlu0 %938
        %v940 = vsel %vm754, %v931, %v933
        %v941 = vsel %vm754, %v933, %v935
        %v942 = vsel %vm754, %v935, %v937
        %v943 = vsel %vm754, %v937, %v939
        %948 = vst [vmem:[#allocation2 + $0x100] sm:$0xf0] %v940
        %949 = vst [vmem:[#allocation2 + $0x108] sm:$0xf0] %v941
        %950 = vst [vmem:[#allocation2 + $0x110] sm:$0xf0] %v942
        %951 = vst [vmem:[#allocation2 + $0x118] sm:$0xf0] %v943
        %v952 = vld [vmem:[%s348 + $0x4] sm:$0xff]
        %v953 = vld [vmem:[%s348 + $0xc] sm:$0xff]
        %v954 = vld [vmem:[%s348 + $0x14] sm:$0xf]
        %v958 = vcombine.high %v952, %v952
        %v959 = vcombine.high %v953, %v953
        %960 = vrot.lane.b32.xlu0 %v952, 124
        %v961 = vpop.permute.xlu0 %960
        %962 = vrot.lane.b32.xlu0 %v958, 124
        %v963 = vpop.permute.xlu0 %962
        %964 = vrot.lane.b32.xlu0 %v953, 124
        %v965 = vpop.permute.xlu0 %964
        %966 = vrot.lane.b32.xlu0 %v959, 124
        %v967 = vpop.permute.xlu0 %966
        %968 = vrot.lane.b32.xlu0 %v954, 124
        %v969 = vpop.permute.xlu0 %968
        %vm970 = vcmask 1014784
        %v971 = vsel %vm970, %v961, %v963
        %v972 = vsel %vm970, %v963, %v965
        %v973 = vsel %vm970, %v965, %v967
        %v974 = vsel %vm970, %v967, %v969
        %979 = vst [vmem:[#allocation2 + $0x120] sm:$0xf] %v971
        %980 = vst [vmem:[#allocation2 + $0x128] sm:$0xf] %v972
        %981 = vst [vmem:[#allocation2 + $0x130] sm:$0xf] %v973
        %982 = vst [vmem:[#allocation2 + $0x138] sm:$0xf] %v974
        %v983 = vld [vmem:[%s348 + $0x4] sm:$0xff]
        %v984 = vld [vmem:[%s348 + $0xc] sm:$0xff]
        %v985 = vld [vmem:[%s348 + $0x14] sm:$0xf]
        %v989 = vcombine.low %v983, %v983
        %v990 = vcombine.low %v984, %v984
        %v991 = vcombine.low %v985, %v985
        %992 = vrot.lane.b32.xlu0 %v989, 120
        %v993 = vpop.permute.xlu0 %992
        %994 = vrot.lane.b32.xlu0 %v983, 120
        %v995 = vpop.permute.xlu0 %994
        %996 = vrot.lane.b32.xlu0 %v990, 120
        %v997 = vpop.permute.xlu0 %996
        %998 = vrot.lane.b32.xlu0 %v984, 120
        %v999 = vpop.permute.xlu0 %998
        %1000 = vrot.lane.b32.xlu0 %v991, 120
        %v1001 = vpop.permute.xlu0 %1000
        %v1002 = vsel %vm533, %v993, %v995
        %v1003 = vsel %vm533, %v995, %v997
        %v1004 = vsel %vm533, %v997, %v999
        %v1005 = vsel %vm533, %v999, %v1001
        %1010 = vst [vmem:[#allocation2 + $0x120] sm:$0xf0] %v1002
        %1011 = vst [vmem:[#allocation2 + $0x128] sm:$0xf0] %v1003
        %1012 = vst [vmem:[#allocation2 + $0x130] sm:$0xf0] %v1004
        %1013 = vst [vmem:[#allocation2 + $0x138] sm:$0xf0] %v1005
        %v1014 = vld [vmem:[%s348 + $0x4] sm:$0xff]
        %v1015 = vld [vmem:[%s348 + $0xc] sm:$0xff]
        %v1016 = vld [vmem:[%s348 + $0x14] sm:$0xf]
        %v1020 = vcombine.high %v1014, %v1014
        %v1021 = vcombine.high %v1015, %v1015
        %1022 = vrot.lane.b32.xlu0 %v1014, 116
        %v1023 = vpop.permute.xlu0 %1022
        %1024 = vrot.lane.b32.xlu0 %v1020, 116
        %v1025 = vpop.permute.xlu0 %1024
        %1026 = vrot.lane.b32.xlu0 %v1015, 116
        %v1027 = vpop.permute.xlu0 %1026
        %1028 = vrot.lane.b32.xlu0 %v1021, 116
        %v1029 = vpop.permute.xlu0 %1028
        %1030 = vrot.lane.b32.xlu0 %v1016, 116
        %v1031 = vpop.permute.xlu0 %1030
        %vm1032 = vcmask 949248
        %v1033 = vsel %vm1032, %v1023, %v1025
        %v1034 = vsel %vm1032, %v1025, %v1027
        %v1035 = vsel %vm1032, %v1027, %v1029
        %v1036 = vsel %vm1032, %v1029, %v1031
        %1041 = vst [vmem:[#allocation2 + $0x140] sm:$0xf] %v1033
        %1042 = vst [vmem:[#allocation2 + $0x148] sm:$0xf] %v1034
        %1043 = vst [vmem:[#allocation2 + $0x150] sm:$0xf] %v1035
        %1044 = vst [vmem:[#allocation2 + $0x158] sm:$0xf] %v1036
        %v1045 = vld [vmem:[%s348 + $0x8] sm:$0xff]
        %v1046 = vld [vmem:[%s348 + $0x10] sm:$0xff]
        %v1047 = vld [vmem:[%s348 + $0x18] sm:$0xf]
        %v1051 = vcombine.low %v1045, %v1045
        %v1052 = vcombine.low %v1046, %v1046
        %v1053 = vcombine.low %v1047, %v1047
        %1054 = vrot.lane.b32.xlu0 %v1051, 124
        %v1055 = vpop.permute.xlu0 %1054
        %1056 = vrot.lane.b32.xlu0 %v1045, 124
        %v1057 = vpop.permute.xlu0 %1056
        %1058 = vrot.lane.b32.xlu0 %v1052, 124
        %v1059 = vpop.permute.xlu0 %1058
        %1060 = vrot.lane.b32.xlu0 %v1046, 124
        %v1061 = vpop.permute.xlu0 %1060
        %1062 = vrot.lane.b32.xlu0 %v1053, 124
        %v1063 = vpop.permute.xlu0 %1062
        %v1064 = vsel %vm970, %v1055, %v1057
        %v1065 = vsel %vm970, %v1057, %v1059
        %v1066 = vsel %vm970, %v1059, %v1061
        %v1067 = vsel %vm970, %v1061, %v1063
        %1072 = vst [vmem:[#allocation2 + $0x140] sm:$0xf0] %v1064
        %1073 = vst [vmem:[#allocation2 + $0x148] sm:$0xf0] %v1065
        %1074 = vst [vmem:[#allocation2 + $0x150] sm:$0xf0] %v1066
        %1075 = vst [vmem:[#allocation2 + $0x158] sm:$0xf0] %v1067
        %v1076 = vld [vmem:[%s348 + $0x8] sm:$0xff]
        %v1077 = vld [vmem:[%s348 + $0x10] sm:$0xff]
        %v1078 = vld [vmem:[%s348 + $0x18] sm:$0xf]
        %v1082 = vcombine.high %v1076, %v1076
        %v1083 = vcombine.high %v1077, %v1077
        %1084 = vrot.lane.b32.xlu0 %v1076, 120
        %v1085 = vpop.permute.xlu0 %1084
        %1086 = vrot.lane.b32.xlu0 %v1082, 120
        %v1087 = vpop.permute.xlu0 %1086
        %1088 = vrot.lane.b32.xlu0 %v1077, 120
        %v1089 = vpop.permute.xlu0 %1088
        %1090 = vrot.lane.b32.xlu0 %v1083, 120
        %v1091 = vpop.permute.xlu0 %1090
        %1092 = vrot.lane.b32.xlu0 %v1078, 120
        %v1093 = vpop.permute.xlu0 %1092
        %v1094 = vsel %vm533, %v1085, %v1087
        %v1095 = vsel %vm533, %v1087, %v1089
        %v1096 = vsel %vm533, %v1089, %v1091
        %v1097 = vsel %vm533, %v1091, %v1093
        %1102 = vst [vmem:[#allocation2 + $0x160] sm:$0xf] %v1094
        %1103 = vst [vmem:[#allocation2 + $0x168] sm:$0xf] %v1095
        %1104 = vst [vmem:[#allocation2 + $0x170] sm:$0xf] %v1096
        %1105 = vst [vmem:[#allocation2 + $0x178] sm:$0xf] %v1097
        %v1106 = vld [vmem:[%s348 + $0x8] sm:$0xff]
        %v1107 = vld [vmem:[%s348 + $0x10] sm:$0xff]
        %v1108 = vld [vmem:[%s348 + $0x18] sm:$0xf]
        %v1112 = vcombine.low %v1106, %v1106
        %v1113 = vcombine.low %v1107, %v1107
        %v1114 = vcombine.low %v1108, %v1108
        %1115 = vrot.lane.b32.xlu0 %v1112, 116
        %v1116 = vpop.permute.xlu0 %1115
        %1117 = vrot.lane.b32.xlu0 %v1106, 116
        %v1118 = vpop.permute.xlu0 %1117
        %1119 = vrot.lane.b32.xlu0 %v1113, 116
        %v1120 = vpop.permute.xlu0 %1119
        %1121 = vrot.lane.b32.xlu0 %v1107, 116
        %v1122 = vpop.permute.xlu0 %1121
        %1123 = vrot.lane.b32.xlu0 %v1114, 116
        %v1124 = vpop.permute.xlu0 %1123
        %v1125 = vsel %vm1032, %v1116, %v1118
        %v1126 = vsel %vm1032, %v1118, %v1120
        %v1127 = vsel %vm1032, %v1120, %v1122
        %v1128 = vsel %vm1032, %v1122, %v1124
        %1133 = vst [vmem:[#allocation2 + $0x160] sm:$0xf0] %v1125
        %1134 = vst [vmem:[#allocation2 + $0x168] sm:$0xf0] %v1126
        %1135 = vst [vmem:[#allocation2 + $0x170] sm:$0xf0] %v1127
        %1136 = vst [vmem:[#allocation2 + $0x178] sm:$0xf0] %v1128
        %v1137 = vld [vmem:[%s348 + $0xc] sm:$0xff]
        %v1138 = vld [vmem:[%s348 + $0x14] sm:$0xff]
        %v1139 = vld [vmem:[%s348 + $0x1c] sm:$0xf]
        %v1143 = vcombine.high %v1137, %v1137
        %v1144 = vcombine.high %v1138, %v1138
        %1145 = vrot.lane.b32.xlu0 %v1137, 124
        %v1146 = vpop.permute.xlu0 %1145
        %1147 = vrot.lane.b32.xlu0 %v1143, 124
        %v1148 = vpop.permute.xlu0 %1147
        %1149 = vrot.lane.b32.xlu0 %v1138, 124
        %v1150 = vpop.permute.xlu0 %1149
        %1151 = vrot.lane.b32.xlu0 %v1144, 124
        %v1152 = vpop.permute.xlu0 %1151
        %1153 = vrot.lane.b32.xlu0 %v1139, 124
        %v1154 = vpop.permute.xlu0 %1153
        %v1155 = vsel %vm970, %v1146, %v1148
        %v1156 = vsel %vm970, %v1148, %v1150
        %v1157 = vsel %vm970, %v1150, %v1152
        %v1158 = vsel %vm970, %v1152, %v1154
        %1163 = vst [vmem:[#allocation2 + $0x180] sm:$0xf] %v1155
        %1164 = vst [vmem:[#allocation2 + $0x188] sm:$0xf] %v1156
        %1165 = vst [vmem:[#allocation2 + $0x190] sm:$0xf] %v1157
        %1166 = vst [vmem:[#allocation2 + $0x198] sm:$0xf] %v1158
        %v1167 = vld [vmem:[%s348 + $0xc] sm:$0xff]
        %v1168 = vld [vmem:[%s348 + $0x14] sm:$0xff]
        %v1169 = vld [vmem:[%s348 + $0x1c] sm:$0xf]
        %v1173 = vcombine.low %v1167, %v1167
        %v1174 = vcombine.low %v1168, %v1168
        %v1175 = vcombine.low %v1169, %v1169
        %1176 = vrot.lane.b32.xlu0 %v1173, 120
        %v1177 = vpop.permute.xlu0 %1176
        %1178 = vrot.lane.b32.xlu0 %v1167, 120
        %v1179 = vpop.permute.xlu0 %1178
        %1180 = vrot.lane.b32.xlu0 %v1174, 120
        %v1181 = vpop.permute.xlu0 %1180
        %1182 = vrot.lane.b32.xlu0 %v1168, 120
        %v1183 = vpop.permute.xlu0 %1182
        %1184 = vrot.lane.b32.xlu0 %v1175, 120
        %v1185 = vpop.permute.xlu0 %1184
        %v1186 = vsel %vm533, %v1177, %v1179
        %v1187 = vsel %vm533, %v1179, %v1181
        %v1188 = vsel %vm533, %v1181, %v1183
        %v1189 = vsel %vm533, %v1183, %v1185
        %1194 = vst [vmem:[#allocation2 + $0x180] sm:$0xf0] %v1186
        %1195 = vst [vmem:[#allocation2 + $0x188] sm:$0xf0] %v1187
        %1196 = vst [vmem:[#allocation2 + $0x190] sm:$0xf0] %v1188
        %1197 = vst [vmem:[#allocation2 + $0x198] sm:$0xf0] %v1189
        %v1198 = vld [vmem:[%s348 + $0xc] sm:$0xff]
        %v1199 = vld [vmem:[%s348 + $0x14] sm:$0xff]
        %v1200 = vld [vmem:[%s348 + $0x1c] sm:$0xf]
        %v1204 = vcombine.high %v1198, %v1198
        %v1205 = vcombine.high %v1199, %v1199
        %1206 = vrot.lane.b32.xlu0 %v1198, 116
        %v1207 = vpop.permute.xlu0 %1206
        %1208 = vrot.lane.b32.xlu0 %v1204, 116
        %v1209 = vpop.permute.xlu0 %1208
        %1210 = vrot.lane.b32.xlu0 %v1199, 116
        %v1211 = vpop.permute.xlu0 %1210
        %1212 = vrot.lane.b32.xlu0 %v1205, 116
        %v1213 = vpop.permute.xlu0 %1212
        %1214 = vrot.lane.b32.xlu0 %v1200, 116
        %v1215 = vpop.permute.xlu0 %1214
        %v1216 = vsel %vm1032, %v1207, %v1209
        %v1217 = vsel %vm1032, %v1209, %v1211
        %v1218 = vsel %vm1032, %v1211, %v1213
        %v1219 = vsel %vm1032, %v1213, %v1215
        %1224 = vst [vmem:[#allocation2 + $0x1a0] sm:$0xf] %v1216
        %1225 = vst [vmem:[#allocation2 + $0x1a8] sm:$0xf] %v1217
        %1226 = vst [vmem:[#allocation2 + $0x1b0] sm:$0xf] %v1218
        %1227 = vst [vmem:[#allocation2 + $0x1b8] sm:$0xf] %v1219
        %v1228 = vld [vmem:[%s348] sm:$0xff]
        %v1229 = vld [vmem:[%s348 + $0x8] sm:$0xff]
        %v1232 = vcombine.low %v1228, %v1228
        %v1233 = vcombine.low %v1229, %v1229
        %1236 = vst [vmem:[#allocation2 + $0x1a0] sm:$0xf0] %v1232
        %1237 = vst [vmem:[#allocation2 + $0x1a8] sm:$0xf0] %v1228
        %1238 = vst [vmem:[#allocation2 + $0x1b0] sm:$0xf0] %v1233
        %1239 = vst [vmem:[#allocation2 + $0x1b8] sm:$0xf0] %v1229
        %v1240 = vld [vmem:[%s348] sm:$0xff]
        %v1241 = vld [vmem:[%s348 + $0x8] sm:$0xff]
        %v1242 = vld [vmem:[%s348 + $0x10] sm:$0xf]
        %v1246 = vcombine.high %v1240, %v1240
        %v1247 = vcombine.high %v1241, %v1241
        %1248 = vrot.lane.b32.xlu0 %v1240, 120
        %v1249 = vpop.permute.xlu0 %1248
        %1250 = vrot.lane.b32.xlu0 %v1246, 120
        %v1251 = vpop.permute.xlu0 %1250
        %1252 = vrot.lane.b32.xlu0 %v1241, 120
        %v1253 = vpop.permute.xlu0 %1252
        %1254 = vrot.lane.b32.xlu0 %v1247, 120
        %v1255 = vpop.permute.xlu0 %1254
        %1256 = vrot.lane.b32.xlu0 %v1242, 120
        %v1257 = vpop.permute.xlu0 %1256
        %v1258 = vsel %vm533, %v1249, %v1251
        %v1259 = vsel %vm533, %v1251, %v1253
        %v1260 = vsel %vm533, %v1253, %v1255
        %v1261 = vsel %vm533, %v1255, %v1257
        %1266 = vst [vmem:[#allocation2 + $0x1c0] sm:$0xf] %v1258
        %1267 = vst [vmem:[#allocation2 + $0x1c8] sm:$0xf] %v1259
        %1268 = vst [vmem:[#allocation2 + $0x1d0] sm:$0xf] %v1260
        %1269 = vst [vmem:[#allocation2 + $0x1d8] sm:$0xf] %v1261
        %v1270 = vld [vmem:[%s348] sm:$0xff]
        %v1271 = vld [vmem:[%s348 + $0x8] sm:$0xff]
        %v1272 = vld [vmem:[%s348 + $0x10] sm:$0xf]
        %v1276 = vcombine.low %v1270, %v1270
        %v1277 = vcombine.low %v1271, %v1271
        %v1278 = vcombine.low %v1272, %v1272
        %1279 = vrot.lane.b32.xlu0 %v1276, 112
        %v1280 = vpop.permute.xlu0 %1279
        %1281 = vrot.lane.b32.xlu0 %v1270, 112
        %v1282 = vpop.permute.xlu0 %1281
        %1283 = vrot.lane.b32.xlu0 %v1277, 112
        %v1284 = vpop.permute.xlu0 %1283
        %1285 = vrot.lane.b32.xlu0 %v1271, 112
        %v1286 = vpop.permute.xlu0 %1285
        %1287 = vrot.lane.b32.xlu0 %v1278, 112
        %v1288 = vpop.permute.xlu0 %1287
        %vm1289 = vcmask 916480
        %v1290 = vsel %vm1289, %v1280, %v1282
        %v1291 = vsel %vm1289, %v1282, %v1284
        %v1292 = vsel %vm1289, %v1284, %v1286
        %v1293 = vsel %vm1289, %v1286, %v1288
        %1298 = vst [vmem:[#allocation2 + $0x1c0] sm:$0xf0] %v1290
        %1299 = vst [vmem:[#allocation2 + $0x1c8] sm:$0xf0] %v1291
        %1300 = vst [vmem:[#allocation2 + $0x1d0] sm:$0xf0] %v1292
        %1301 = vst [vmem:[#allocation2 + $0x1d8] sm:$0xf0] %v1293
        %v1302 = vld [vmem:[%s348 + $0x8] sm:$0xff]
        %v1303 = vld [vmem:[%s348 + $0x10] sm:$0xff]
        %v1306 = vcombine.high %v1302, %v1302
        %v1307 = vcombine.high %v1303, %v1303
        %1310 = vst [vmem:[#allocation2 + $0x1e0] sm:$0xf] %v1302
        %1311 = vst [vmem:[#allocation2 + $0x1e8] sm:$0xf] %v1306
        %1312 = vst [vmem:[#allocation2 + $0x1f0] sm:$0xf] %v1303
        %1313 = vst [vmem:[#allocation2 + $0x1f8] sm:$0xf] %v1307
        %v1314 = vld [vmem:[%s348 + $0x8] sm:$0xff]
        %v1315 = vld [vmem:[%s348 + $0x10] sm:$0xff]
        %v1316 = vld [vmem:[%s348 + $0x18] sm:$0xf]
        %v1320 = vcombine.low %v1314, %v1314
        %v1321 = vcombine.low %v1315, %v1315
        %v1322 = vcombine.low %v1316, %v1316
        %1323 = vrot.lane.b32.xlu0 %v1320, 120
        %v1324 = vpop.permute.xlu0 %1323
        %1325 = vrot.lane.b32.xlu0 %v1314, 120
        %v1326 = vpop.permute.xlu0 %1325
        %1327 = vrot.lane.b32.xlu0 %v1321, 120
        %v1328 = vpop.permute.xlu0 %1327
        %1329 = vrot.lane.b32.xlu0 %v1315, 120
        %v1330 = vpop.permute.xlu0 %1329
        %1331 = vrot.lane.b32.xlu0 %v1322, 120
        %v1332 = vpop.permute.xlu0 %1331
        %v1333 = vsel %vm533, %v1324, %v1326
        %v1334 = vsel %vm533, %v1326, %v1328
        %v1335 = vsel %vm533, %v1328, %v1330
        %v1336 = vsel %vm533, %v1330, %v1332
        %1341 = vst [vmem:[#allocation2 + $0x1e0] sm:$0xf0] %v1333
        %1342 = vst [vmem:[#allocation2 + $0x1e8] sm:$0xf0] %v1334
        %1343 = vst [vmem:[#allocation2 + $0x1f0] sm:$0xf0] %v1335
        %1344 = vst [vmem:[#allocation2 + $0x1f8] sm:$0xf0] %v1336
        %v1345 = vld [vmem:[%s348 + $0x8] sm:$0xff]
        %v1346 = vld [vmem:[%s348 + $0x10] sm:$0xff]
        %v1347 = vld [vmem:[%s348 + $0x18] sm:$0xf]
        %v1351 = vcombine.high %v1345, %v1345
        %v1352 = vcombine.high %v1346, %v1346
        %1353 = vrot.lane.b32.xlu0 %v1345, 112
        %v1354 = vpop.permute.xlu0 %1353
        %1355 = vrot.lane.b32.xlu0 %v1351, 112
        %v1356 = vpop.permute.xlu0 %1355
        %1357 = vrot.lane.b32.xlu0 %v1346, 112
        %v1358 = vpop.permute.xlu0 %1357
        %1359 = vrot.lane.b32.xlu0 %v1352, 112
        %v1360 = vpop.permute.xlu0 %1359
        %1361 = vrot.lane.b32.xlu0 %v1347, 112
        %v1362 = vpop.permute.xlu0 %1361
        %v1363 = vsel %vm1289, %v1354, %v1356
        %v1364 = vsel %vm1289, %v1356, %v1358
        %v1365 = vsel %vm1289, %v1358, %v1360
        %v1366 = vsel %vm1289, %v1360, %v1362
        %1371 = vst [vmem:[#allocation2 + $0x200] sm:$0xf] %v1363
        %1372 = vst [vmem:[#allocation2 + $0x208] sm:$0xf] %v1364
        %1373 = vst [vmem:[#allocation2 + $0x210] sm:$0xf] %v1365
        %1374 = vst [vmem:[#allocation2 + $0x218] sm:$0xf] %v1366
        %v1375 = vld [vmem:[%s348 + $0x10] sm:$0xff]
        %v1376 = vld [vmem:[%s348 + $0x18] sm:$0xff]
        %v1379 = vcombine.low %v1375, %v1375
        %v1380 = vcombine.low %v1376, %v1376
        %1383 = vst [vmem:[#allocation2 + $0x200] sm:$0xf0] %v1379
        %1384 = vst [vmem:[#allocation2 + $0x208] sm:$0xf0] %v1375
        %1385 = vst [vmem:[#allocation2 + $0x210] sm:$0xf0] %v1380
        %1386 = vst [vmem:[#allocation2 + $0x218] sm:$0xf0] %v1376
        %v1387 = vld [vmem:[%s348 + $0x10] sm:$0xff]
        %v1388 = vld [vmem:[%s348 + $0x18] sm:$0xff]
        %v1389 = vld [vmem:[%s348 + $0x20] sm:$0xf]
        %v1393 = vcombine.high %v1387, %v1387
        %v1394 = vcombine.high %v1388, %v1388
        %1395 = vrot.lane.b32.xlu0 %v1387, 120
        %v1396 = vpop.permute.xlu0 %1395
        %1397 = vrot.lane.b32.xlu0 %v1393, 120
        %v1398 = vpop.permute.xlu0 %1397
        %1399 = vrot.lane.b32.xlu0 %v1388, 120
        %v1400 = vpop.permute.xlu0 %1399
        %1401 = vrot.lane.b32.xlu0 %v1394, 120
        %v1402 = vpop.permute.xlu0 %1401
        %1403 = vrot.lane.b32.xlu0 %v1389, 120
        %v1404 = vpop.permute.xlu0 %1403
        %v1405 = vsel %vm533, %v1396, %v1398
        %v1406 = vsel %vm533, %v1398, %v1400
        %v1407 = vsel %vm533, %v1400, %v1402
        %v1408 = vsel %vm533, %v1402, %v1404
        %1413 = vst [vmem:[#allocation2 + $0x220] sm:$0xf] %v1405
        %1414 = vst [vmem:[#allocation2 + $0x228] sm:$0xf] %v1406
        %1415 = vst [vmem:[#allocation2 + $0x230] sm:$0xf] %v1407
        %1416 = vst [vmem:[#allocation2 + $0x238] sm:$0xf] %v1408
        %v1417 = vld [vmem:[%s348 + $0x10] sm:$0xff]
        %v1418 = vld [vmem:[%s348 + $0x18] sm:$0xff]
        %v1419 = vld [vmem:[%s348 + $0x20] sm:$0xf]
        %v1423 = vcombine.low %v1417, %v1417
        %v1424 = vcombine.low %v1418, %v1418
        %v1425 = vcombine.low %v1419, %v1419
        %1426 = vrot.lane.b32.xlu0 %v1423, 112
        %v1427 = vpop.permute.xlu0 %1426
        %1428 = vrot.lane.b32.xlu0 %v1417, 112
        %v1429 = vpop.permute.xlu0 %1428
        %1430 = vrot.lane.b32.xlu0 %v1424, 112
        %v1431 = vpop.permute.xlu0 %1430
        %1432 = vrot.lane.b32.xlu0 %v1418, 112
        %v1433 = vpop.permute.xlu0 %1432
        %1434 = vrot.lane.b32.xlu0 %v1425, 112
        %v1435 = vpop.permute.xlu0 %1434
        %v1436 = vsel %vm1289, %v1427, %v1429
        %v1437 = vsel %vm1289, %v1429, %v1431
        %v1438 = vsel %vm1289, %v1431, %v1433
        %v1439 = vsel %vm1289, %v1433, %v1435
        %1444 = vst [vmem:[#allocation2 + $0x220] sm:$0xf0] %v1436
        %1445 = vst [vmem:[#allocation2 + $0x228] sm:$0xf0] %v1437
        %1446 = vst [vmem:[#allocation2 + $0x230] sm:$0xf0] %v1438
        %1447 = vst [vmem:[#allocation2 + $0x238] sm:$0xf0] %v1439
        %v1448 = vld [vmem:[%s1] sm:$0xff]
        %v1449 = vld [vmem:[%s1 + $0x8] sm:$0xff]
        %v1450 = vld [vmem:[%s1 + $0x10] sm:$0xff]
        %v1451 = vld [vmem:[%s1 + $0x18] sm:$0xff]
        %v1452 = vld [vmem:[#allocation2] sm:$0xff]
        %v1453 = vld [vmem:[#allocation2 + $0x8] sm:$0xff]
        %v1454 = vld [vmem:[#allocation2 + $0x10] sm:$0xff]
        %v1455 = vld [vmem:[#allocation2 + $0x18] sm:$0xff]
        %v1456 = vld [vmem:[#allocation2 + $0x20] sm:$0xff]
        %v1457 = vld [vmem:[#allocation2 + $0x28] sm:$0xff]
        %v1458 = vld [vmem:[#allocation2 + $0x30] sm:$0xff]
        %v1459 = vld [vmem:[#allocation2 + $0x38] sm:$0xff]
        %v1460 = vld [vmem:[#allocation2 + $0x40] sm:$0xff]
        %v1461 = vld [vmem:[#allocation2 + $0x48] sm:$0xff]
        %v1462 = vld [vmem:[#allocation2 + $0x50] sm:$0xff]
        %v1463 = vld [vmem:[#allocation2 + $0x58] sm:$0xff]
        %v1464 = vld [vmem:[#allocation2 + $0x60] sm:$0xff]
        %v1465 = vld [vmem:[#allocation2 + $0x68] sm:$0xff]
        %v1466 = vld [vmem:[#allocation2 + $0x70] sm:$0xff]
        %v1467 = vld [vmem:[#allocation2 + $0x78] sm:$0xff]
        %v1468 = vld [vmem:[#allocation2 + $0x80] sm:$0xff]
        %v1469 = vld [vmem:[#allocation2 + $0x88] sm:$0xff]
        %v1470 = vld [vmem:[#allocation2 + $0x90] sm:$0xff]
        %v1471 = vld [vmem:[#allocation2 + $0x98] sm:$0xff]
        %v1472 = vld [vmem:[#allocation2 + $0xa0] sm:$0xff]
        %v1473 = vld [vmem:[#allocation2 + $0xa8] sm:$0xff]
        %v1474 = vld [vmem:[#allocation2 + $0xb0] sm:$0xff]
        %v1475 = vld [vmem:[#allocation2 + $0xb8] sm:$0xff]
        %v1476 = vld [vmem:[#allocation2 + $0xc0] sm:$0xff]
        %v1477 = vld [vmem:[#allocation2 + $0xc8] sm:$0xff]
        %v1478 = vld [vmem:[#allocation2 + $0xd0] sm:$0xff]
        %v1479 = vld [vmem:[#allocation2 + $0xd8] sm:$0xff]
        %v1480 = vld [vmem:[#allocation2 + $0xe0] sm:$0xff]
        %v1481 = vld [vmem:[#allocation2 + $0xe8] sm:$0xff]
        %v1482 = vld [vmem:[#allocation2 + $0xf0] sm:$0xff]
        %v1483 = vld [vmem:[#allocation2 + $0xf8] sm:$0xff]
        %v1484 = vld [vmem:[#allocation2 + $0x100] sm:$0xff]
        %v1485 = vld [vmem:[#allocation2 + $0x108] sm:$0xff]
        %v1486 = vld [vmem:[#allocation2 + $0x110] sm:$0xff]
        %v1487 = vld [vmem:[#allocation2 + $0x118] sm:$0xff]
        %v1488 = vld [vmem:[#allocation2 + $0x120] sm:$0xff]
        %v1489 = vld [vmem:[#allocation2 + $0x128] sm:$0xff]
        %v1490 = vld [vmem:[#allocation2 + $0x130] sm:$0xff]
        %v1491 = vld [vmem:[#allocation2 + $0x138] sm:$0xff]
        %v1492 = vld [vmem:[#allocation2 + $0x140] sm:$0xff]
        %v1493 = vld [vmem:[#allocation2 + $0x148] sm:$0xff]
        %v1494 = vld [vmem:[#allocation2 + $0x150] sm:$0xff]
        %v1495 = vld [vmem:[#allocation2 + $0x158] sm:$0xff]
        %v1496 = vld [vmem:[#allocation2 + $0x160] sm:$0xff]
        %v1497 = vld [vmem:[#allocation2 + $0x168] sm:$0xff]
        %v1498 = vld [vmem:[#allocation2 + $0x170] sm:$0xff]
        %v1499 = vld [vmem:[#allocation2 + $0x178] sm:$0xff]
        %v1500 = vld [vmem:[#allocation2 + $0x180] sm:$0xff]
        %v1501 = vld [vmem:[#allocation2 + $0x188] sm:$0xff]
        %v1502 = vld [vmem:[#allocation2 + $0x190] sm:$0xff]
        %v1503 = vld [vmem:[#allocation2 + $0x198] sm:$0xff]
        %v1504 = vld [vmem:[#allocation2 + $0x1a0] sm:$0xff]
        %v1505 = vld [vmem:[#allocation2 + $0x1a8] sm:$0xff]
        %v1506 = vld [vmem:[#allocation2 + $0x1b0] sm:$0xff]
        %v1507 = vld [vmem:[#allocation2 + $0x1b8] sm:$0xff]
        %v1508 = vld [vmem:[#allocation2 + $0x1c0] sm:$0xff]
        %v1509 = vld [vmem:[#allocation2 + $0x1c8] sm:$0xff]
        %v1510 = vld [vmem:[#allocation2 + $0x1d0] sm:$0xff]
        %v1511 = vld [vmem:[#allocation2 + $0x1d8] sm:$0xff]
        %v1512 = vld [vmem:[#allocation2 + $0x1e0] sm:$0xff]
        %v1513 = vld [vmem:[#allocation2 + $0x1e8] sm:$0xff]
        %v1514 = vld [vmem:[#allocation2 + $0x1f0] sm:$0xff]
        %v1515 = vld [vmem:[#allocation2 + $0x1f8] sm:$0xff]
        %v1516 = vld [vmem:[#allocation2 + $0x200] sm:$0xff]
        %v1517 = vld [vmem:[#allocation2 + $0x208] sm:$0xff]
        %v1518 = vld [vmem:[#allocation2 + $0x210] sm:$0xff]
        %v1519 = vld [vmem:[#allocation2 + $0x218] sm:$0xff]
        %v1520 = vld [vmem:[#allocation2 + $0x220] sm:$0xff]
        %v1521 = vld [vmem:[#allocation2 + $0x228] sm:$0xff]
        %v1522 = vld [vmem:[#allocation2 + $0x230] sm:$0xff]
        %v1523 = vld [vmem:[#allocation2 + $0x238] sm:$0xff]
        %vm1524 = vcmask 130048
        %v1526 = vsel %vm1524, %v1449, 0
        %v1529 = vsel %vm1524, %v1451, 0
        %1531 = vmatprep.subr.mxu0 %v1453
        %1532 = vmatpush1.msra.mxu0 %v1452
        %1533 = vmatprep.subr.mxu0 %v1457
        %1534 = vmatpush1.msra.mxu0 %v1456
        %1535 = vmatprep.subr.mxu0 %v1461
        %1536 = vmatpush1.msra.mxu0 %v1460
        %1537 = vmatprep.subr.mxu0 %v1465
        %1538 = vmatpush1.msra.mxu0 %v1464
        %1539 = vmatprep.subr.mxu0 %v1469
        %1540 = vmatpush1.msra.mxu0 %v1468
        %1541 = vmatprep.subr.mxu0 %v1473
        %1542 = vmatpush1.msra.mxu0 %v1472
        %1543 = vmatprep.subr.mxu0 %v1477
        %1544 = vmatpush1.msra.mxu0 %v1476
        %1545 = vmatprep.subr.mxu0 %v1481
        %1546 = vmatpush1.msra.mxu0 %v1480
        %1547 = vmatprep.subr.mxu0 %v1485
        %1548 = vmatpush1.msra.mxu0 %v1484
        %1549 = vmatprep.subr.mxu0 %v1489
        %1550 = vmatpush1.msra.mxu0 %v1488
        %1551 = vmatprep.subr.mxu0 %v1493
        %1552 = vmatpush1.msra.mxu0 %v1492
        %1553 = vmatprep.subr.mxu0 %v1497
        %1554 = vmatpush1.msra.mxu0 %v1496
        %1555 = vmatprep.subr.mxu0 %v1501
        %1556 = vmatpush1.msra.mxu0 %v1500
        %1557 = vmatprep.subr.mxu0 %v1505
        %1558 = vmatpush1.msra.mxu0 %v1504
        %1559 = vmatprep.subr.mxu0 %v1509
        %1560 = vmatpush1.msra.mxu0 %v1508
        %1561 = vmatprep.subr.mxu0 %v1513
        %1562 = vmatpush1.msra.mxu0 %v1512
        %1563 = vmatprep.subr.mxu0 %v1517
        %1564 = vmatpush1.msra.mxu0 %v1516
        %1565 = vmatprep.subr.mxu0 %v1521
        %1566 = vmatpush1.msra.mxu0 %v1520
        %1567 = vmatprep.subr.mxu0 0.0
        %1568 = vmatpush1.msra.mxu0 0.0
        %1569 = vmatprep.subr.mxu0 0.0
        %1570 = vmatpush1.msra.mxu0 0.0
        %1571 = vmatprep.subr.mxu0 0.0
        %1572 = vmatpush1.msra.mxu0 0.0
        %1573 = vmatprep.subr.mxu0 0.0
        %1574 = vmatpush1.msra.mxu0 0.0
        %1575 = vmatprep.subr.mxu0 0.0
        %1576 = vmatpush1.msra.mxu0 0.0
        %1577 = vmatprep.subr.mxu0 0.0
        %1578 = vmatpush1.msra.mxu0 0.0
        %1579 = vmatprep.subr.mxu0 0.0
        %1580 = vmatpush1.msra.mxu0 0.0
        %1581 = vmatprep.subr.mxu0 0.0
        %1582 = vmatpush1.msra.mxu0 0.0
        %1583 = vmatprep.subr.mxu0 0.0
        %1584 = vmatpush1.msra.mxu0 0.0
        %1585 = vmatprep.subr.mxu0 0.0
        %1586 = vmatpush1.msra.mxu0 0.0
        %1587 = vmatprep.subr.mxu0 0.0
        %1588 = vmatpush1.msra.mxu0 0.0
        %1589 = vmatprep.subr.mxu0 0.0
        %1590 = vmatpush1.msra.mxu0 0.0
        %1591 = vmatprep.subr.mxu0 0.0
        %1592 = vmatpush1.msra.mxu0 0.0
        %1593 = vmatprep.subr.mxu0 0.0
        %1594 = vmatpush1.msra.mxu0 0.0
        %1595 = vmatprep.mubr.f32.mxu0 %v1526
        %1596 = vmatmul.mubr.f32.gmra.mrb[0].mxu0 %v1448
        %v1597 = vpop.f32.mrb[0].mxu0
        %v1598 = vadd.f32 0.0, %v1597
        %v1599 = vpop.f32.mrb[0].mxu0
        %v1600 = vadd.f32 0.0, %v1599
        %1601 = vmatprep.mubr.f32.mxu0 %v1529
        %1602 = vmatmul.mubr.f32.gmra.mrb[0].mxu0 %v1450
        %v1603 = vpop.f32.mrb[0].mxu0
        %v1604 = vadd.f32 0.0, %v1603
        %v1605 = vpop.f32.mrb[0].mxu0
        %v1606 = vadd.f32 0.0, %v1605
        %1607 = vdwg.mxu0
        %1608 = vmatprep.subr.mxu0 %v1455
        %1609 = vmatpush1.msra.mxu0 %v1454
        %1610 = vmatprep.subr.mxu0 %v1459
        %1611 = vmatpush1.msra.mxu0 %v1458
        %1612 = vmatprep.subr.mxu0 %v1463
        %1613 = vmatpush1.msra.mxu0 %v1462
        %1614 = vmatprep.subr.mxu0 %v1467
        %1615 = vmatpush1.msra.mxu0 %v1466
        %1616 = vmatprep.subr.mxu0 %v1471
        %1617 = vmatpush1.msra.mxu0 %v1470
        %1618 = vmatprep.subr.mxu0 %v1475
        %1619 = vmatpush1.msra.mxu0 %v1474
        %1620 = vmatprep.subr.mxu0 %v1479
        %1621 = vmatpush1.msra.mxu0 %v1478
        %1622 = vmatprep.subr.mxu0 %v1483
        %1623 = vmatpush1.msra.mxu0 %v1482
        %1624 = vmatprep.subr.mxu0 %v1487
        %1625 = vmatpush1.msra.mxu0 %v1486
        %1626 = vmatprep.subr.mxu0 %v1491
        %1627 = vmatpush1.msra.mxu0 %v1490
        %1628 = vmatprep.subr.mxu0 %v1495
        %1629 = vmatpush1.msra.mxu0 %v1494
        %1630 = vmatprep.subr.mxu0 %v1499
        %1631 = vmatpush1.msra.mxu0 %v1498
        %1632 = vmatprep.subr.mxu0 %v1503
        %1633 = vmatpush1.msra.mxu0 %v1502
        %1634 = vmatprep.subr.mxu0 %v1507
        %1635 = vmatpush1.msra.mxu0 %v1506
        %1636 = vmatprep.subr.mxu0 %v1511
        %1637 = vmatpush1.msra.mxu0 %v1510
        %1638 = vmatprep.subr.mxu0 %v1515
        %1639 = vmatpush1.msra.mxu0 %v1514
        %1640 = vmatprep.subr.mxu0 %v1519
        %1641 = vmatpush1.msra.mxu0 %v1518
        %1642 = vmatprep.subr.mxu0 %v1523
        %1643 = vmatpush1.msra.mxu0 %v1522
        %1644 = vmatprep.subr.mxu0 0.0
        %1645 = vmatpush1.msra.mxu0 0.0
        %1646 = vmatprep.subr.mxu0 0.0
        %1647 = vmatpush1.msra.mxu0 0.0
        %1648 = vmatprep.subr.mxu0 0.0
        %1649 = vmatpush1.msra.mxu0 0.0
        %1650 = vmatprep.subr.mxu0 0.0
        %1651 = vmatpush1.msra.mxu0 0.0
        %1652 = vmatprep.subr.mxu0 0.0
        %1653 = vmatpush1.msra.mxu0 0.0
        %1654 = vmatprep.subr.mxu0 0.0
        %1655 = vmatpush1.msra.mxu0 0.0
        %1656 = vmatprep.subr.mxu0 0.0
        %1657 = vmatpush1.msra.mxu0 0.0
        %1658 = vmatprep.subr.mxu0 0.0
        %1659 = vmatpush1.msra.mxu0 0.0
        %1660 = vmatprep.subr.mxu0 0.0
        %1661 = vmatpush1.msra.mxu0 0.0
        %1662 = vmatprep.subr.mxu0 0.0
        %1663 = vmatpush1.msra.mxu0 0.0
        %1664 = vmatprep.subr.mxu0 0.0
        %1665 = vmatpush1.msra.mxu0 0.0
        %1666 = vmatprep.subr.mxu0 0.0
        %1667 = vmatpush1.msra.mxu0 0.0
        %1668 = vmatprep.subr.mxu0 0.0
        %1669 = vmatpush1.msra.mxu0 0.0
        %1670 = vmatprep.subr.mxu0 0.0
        %1671 = vmatpush1.msra.mxu0 0.0
        %1672 = vmatprep.mubr.f32.mxu0 %v1526
        %1673 = vmatmul.mubr.f32.gmra.mrb[0].mxu0 %v1448
        %v1674 = vpop.f32.mrb[0].mxu0
        %v1675 = vadd.f32 0.0, %v1674
        %v1676 = vpop.f32.mrb[0].mxu0
        %v1677 = vadd.f32 0.0, %v1676
        %1678 = vmatprep.mubr.f32.mxu0 %v1529
        %1679 = vmatmul.mubr.f32.gmra.mrb[0].mxu0 %v1450
        %v1680 = vpop.f32.mrb[0].mxu0
        %v1681 = vadd.f32 0.0, %v1680
        %v1682 = vpop.f32.mrb[0].mxu0
        %v1683 = vadd.f32 0.0, %v1682
        %1684 = vdwg.mxu0
        %v1685 = vld [vmem:[#allocation6] sm:$0xf]
        %v1686 = vld [vmem:[%s5] sm:$0xff]
        %v1687 = vld [vmem:[%s5 + $0x8] sm:$0xff]
        %v1688 = vld [vmem:[%s3] sm:$0xff]
        %v1689 = vld [vmem:[%s3 + $0x8] sm:$0xff]
        %v1690 = vld [vmem:[%s4] sm:$0xff]
        %v1691 = vld [vmem:[%s4 + $0x8] sm:$0xff]
        %v1693 = vlaneseq
        %v1694 = vshrl.u32 %v1693, 7
        %v1695 = vsub.s32 0, %v1694
        %v1696 = vrot.slane %v1685, %v1695
        %v1697 = vlaneseq
        %v1698 = vshrl.u32 %v1697, 7
        %v1699 = vsub.s32 1, %v1698
        %v1700 = vrot.slane %v1685, %v1699
        %v1701 = vlaneseq
        %v1702 = vshrl.u32 %v1701, 7
        %v1703 = vsub.s32 2, %v1702
        %v1704 = vrot.slane %v1685, %v1703
        %v1705 = vlaneseq
        %v1706 = vshrl.u32 %v1705, 7
        %v1707 = vsub.s32 3, %v1706
        %v1708 = vrot.slane %v1685, %v1707
        %v1713 = vmul.f32 %v1598, %v1696
        %v1714 = vmul.f32 %v1600, %v1700
        %v1715 = vmul.f32 %v1675, %v1704
        %v1716 = vmul.f32 %v1677, %v1708
        %v1717 = vmul.f32 %v1604, %v1696
        %v1718 = vmul.f32 %v1606, %v1700
        %v1719 = vmul.f32 %v1681, %v1704
        %v1720 = vmul.f32 %v1683, %v1708
        %v1721 = vadd.f32 %v1713, %v1714
        %v1722 = vadd.f32 %v1721, %v1715
        %v1723 = vadd.f32 %v1722, %v1716
        %1724 = vadd.xlane.f32.xlu0 %v1723
        %v1725 = vpop.xlane.xlu0 %1724
        %v1726 = vadd.f32 %v1717, %v1718
        %v1727 = vadd.f32 %v1726, %v1719
        %v1728 = vadd.f32 %v1727, %v1720
        %1729 = vadd.xlane.f32.xlu0 %v1728
        %v1730 = vpop.xlane.xlu0 %1729
        %v1732 = vsel %vm1524, %v1686, 0
        %v1735 = vsel %vm1524, %v1687, 0
        %1737 = vmatprep.subr.mxu0 0.0
        %1738 = vmatpush1.msra.mxu0 %v1725
        %1739 = vmatprep.subr.mxu0 0.0
        %1740 = vmatpush1.msra.mxu0 %v1730
        %1741 = vmatprep.subr.mxu0 0.0
        %1742 = vmatpush1.msra.mxu0 0.0
        %1743 = vmatprep.subr.mxu0 0.0
        %1744 = vmatpush1.msra.mxu0 0.0
        %1745 = vmatprep.subr.mxu0 0.0
        %1746 = vmatpush1.msra.mxu0 0.0
        %1747 = vmatprep.subr.mxu0 0.0
        %1748 = vmatpush1.msra.mxu0 0.0
        %1749 = vmatprep.subr.mxu0 0.0
        %1750 = vmatpush1.msra.mxu0 0.0
        %1751 = vmatprep.subr.mxu0 0.0
        %1752 = vmatpush1.msra.mxu0 0.0
        %1753 = vmatprep.subr.mxu0 0.0
        %1754 = vmatpush1.msra.mxu0 0.0
        %1755 = vmatprep.subr.mxu0 0.0
        %1756 = vmatpush1.msra.mxu0 0.0
        %1757 = vmatprep.subr.mxu0 0.0
        %1758 = vmatpush1.msra.mxu0 0.0
        %1759 = vmatprep.subr.mxu0 0.0
        %1760 = vmatpush1.msra.mxu0 0.0
        %1761 = vmatprep.subr.mxu0 0.0
        %1762 = vmatpush1.msra.mxu0 0.0
        %1763 = vmatprep.subr.mxu0 0.0
        %1764 = vmatpush1.msra.mxu0 0.0
        %1765 = vmatprep.subr.mxu0 0.0
        %1766 = vmatpush1.msra.mxu0 0.0
        %1767 = vmatprep.subr.mxu0 0.0
        %1768 = vmatpush1.msra.mxu0 0.0
        %1769 = vmatprep.subr.mxu0 0.0
        %1770 = vmatpush1.msra.mxu0 0.0
        %1771 = vmatprep.subr.mxu0 0.0
        %1772 = vmatpush1.msra.mxu0 0.0
        %1773 = vmatprep.subr.mxu0 0.0
        %1774 = vmatpush1.msra.mxu0 0.0
        %1775 = vmatprep.subr.mxu0 0.0
        %1776 = vmatpush1.msra.mxu0 0.0
        %1777 = vmatprep.subr.mxu0 0.0
        %1778 = vmatpush1.msra.mxu0 0.0
        %1779 = vmatprep.subr.mxu0 0.0
        %1780 = vmatpush1.msra.mxu0 0.0
        %1781 = vmatprep.subr.mxu0 0.0
        %1782 = vmatpush1.msra.mxu0 0.0
        %1783 = vmatprep.subr.mxu0 0.0
        %1784 = vmatpush1.msra.mxu0 0.0
        %1785 = vmatprep.subr.mxu0 0.0
        %1786 = vmatpush1.msra.mxu0 0.0
        %1787 = vmatprep.subr.mxu0 0.0
        %1788 = vmatpush1.msra.mxu0 0.0
        %1789 = vmatprep.subr.mxu0 0.0
        %1790 = vmatpush1.msra.mxu0 0.0
        %1791 = vmatprep.subr.mxu0 0.0
        %1792 = vmatpush1.msra.mxu0 0.0
        %1793 = vmatprep.subr.mxu0 0.0
        %1794 = vmatpush1.msra.mxu0 0.0
        %1795 = vmatprep.subr.mxu0 0.0
        %1796 = vmatpush1.msra.mxu0 0.0
        %1797 = vmatprep.subr.mxu0 0.0
        %1798 = vmatpush1.msra.mxu0 0.0
        %1799 = vmatprep.subr.mxu0 0.0
        %1800 = vmatpush1.msra.mxu0 0.0
        %1801 = vmatprep.mubr.f32.mxu0 0.0
        %1802 = vmatmul.mubr.f32.gmra.mrb[0].mxu0 %v1732
        %v1803 = vpop.f32.mrb[0].mxu0
        %v1804 = vadd.f32 0.0, %v1803
        %v1805 = vpop.f32.mrb[0].mxu0
        %1806 = vmatprep.mubr.f32.mxu0 0.0
        %1807 = vmatmul.mubr.f32.gmra.mrb[0].mxu0 %v1735
        %v1808 = vpop.f32.mrb[0].mxu0
        %v1809 = vadd.f32 0.0, %v1808
        %v1810 = vpop.f32.mrb[0].mxu0
        %1811 = vdwg.mxu0
        %1813 = vset.pattern.permute.xlu0 0
        %1814 = vperm.xlu0 %1813, %v1804
        %v1815 = vpop.permute.xlu0 %1814
        %1818 = vset.pattern.permute.xlu0 0
        %1819 = vperm.xlu0 %1818, %v1809
        %v1820 = vpop.permute.xlu0 %1819
        %v1822 = vsub.f32 %v1598, %v1815
        %v1823 = vsub.f32 %v1600, %v1815
        %v1824 = vsub.f32 %v1675, %v1815
        %v1825 = vsub.f32 %v1677, %v1815
        %v1826 = vsub.f32 %v1604, %v1820
        %v1827 = vsub.f32 %v1606, %v1820
        %v1828 = vsub.f32 %v1681, %v1820
        %v1829 = vsub.f32 %v1683, %v1820
        %v1830 = vmul.f32 %v1822, %v1822
        %v1831 = vmul.f32 %v1823, %v1823
        %v1832 = vmul.f32 %v1824, %v1824
        %v1833 = vmul.f32 %v1825, %v1825
        %v1834 = vmul.f32 %v1826, %v1826
        %v1835 = vmul.f32 %v1827, %v1827
        %v1836 = vmul.f32 %v1828, %v1828
        %v1837 = vmul.f32 %v1829, %v1829
        %v1838 = vmul.f32 %v1830, %v1696
        %v1839 = vmul.f32 %v1831, %v1700
        %v1840 = vmul.f32 %v1832, %v1704
        %v1841 = vmul.f32 %v1833, %v1708
        %v1842 = vmul.f32 %v1834, %v1696
        %v1843 = vmul.f32 %v1835, %v1700
        %v1844 = vmul.f32 %v1836, %v1704
        %v1845 = vmul.f32 %v1837, %v1708
        %v1846 = vadd.f32 %v1838, %v1839
        %v1847 = vadd.f32 %v1846, %v1840
        %v1848 = vadd.f32 %v1847, %v1841
        %1849 = vadd.xlane.f32.xlu0 %v1848
        %v1850 = vpop.xlane.xlu0 %1849
        %v1851 = vadd.f32 %v1842, %v1843
        %v1852 = vadd.f32 %v1851, %v1844
        %v1853 = vadd.f32 %v1852, %v1845
        %1854 = vadd.xlane.f32.xlu0 %v1853
        %v1855 = vpop.xlane.xlu0 %1854
        %1856 = vmatprep.subr.mxu0 0.0
        %1857 = vmatpush1.msra.mxu0 %v1850
        %1858 = vmatprep.subr.mxu0 0.0
        %1859 = vmatpush1.msra.mxu0 %v1855
        %1860 = vmatprep.subr.mxu0 0.0
        %1861 = vmatpush1.msra.mxu0 0.0
        %1862 = vmatprep.subr.mxu0 0.0
        %1863 = vmatpush1.msra.mxu0 0.0
        %1864 = vmatprep.subr.mxu0 0.0
        %1865 = vmatpush1.msra.mxu0 0.0
        %1866 = vmatprep.subr.mxu0 0.0
        %1867 = vmatpush1.msra.mxu0 0.0
        %1868 = vmatprep.subr.mxu0 0.0
        %1869 = vmatpush1.msra.mxu0 0.0
        %1870 = vmatprep.subr.mxu0 0.0
        %1871 = vmatpush1.msra.mxu0 0.0
        %1872 = vmatprep.subr.mxu0 0.0
        %1873 = vmatpush1.msra.mxu0 0.0
        %1874 = vmatprep.subr.mxu0 0.0
        %1875 = vmatpush1.msra.mxu0 0.0
        %1876 = vmatprep.subr.mxu0 0.0
        %1877 = vmatpush1.msra.mxu0 0.0
        %1878 = vmatprep.subr.mxu0 0.0
        %1879 = vmatpush1.msra.mxu0 0.0
        %1880 = vmatprep.subr.mxu0 0.0
        %1881 = vmatpush1.msra.mxu0 0.0
        %1882 = vmatprep.subr.mxu0 0.0
        %1883 = vmatpush1.msra.mxu0 0.0
        %1884 = vmatprep.subr.mxu0 0.0
        %1885 = vmatpush1.msra.mxu0 0.0
        %1886 = vmatprep.subr.mxu0 0.0
        %1887 = vmatpush1.msra.mxu0 0.0
        %1888 = vmatprep.subr.mxu0 0.0
        %1889 = vmatpush1.msra.mxu0 0.0
        %1890 = vmatprep.subr.mxu0 0.0
        %1891 = vmatpush1.msra.mxu0 0.0
        %1892 = vmatprep.subr.mxu0 0.0
        %1893 = vmatpush1.msra.mxu0 0.0
        %1894 = vmatprep.subr.mxu0 0.0
        %1895 = vmatpush1.msra.mxu0 0.0
        %1896 = vmatprep.subr.mxu0 0.0
        %1897 = vmatpush1.msra.mxu0 0.0
        %1898 = vmatprep.subr.mxu0 0.0
        %1899 = vmatpush1.msra.mxu0 0.0
        %1900 = vmatprep.subr.mxu0 0.0
        %1901 = vmatpush1.msra.mxu0 0.0
        %1902 = vmatprep.subr.mxu0 0.0
        %1903 = vmatpush1.msra.mxu0 0.0
        %1904 = vmatprep.subr.mxu0 0.0
        %1905 = vmatpush1.msra.mxu0 0.0
        %1906 = vmatprep.subr.mxu0 0.0
        %1907 = vmatpush1.msra.mxu0 0.0
        %1908 = vmatprep.subr.mxu0 0.0
        %1909 = vmatpush1.msra.mxu0 0.0
        %1910 = vmatprep.subr.mxu0 0.0
        %1911 = vmatpush1.msra.mxu0 0.0
        %1912 = vmatprep.subr.mxu0 0.0
        %1913 = vmatpush1.msra.mxu0 0.0
        %1914 = vmatprep.subr.mxu0 0.0
        %1915 = vmatpush1.msra.mxu0 0.0
        %1916 = vmatprep.subr.mxu0 0.0
        %1917 = vmatpush1.msra.mxu0 0.0
        %1918 = vmatprep.subr.mxu0 0.0
        %1919 = vmatpush1.msra.mxu0 0.0
        %1920 = vmatprep.mubr.f32.mxu0 0.0
        %1921 = vmatmul.mubr.f32.gmra.mrb[0].mxu0 %v1732
        %v1922 = vpop.f32.mrb[0].mxu0
        %v1923 = vadd.f32 1e-05, %v1922
        %v1924 = vpop.f32.mrb[0].mxu0
        %1925 = vmatprep.mubr.f32.mxu0 0.0
        %1926 = vmatmul.mubr.f32.gmra.mrb[0].mxu0 %v1735
        %v1927 = vpop.f32.mrb[0].mxu0
        %v1928 = vadd.f32 1e-05, %v1927
        %v1929 = vpop.f32.mrb[0].mxu0
        %1930 = vdwg.mxu0
        %v1931 = vrsqrt.pop %v1923
        %v1932 = vrsqrt.pop %v1928
        %v1933 = vmul.f32 %v1931, %v1688
        %v1934 = vmul.f32 %v1932, %v1689
        %1936 = vset.pattern.permute.xlu0 0
        %1937 = vperm.xlu0 %1936, %v1933
        %v1938 = vpop.permute.xlu0 %1937
        %1941 = vset.pattern.permute.xlu0 0
        %1942 = vperm.xlu0 %1941, %v1934
        %v1943 = vpop.permute.xlu0 %1942
        %v1945 = vmul.f32 %v1822, %v1938
        %v1946 = vmul.f32 %v1823, %v1938
        %v1947 = vmul.f32 %v1824, %v1938
        %v1948 = vmul.f32 %v1825, %v1938
        %v1949 = vmul.f32 %v1826, %v1943
        %v1950 = vmul.f32 %v1827, %v1943
        %v1951 = vmul.f32 %v1828, %v1943
        %v1952 = vmul.f32 %v1829, %v1943
        %1954 = vset.pattern.permute.xlu0 0
        %1955 = vperm.xlu0 %1954, %v1690
        %v1956 = vpop.permute.xlu0 %1955
        %1959 = vset.pattern.permute.xlu0 0
        %1960 = vperm.xlu0 %1959, %v1691
        %v1961 = vpop.permute.xlu0 %1960
        %v1963 = vadd.f32 %v1945, %v1956
        %v1964 = vadd.f32 %v1946, %v1956
        %v1965 = vadd.f32 %v1947, %v1956
        %v1966 = vadd.f32 %v1948, %v1956
        %v1967 = vadd.f32 %v1949, %v1961
        %v1968 = vadd.f32 %v1950, %v1961
        %v1969 = vadd.f32 %v1951, %v1961
        %v1970 = vadd.f32 %v1952, %v1961
        %v1971 = vmul.f32 %v1963, 0.70710677
        %v1972 = vmul.f32 %v1964, 0.70710677
        %v1973 = vmul.f32 %v1965, 0.70710677
        %v1974 = vmul.f32 %v1966, 0.70710677
        %v1975 = vmul.f32 %v1967, 0.70710677
        %v1976 = vmul.f32 %v1968, 0.70710677
        %v1977 = vmul.f32 %v1969, 0.70710677
        %v1978 = vmul.f32 %v1970, 0.70710677
        %vm1979 = vcmp.ge.f32.partialorder %v1971, 0.0
        %vm1980 = vcmp.ge.f32.partialorder %v1972, 0.0
        %vm1981 = vcmp.ge.f32.partialorder %v1973, 0.0
        %vm1982 = vcmp.ge.f32.partialorder %v1974, 0.0
        %vm1983 = vcmp.ge.f32.partialorder %v1975, 0.0
        %vm1984 = vcmp.ge.f32.partialorder %v1976, 0.0
        %vm1985 = vcmp.ge.f32.partialorder %v1977, 0.0
        %vm1986 = vcmp.ge.f32.partialorder %v1978, 0.0
        %v1987 = vsel %vm1979, 1.0, -1.0
        %v1988 = vsel %vm1980, 1.0, -1.0
        %v1989 = vsel %vm1981, 1.0, -1.0
        %v1990 = vsel %vm1982, 1.0, -1.0
        %v1991 = vsel %vm1983, 1.0, -1.0
        %v1992 = vsel %vm1984, 1.0, -1.0
        %v1993 = vsel %vm1985, 1.0, -1.0
        %v1994 = vsel %vm1986, 1.0, -1.0
        %v1995 = vand.u32 2147483647, %v1971
        %v1996 = vand.u32 2147483647, %v1972
        %v1997 = vand.u32 2147483647, %v1973
        %v1998 = vand.u32 2147483647, %v1974
        %v1999 = vand.u32 2147483647, %v1975
        %v2000 = vand.u32 2147483647, %v1976
        %v2001 = vand.u32 2147483647, %v1977
        %v2002 = vand.u32 2147483647, %v1978
        %v2003 = vmul.f32 %v1995, 0.3275911
        %v2004 = vmul.f32 %v1996, 0.3275911
        %v2005 = vmul.f32 %v1997, 0.3275911
        %v2006 = vmul.f32 %v1998, 0.3275911
        %v2007 = vmul.f32 %v1999, 0.3275911
        %v2008 = vmul.f32 %v2000, 0.3275911
        %v2009 = vmul.f32 %v2001, 0.3275911
        %v2010 = vmul.f32 %v2002, 0.3275911
        %v2011 = vadd.f32 %v2003, 1.0
        %v2012 = vadd.f32 %v2004, 1.0
        %v2013 = vadd.f32 %v2005, 1.0
        %v2014 = vadd.f32 %v2006, 1.0
        %v2015 = vadd.f32 %v2007, 1.0
        %v2016 = vadd.f32 %v2008, 1.0
        %v2017 = vadd.f32 %v2009, 1.0
        %v2018 = vadd.f32 %v2010, 1.0
        %v2019 = vrcp.pop %v2011
        %v2020 = vrcp.pop %v2012
        %v2021 = vrcp.pop %v2013
        %v2022 = vrcp.pop %v2014
        %v2023 = vrcp.pop %v2015
        %v2024 = vrcp.pop %v2016
        %v2025 = vrcp.pop %v2017
        %v2026 = vrcp.pop %v2018
        %v2027 = vmul.f32 %v2011, %v2019
        %v2028 = vmul.f32 %v2012, %v2020
        %v2029 = vmul.f32 %v2013, %v2021
        %v2030 = vmul.f32 %v2014, %v2022
        %v2031 = vmul.f32 %v2015, %v2023
        %v2032 = vmul.f32 %v2016, %v2024
        %v2033 = vmul.f32 %v2017, %v2025
        %v2034 = vmul.f32 %v2018, %v2026
        %v2035 = vsub.f32 2.0, %v2027
        %v2036 = vsub.f32 2.0, %v2028
        %v2037 = vsub.f32 2.0, %v2029
        %v2038 = vsub.f32 2.0, %v2030
        %v2039 = vsub.f32 2.0, %v2031
        %v2040 = vsub.f32 2.0, %v2032
        %v2041 = vsub.f32 2.0, %v2033
        %v2042 = vsub.f32 2.0, %v2034
        %v2043 = vmul.f32 %v2019, %v2035
        %v2044 = vmul.f32 %v2020, %v2036
        %v2045 = vmul.f32 %v2021, %v2037
        %v2046 = vmul.f32 %v2022, %v2038
        %v2047 = vmul.f32 %v2023, %v2039
        %v2048 = vmul.f32 %v2024, %v2040
        %v2049 = vmul.f32 %v2025, %v2041
        %v2050 = vmul.f32 %v2026, %v2042
        %v2051 = vmul.f32 %v2043, 1.0614054
        %v2052 = vmul.f32 %v2044, 1.0614054
        %v2053 = vmul.f32 %v2045, 1.0614054
        %v2054 = vmul.f32 %v2046, 1.0614054
        %v2055 = vmul.f32 %v2047, 1.0614054
        %v2056 = vmul.f32 %v2048, 1.0614054
        %v2057 = vmul.f32 %v2049, 1.0614054
        %v2058 = vmul.f32 %v2050, 1.0614054
        %v2059 = vadd.f32 %v2051, -1.4531521
        %v2060 = vadd.f32 %v2052, -1.4531521
        %v2061 = vadd.f32 %v2053, -1.4531521
        %v2062 = vadd.f32 %v2054, -1.4531521
        %v2063 = vadd.f32 %v2055, -1.4531521
        %v2064 = vadd.f32 %v2056, -1.4531521
        %v2065 = vadd.f32 %v2057, -1.4531521
        %v2066 = vadd.f32 %v2058, -1.4531521
        %v2067 = vmul.f32 %v2059, %v2043
        %v2068 = vmul.f32 %v2060, %v2044
        %v2069 = vmul.f32 %v2061, %v2045
        %v2070 = vmul.f32 %v2062, %v2046
        %v2071 = vmul.f32 %v2063, %v2047
        %v2072 = vmul.f32 %v2064, %v2048
        %v2073 = vmul.f32 %v2065, %v2049
        %v2074 = vmul.f32 %v2066, %v2050
        %v2075 = vadd.f32 %v2067, 1.4214138
        %v2076 = vadd.f32 %v2068, 1.4214138
        %v2077 = vadd.f32 %v2069, 1.4214138
        %v2078 = vadd.f32 %v2070, 1.4214138
        %v2079 = vadd.f32 %v2071, 1.4214138
        %v2080 = vadd.f32 %v2072, 1.4214138
        %v2081 = vadd.f32 %v2073, 1.4214138
        %v2082 = vadd.f32 %v2074, 1.4214138
        %v2083 = vmul.f32 %v2075, %v2043
        %v2084 = vmul.f32 %v2076, %v2044
        %v2085 = vmul.f32 %v2077, %v2045
        %v2086 = vmul.f32 %v2078, %v2046
        %v2087 = vmul.f32 %v2079, %v2047
        %v2088 = vmul.f32 %v2080, %v2048
        %v2089 = vmul.f32 %v2081, %v2049
        %v2090 = vmul.f32 %v2082, %v2050
        %v2091 = vadd.f32 %v2083, -0.28449672
        %v2092 = vadd.f32 %v2084, -0.28449672
        %v2093 = vadd.f32 %v2085, -0.28449672
        %v2094 = vadd.f32 %v2086, -0.28449672
        %v2095 = vadd.f32 %v2087, -0.28449672
        %v2096 = vadd.f32 %v2088, -0.28449672
        %v2097 = vadd.f32 %v2089, -0.28449672
        %v2098 = vadd.f32 %v2090, -0.28449672
        %v2099 = vmul.f32 %v2091, %v2043
        %v2100 = vmul.f32 %v2092, %v2044
        %v2101 = vmul.f32 %v2093, %v2045
        %v2102 = vmul.f32 %v2094, %v2046
        %v2103 = vmul.f32 %v2095, %v2047
        %v2104 = vmul.f32 %v2096, %v2048
        %v2105 = vmul.f32 %v2097, %v2049
        %v2106 = vmul.f32 %v2098, %v2050
        %v2107 = vadd.f32 %v2099, 0.2548296
        %v2108 = vadd.f32 %v2100, 0.2548296
        %v2109 = vadd.f32 %v2101, 0.2548296
        %v2110 = vadd.f32 %v2102, 0.2548296
        %v2111 = vadd.f32 %v2103, 0.2548296
        %v2112 = vadd.f32 %v2104, 0.2548296
        %v2113 = vadd.f32 %v2105, 0.2548296
        %v2114 = vadd.f32 %v2106, 0.2548296
        %v2115 = vmul.f32 %v2107, %v2043
        %v2116 = vmul.f32 %v2108, %v2044
        %v2117 = vmul.f32 %v2109, %v2045
        %v2118 = vmul.f32 %v2110, %v2046
        %v2119 = vmul.f32 %v2111, %v2047
        %v2120 = vmul.f32 %v2112, %v2048
        %v2121 = vmul.f32 %v2113, %v2049
        %v2122 = vmul.f32 %v2114, %v2050
        %v2123 = vsub.f32 0.0, %v1995
        %v2124 = vsub.f32 0.0, %v1996
        %v2125 = vsub.f32 0.0, %v1997
        %v2126 = vsub.f32 0.0, %v1998
        %v2127 = vsub.f32 0.0, %v1999
        %v2128 = vsub.f32 0.0, %v2000
        %v2129 = vsub.f32 0.0, %v2001
        %v2130 = vsub.f32 0.0, %v2002
        %v2131 = vmul.f32 %v2123, %v1995
        %v2132 = vmul.f32 %v2124, %v1996
        %v2133 = vmul.f32 %v2125, %v1997
        %v2134 = vmul.f32 %v2126, %v1998
        %v2135 = vmul.f32 %v2127, %v1999
        %v2136 = vmul.f32 %v2128, %v2000
        %v2137 = vmul.f32 %v2129, %v2001
        %v2138 = vmul.f32 %v2130, %v2002
        %v2139 = vmul.f32 %v2131, 1.442695
        %v2140 = vpow.pop %v2139
        %v2141 = vmul.f32 %v2132, 1.442695
        %v2142 = vpow.pop %v2141
        %v2143 = vmul.f32 %v2133, 1.442695
        %v2144 = vpow.pop %v2143
        %v2145 = vmul.f32 %v2134, 1.442695
        %v2146 = vpow.pop %v2145
        %v2147 = vmul.f32 %v2135, 1.442695
        %v2148 = vpow.pop %v2147
        %v2149 = vmul.f32 %v2136, 1.442695
        %v2150 = vpow.pop %v2149
        %v2151 = vmul.f32 %v2137, 1.442695
        %v2152 = vpow.pop %v2151
        %v2153 = vmul.f32 %v2138, 1.442695
        %v2154 = vpow.pop %v2153
        %v2155 = vmul.f32 %v2115, %v2140
        %v2156 = vmul.f32 %v2116, %v2142
        %v2157 = vmul.f32 %v2117, %v2144
        %v2158 = vmul.f32 %v2118, %v2146
        %v2159 = vmul.f32 %v2119, %v2148
        %v2160 = vmul.f32 %v2120, %v2150
        %v2161 = vmul.f32 %v2121, %v2152
        %v2162 = vmul.f32 %v2122, %v2154
        %v2163 = vsub.f32 1.0, %v2155
        %v2164 = vsub.f32 1.0, %v2156
        %v2165 = vsub.f32 1.0, %v2157
        %v2166 = vsub.f32 1.0, %v2158
        %v2167 = vsub.f32 1.0, %v2159
        %v2168 = vsub.f32 1.0, %v2160
        %v2169 = vsub.f32 1.0, %v2161
        %v2170 = vsub.f32 1.0, %v2162
        %v2171 = vmul.f32 %v1987, %v2163
        %v2172 = vmul.f32 %v1988, %v2164
        %v2173 = vmul.f32 %v1989, %v2165
        %v2174 = vmul.f32 %v1990, %v2166
        %v2175 = vmul.f32 %v1991, %v2167
        %v2176 = vmul.f32 %v1992, %v2168
        %v2177 = vmul.f32 %v1993, %v2169
        %v2178 = vmul.f32 %v1994, %v2170
        %v2179 = vmul.f32 %v1963, 0.5
        %v2180 = vmul.f32 %v1964, 0.5
        %v2181 = vmul.f32 %v1965, 0.5
        %v2182 = vmul.f32 %v1966, 0.5
        %v2183 = vmul.f32 %v1967, 0.5
        %v2184 = vmul.f32 %v1968, 0.5
        %v2185 = vmul.f32 %v1969, 0.5
        %v2186 = vmul.f32 %v1970, 0.5
        %v2187 = vadd.f32 %v2171, 1.0
        %v2188 = vadd.f32 %v2172, 1.0
        %v2189 = vadd.f32 %v2173, 1.0
        %v2190 = vadd.f32 %v2174, 1.0
        %v2191 = vadd.f32 %v2175, 1.0
        %v2192 = vadd.f32 %v2176, 1.0
        %v2193 = vadd.f32 %v2177, 1.0
        %v2194 = vadd.f32 %v2178, 1.0
        %v2195 = vmul.f32 %v2179, %v2187
        %v2196 = vmul.f32 %v2180, %v2188
        %v2197 = vmul.f32 %v2181, %v2189
        %v2198 = vmul.f32 %v2182, %v2190
        %v2199 = vmul.f32 %v2183, %v2191
        %v2200 = vmul.f32 %v2184, %v2192
        %v2201 = vmul.f32 %v2185, %v2193
        %v2202 = vmul.f32 %v2186, %v2194
        %v2203 = vld [vmem:[%s6] sm:$0xff]
        %v2204 = vld [vmem:[%s6 + $0x8] sm:$0xff]
        %v2206 = vsel %vm1524, %v2203, 0
        %v2209 = vsel %vm1524, %v2204, 0
        %2211 = vmatprep.subr.mxu0 %v2196
        %2212 = vmatpush1.msra.mxu0 %v2195
        %2213 = vmatprep.subr.mxu0 %v2200
        %2214 = vmatpush1.msra.mxu0 %v2199
        %2215 = vmatprep.subr.mxu0 0.0
        %2216 = vmatpush1.msra.mxu0 0.0
        %2217 = vmatprep.subr.mxu0 0.0
        %2218 = vmatpush1.msra.mxu0 0.0
        %2219 = vmatprep.subr.mxu0 0.0
        %2220 = vmatpush1.msra.mxu0 0.0
        %2221 = vmatprep.subr.mxu0 0.0
        %2222 = vmatpush1.msra.mxu0 0.0
        %2223 = vmatprep.subr.mxu0 0.0
        %2224 = vmatpush1.msra.mxu0 0.0
        %2225 = vmatprep.subr.mxu0 0.0
        %2226 = vmatpush1.msra.mxu0 0.0
        %2227 = vmatprep.subr.mxu0 0.0
        %2228 = vmatpush1.msra.mxu0 0.0
        %2229 = vmatprep.subr.mxu0 0.0
        %2230 = vmatpush1.msra.mxu0 0.0
        %2231 = vmatprep.subr.mxu0 0.0
        %2232 = vmatpush1.msra.mxu0 0.0
        %2233 = vmatprep.subr.mxu0 0.0
        %2234 = vmatpush1.msra.mxu0 0.0
        %2235 = vmatprep.subr.mxu0 0.0
        %2236 = vmatpush1.msra.mxu0 0.0
        %2237 = vmatprep.subr.mxu0 0.0
        %2238 = vmatpush1.msra.mxu0 0.0
        %2239 = vmatprep.subr.mxu0 0.0
        %2240 = vmatpush1.msra.mxu0 0.0
        %2241 = vmatprep.subr.mxu0 0.0
        %2242 = vmatpush1.msra.mxu0 0.0
        %2243 = vmatprep.subr.mxu0 0.0
        %2244 = vmatpush1.msra.mxu0 0.0
        %2245 = vmatprep.subr.mxu0 0.0
        %2246 = vmatpush1.msra.mxu0 0.0
        %2247 = vmatprep.subr.mxu0 0.0
        %2248 = vmatpush1.msra.mxu0 0.0
        %2249 = vmatprep.subr.mxu0 0.0
        %2250 = vmatpush1.msra.mxu0 0.0
        %2251 = vmatprep.subr.mxu0 0.0
        %2252 = vmatpush1.msra.mxu0 0.0
        %2253 = vmatprep.subr.mxu0 0.0
        %2254 = vmatpush1.msra.mxu0 0.0
        %2255 = vmatprep.subr.mxu0 0.0
        %2256 = vmatpush1.msra.mxu0 0.0
        %2257 = vmatprep.subr.mxu0 0.0
        %2258 = vmatpush1.msra.mxu0 0.0
        %2259 = vmatprep.subr.mxu0 0.0
        %2260 = vmatpush1.msra.mxu0 0.0
        %2261 = vmatprep.subr.mxu0 0.0
        %2262 = vmatpush1.msra.mxu0 0.0
        %2263 = vmatprep.subr.mxu0 0.0
        %2264 = vmatpush1.msra.mxu0 0.0
        %2265 = vmatprep.subr.mxu0 0.0
        %2266 = vmatpush1.msra.mxu0 0.0
        %2267 = vmatprep.subr.mxu0 0.0
        %2268 = vmatpush1.msra.mxu0 0.0
        %2269 = vmatprep.subr.mxu0 0.0
        %2270 = vmatpush1.msra.mxu0 0.0
        %2271 = vmatprep.subr.mxu0 0.0
        %2272 = vmatpush1.msra.mxu0 0.0
        %2273 = vmatprep.subr.mxu0 0.0
        %2274 = vmatpush1.msra.mxu0 0.0
        %2275 = vmatprep.mubr.f32.mxu0 0.0
        %2276 = vmatmul.mubr.f32.gmra.mrb[0].mxu0 %v2206
        %v2277 = vpop.f32.mrb[0].mxu0
        %v2278 = vadd.f32 0.0, %v2277
        %v2279 = vpop.f32.mrb[0].mxu0
        %v2280 = vadd.f32 0.0, %v2279
        %2281 = vmatprep.mubr.f32.mxu0 0.0
        %2282 = vmatmul.mubr.f32.gmra.mrb[0].mxu0 %v2209
        %v2283 = vpop.f32.mrb[0].mxu0
        %v2284 = vadd.f32 0.0, %v2283
        %v2285 = vpop.f32.mrb[0].mxu0
        %v2286 = vadd.f32 0.0, %v2285
        %2287 = vdwg.mxu0
        %2288 = vmatprep.subr.mxu0 %v2198
        %2289 = vmatpush1.msra.mxu0 %v2197
        %2290 = vmatprep.subr.mxu0 %v2202
        %2291 = vmatpush1.msra.mxu0 %v2201
        %2292 = vmatprep.subr.mxu0 0.0
        %2293 = vmatpush1.msra.mxu0 0.0
        %2294 = vmatprep.subr.mxu0 0.0
        %2295 = vmatpush1.msra.mxu0 0.0
        %2296 = vmatprep.subr.mxu0 0.0
        %2297 = vmatpush1.msra.mxu0 0.0
        %2298 = vmatprep.subr.mxu0 0.0
        %2299 = vmatpush1.msra.mxu0 0.0
        %2300 = vmatprep.subr.mxu0 0.0
        %2301 = vmatpush1.msra.mxu0 0.0
        %2302 = vmatprep.subr.mxu0 0.0
        %2303 = vmatpush1.msra.mxu0 0.0
        %2304 = vmatprep.subr.mxu0 0.0
        %2305 = vmatpush1.msra.mxu0 0.0
        %2306 = vmatprep.subr.mxu0 0.0
        %2307 = vmatpush1.msra.mxu0 0.0
        %2308 = vmatprep.subr.mxu0 0.0
        %2309 = vmatpush1.msra.mxu0 0.0
        %2310 = vmatprep.subr.mxu0 0.0
        %2311 = vmatpush1.msra.mxu0 0.0
        %2312 = vmatprep.subr.mxu0 0.0
        %2313 = vmatpush1.msra.mxu0 0.0
        %2314 = vmatprep.subr.mxu0 0.0
        %2315 = vmatpush1.msra.mxu0 0.0
        %2316 = vmatprep.subr.mxu0 0.0
        %2317 = vmatpush1.msra.mxu0 0.0
        %2318 = vmatprep.subr.mxu0 0.0
        %2319 = vmatpush1.msra.mxu0 0.0
        %2320 = vmatprep.subr.mxu0 0.0
        %2321 = vmatpush1.msra.mxu0 0.0
        %2322 = vmatprep.subr.mxu0 0.0
        %2323 = vmatpush1.msra.mxu0 0.0
        %2324 = vmatprep.subr.mxu0 0.0
        %2325 = vmatpush1.msra.mxu0 0.0
        %2326 = vmatprep.subr.mxu0 0.0
        %2327 = vmatpush1.msra.mxu0 0.0
        %2328 = vmatprep.subr.mxu0 0.0
        %2329 = vmatpush1.msra.mxu0 0.0
        %2330 = vmatprep.subr.mxu0 0.0
        %2331 = vmatpush1.msra.mxu0 0.0
        %2332 = vmatprep.subr.mxu0 0.0
        %2333 = vmatpush1.msra.mxu0 0.0
        %2334 = vmatprep.subr.mxu0 0.0
        %2335 = vmatpush1.msra.mxu0 0.0
        %2336 = vmatprep.subr.mxu0 0.0
        %2337 = vmatpush1.msra.mxu0 0.0
        %2338 = vmatprep.subr.mxu0 0.0
        %2339 = vmatpush1.msra.mxu0 0.0
        %2340 = vmatprep.subr.mxu0 0.0
        %2341 = vmatpush1.msra.mxu0 0.0
        %2342 = vmatprep.subr.mxu0 0.0
        %2343 = vmatpush1.msra.mxu0 0.0
        %2344 = vmatprep.subr.mxu0 0.0
        %2345 = vmatpush1.msra.mxu0 0.0
        %2346 = vmatprep.subr.mxu0 0.0
        %2347 = vmatpush1.msra.mxu0 0.0
        %2348 = vmatprep.subr.mxu0 0.0
        %2349 = vmatpush1.msra.mxu0 0.0
        %2350 = vmatprep.subr.mxu0 0.0
        %2351 = vmatpush1.msra.mxu0 0.0
        %2352 = vmatprep.mubr.f32.mxu0 0.0
        %2353 = vmatmul.mubr.f32.gmra.mrb[0].mxu0 %v2206
        %v2354 = vpop.f32.mrb[0].mxu0
        %v2355 = vadd.f32 0.0, %v2354
        %v2356 = vpop.f32.mrb[0].mxu0
        %v2357 = vadd.f32 0.0, %v2356
        %2358 = vmatprep.mubr.f32.mxu0 0.0
        %2359 = vmatmul.mubr.f32.gmra.mrb[0].mxu0 %v2209
        %v2360 = vpop.f32.mrb[0].mxu0
        %v2361 = vadd.f32 0.0, %v2360
        %v2362 = vpop.f32.mrb[0].mxu0
        %v2363 = vadd.f32 0.0, %v2362
        %2364 = vdwg.mxu0
        %v2365 = vld [vmem:[%s9] sm:$0xff]
        %v2366 = vld [vmem:[%s9 + $0x8] sm:$0xff]
        %v2367 = vld [vmem:[%s7] sm:$0xff]
        %v2368 = vld [vmem:[%s7 + $0x8] sm:$0xff]
        %v2369 = vld [vmem:[%s8] sm:$0xff]
        %v2370 = vld [vmem:[%s8 + $0x8] sm:$0xff]
        %v2371 = vmul.f32 %v2278, %v1696
        %v2372 = vmul.f32 %v2280, %v1700
        %v2373 = vmul.f32 %v2355, %v1704
        %v2374 = vmul.f32 %v2357, %v1708
        %v2375 = vmul.f32 %v2284, %v1696
        %v2376 = vmul.f32 %v2286, %v1700
        %v2377 = vmul.f32 %v2361, %v1704
        %v2378 = vmul.f32 %v2363, %v1708
        %v2379 = vadd.f32 %v2371, %v2372
        %v2380 = vadd.f32 %v2379, %v2373
        %v2381 = vadd.f32 %v2380, %v2374
        %2382 = vadd.xlane.f32.xlu0 %v2381
        %v2383 = vpop.xlane.xlu0 %2382
        %v2384 = vadd.f32 %v2375, %v2376
        %v2385 = vadd.f32 %v2384, %v2377
        %v2386 = vadd.f32 %v2385, %v2378
        %2387 = vadd.xlane.f32.xlu0 %v2386
        %v2388 = vpop.xlane.xlu0 %2387
        %v2390 = vsel %vm1524, %v2365, 0
        %v2393 = vsel %vm1524, %v2366, 0
        %2395 = vmatprep.subr.mxu0 0.0
        %2396 = vmatpush1.msra.mxu0 %v2383
        %2397 = vmatprep.subr.mxu0 0.0
        %2398 = vmatpush1.msra.mxu0 %v2388
        %2399 = vmatprep.subr.mxu0 0.0
        %2400 = vmatpush1.msra.mxu0 0.0
        %2401 = vmatprep.subr.mxu0 0.0
        %2402 = vmatpush1.msra.mxu0 0.0
        %2403 = vmatprep.subr.mxu0 0.0
        %2404 = vmatpush1.msra.mxu0 0.0
        %2405 = vmatprep.subr.mxu0 0.0
        %2406 = vmatpush1.msra.mxu0 0.0
        %2407 = vmatprep.subr.mxu0 0.0
        %2408 = vmatpush1.msra.mxu0 0.0
        %2409 = vmatprep.subr.mxu0 0.0
        %2410 = vmatpush1.msra.mxu0 0.0
        %2411 = vmatprep.subr.mxu0 0.0
        %2412 = vmatpush1.msra.mxu0 0.0
        %2413 = vmatprep.subr.mxu0 0.0
        %2414 = vmatpush1.msra.mxu0 0.0
        %2415 = vmatprep.subr.mxu0 0.0
        %2416 = vmatpush1.msra.mxu0 0.0
        %2417 = vmatprep.subr.mxu0 0.0
        %2418 = vmatpush1.msra.mxu0 0.0
        %2419 = vmatprep.subr.mxu0 0.0
        %2420 = vmatpush1.msra.mxu0 0.0
        %2421 = vmatprep.subr.mxu0 0.0
        %2422 = vmatpush1.msra.mxu0 0.0
        %2423 = vmatprep.subr.mxu0 0.0
        %2424 = vmatpush1.msra.mxu0 0.0
        %2425 = vmatprep.subr.mxu0 0.0
        %2426 = vmatpush1.msra.mxu0 0.0
        %2427 = vmatprep.subr.mxu0 0.0
        %2428 = vmatpush1.msra.mxu0 0.0
        %2429 = vmatprep.subr.mxu0 0.0
        %2430 = vmatpush1.msra.mxu0 0.0
        %2431 = vmatprep.subr.mxu0 0.0
        %2432 = vmatpush1.msra.mxu0 0.0
        %2433 = vmatprep.subr.mxu0 0.0
        %2434 = vmatpush1.msra.mxu0 0.0
        %2435 = vmatprep.subr.mxu0 0.0
        %2436 = vmatpush1.msra.mxu0 0.0
        %2437 = vmatprep.subr.mxu0 0.0
        %2438 = vmatpush1.msra.mxu0 0.0
        %2439 = vmatprep.subr.mxu0 0.0
        %2440 = vmatpush1.msra.mxu0 0.0
        %2441 = vmatprep.subr.mxu0 0.0
        %2442 = vmatpush1.msra.mxu0 0.0
        %2443 = vmatprep.subr.mxu0 0.0
        %2444 = vmatpush1.msra.mxu0 0.0
        %2445 = vmatprep.subr.mxu0 0.0
        %2446 = vmatpush1.msra.mxu0 0.0
        %2447 = vmatprep.subr.mxu0 0.0
        %2448 = vmatpush1.msra.mxu0 0.0
        %2449 = vmatprep.subr.mxu0 0.0
        %2450 = vmatpush1.msra.mxu0 0.0
        %2451 = vmatprep.subr.mxu0 0.0
        %2452 = vmatpush1.msra.mxu0 0.0
        %2453 = vmatprep.subr.mxu0 0.0
        %2454 = vmatpush1.msra.mxu0 0.0
        %2455 = vmatprep.subr.mxu0 0.0
        %2456 = vmatpush1.msra.mxu0 0.0
        %2457 = vmatprep.subr.mxu0 0.0
        %2458 = vmatpush1.msra.mxu0 0.0
        %2459 = vmatprep.mubr.f32.mxu0 0.0
        %2460 = vmatmul.mubr.f32.gmra.mrb[0].mxu0 %v2390
        %v2461 = vpop.f32.mrb[0].mxu0
        %v2462 = vadd.f32 0.0, %v2461
        %v2463 = vpop.f32.mrb[0].mxu0
        %2464 = vmatprep.mubr.f32.mxu0 0.0
        %2465 = vmatmul.mubr.f32.gmra.mrb[0].mxu0 %v2393
        %v2466 = vpop.f32.mrb[0].mxu0
        %v2467 = vadd.f32 0.0, %v2466
        %v2468 = vpop.f32.mrb[0].mxu0
        %2469 = vdwg.mxu0
        %2471 = vset.pattern.permute.xlu0 0
        %2472 = vperm.xlu0 %2471, %v2462
        %v2473 = vpop.permute.xlu0 %2472
        %2476 = vset.pattern.permute.xlu0 0
        %2477 = vperm.xlu0 %2476, %v2467
        %v2478 = vpop.permute.xlu0 %2477
        %v2480 = vsub.f32 %v2278, %v2473
        %v2481 = vsub.f32 %v2280, %v2473
        %v2482 = vsub.f32 %v2355, %v2473
        %v2483 = vsub.f32 %v2357, %v2473
        %v2484 = vsub.f32 %v2284, %v2478
        %v2485 = vsub.f32 %v2286, %v2478
        %v2486 = vsub.f32 %v2361, %v2478
        %v2487 = vsub.f32 %v2363, %v2478
        %v2488 = vmul.f32 %v2480, %v2480
        %v2489 = vmul.f32 %v2481, %v2481
        %v2490 = vmul.f32 %v2482, %v2482
        %v2491 = vmul.f32 %v2483, %v2483
        %v2492 = vmul.f32 %v2484, %v2484
        %v2493 = vmul.f32 %v2485, %v2485
        %v2494 = vmul.f32 %v2486, %v2486
        %v2495 = vmul.f32 %v2487, %v2487
        %v2496 = vmul.f32 %v2488, %v1696
        %v2497 = vmul.f32 %v2489, %v1700
        %v2498 = vmul.f32 %v2490, %v1704
        %v2499 = vmul.f32 %v2491, %v1708
        %v2500 = vmul.f32 %v2492, %v1696
        %v2501 = vmul.f32 %v2493, %v1700
        %v2502 = vmul.f32 %v2494, %v1704
        %v2503 = vmul.f32 %v2495, %v1708
        %v2504 = vadd.f32 %v2496, %v2497
        %v2505 = vadd.f32 %v2504, %v2498
        %v2506 = vadd.f32 %v2505, %v2499
        %2507 = vadd.xlane.f32.xlu0 %v2506
        %v2508 = vpop.xlane.xlu0 %2507
        %v2509 = vadd.f32 %v2500, %v2501
        %v2510 = vadd.f32 %v2509, %v2502
        %v2511 = vadd.f32 %v2510, %v2503
        %2512 = vadd.xlane.f32.xlu0 %v2511
        %v2513 = vpop.xlane.xlu0 %2512
        %2514 = vmatprep.subr.mxu0 0.0
        %2515 = vmatpush1.msra.mxu0 %v2508
        %2516 = vmatprep.subr.mxu0 0.0
        %2517 = vmatpush1.msra.mxu0 %v2513
        %2518 = vmatprep.subr.mxu0 0.0
        %2519 = vmatpush1.msra.mxu0 0.0
        %2520 = vmatprep.subr.mxu0 0.0
        %2521 = vmatpush1.msra.mxu0 0.0
        %2522 = vmatprep.subr.mxu0 0.0
        %2523 = vmatpush1.msra.mxu0 0.0
        %2524 = vmatprep.subr.mxu0 0.0
        %2525 = vmatpush1.msra.mxu0 0.0
        %2526 = vmatprep.subr.mxu0 0.0
        %2527 = vmatpush1.msra.mxu0 0.0
        %2528 = vmatprep.subr.mxu0 0.0
        %2529 = vmatpush1.msra.mxu0 0.0
        %2530 = vmatprep.subr.mxu0 0.0
        %2531 = vmatpush1.msra.mxu0 0.0
        %2532 = vmatprep.subr.mxu0 0.0
        %2533 = vmatpush1.msra.mxu0 0.0
        %2534 = vmatprep.subr.mxu0 0.0
        %2535 = vmatpush1.msra.mxu0 0.0
        %2536 = vmatprep.subr.mxu0 0.0
        %2537 = vmatpush1.msra.mxu0 0.0
        %2538 = vmatprep.subr.mxu0 0.0
        %2539 = vmatpush1.msra.mxu0 0.0
        %2540 = vmatprep.subr.mxu0 0.0
        %2541 = vmatpush1.msra.mxu0 0.0
        %2542 = vmatprep.subr.mxu0 0.0
        %2543 = vmatpush1.msra.mxu0 0.0
        %2544 = vmatprep.subr.mxu0 0.0
        %2545 = vmatpush1.msra.mxu0 0.0
        %2546 = vmatprep.subr.mxu0 0.0
        %2547 = vmatpush1.msra.mxu0 0.0
        %2548 = vmatprep.subr.mxu0 0.0
        %2549 = vmatpush1.msra.mxu0 0.0
        %2550 = vmatprep.subr.mxu0 0.0
        %2551 = vmatpush1.msra.mxu0 0.0
        %2552 = vmatprep.subr.mxu0 0.0
        %2553 = vmatpush1.msra.mxu0 0.0
        %2554 = vmatprep.subr.mxu0 0.0
        %2555 = vmatpush1.msra.mxu0 0.0
        %2556 = vmatprep.subr.mxu0 0.0
        %2557 = vmatpush1.msra.mxu0 0.0
        %2558 = vmatprep.subr.mxu0 0.0
        %2559 = vmatpush1.msra.mxu0 0.0
        %2560 = vmatprep.subr.mxu0 0.0
        %2561 = vmatpush1.msra.mxu0 0.0
        %2562 = vmatprep.subr.mxu0 0.0
        %2563 = vmatpush1.msra.mxu0 0.0
        %2564 = vmatprep.subr.mxu0 0.0
        %2565 = vmatpush1.msra.mxu0 0.0
        %2566 = vmatprep.subr.mxu0 0.0
        %2567 = vmatpush1.msra.mxu0 0.0
        %2568 = vmatprep.subr.mxu0 0.0
        %2569 = vmatpush1.msra.mxu0 0.0
        %2570 = vmatprep.subr.mxu0 0.0
        %2571 = vmatpush1.msra.mxu0 0.0
        %2572 = vmatprep.subr.mxu0 0.0
        %2573 = vmatpush1.msra.mxu0 0.0
        %2574 = vmatprep.subr.mxu0 0.0
        %2575 = vmatpush1.msra.mxu0 0.0
        %2576 = vmatprep.subr.mxu0 0.0
        %2577 = vmatpush1.msra.mxu0 0.0
        %2578 = vmatprep.mubr.f32.mxu0 0.0
        %2579 = vmatmul.mubr.f32.gmra.mrb[0].mxu0 %v2390
        %v2580 = vpop.f32.mrb[0].mxu0
        %v2581 = vadd.f32 1e-05, %v2580
        %v2582 = vpop.f32.mrb[0].mxu0
        %2583 = vmatprep.mubr.f32.mxu0 0.0
        %2584 = vmatmul.mubr.f32.gmra.mrb[0].mxu0 %v2393
        %v2585 = vpop.f32.mrb[0].mxu0
        %v2586 = vadd.f32 1e-05, %v2585
        %v2587 = vpop.f32.mrb[0].mxu0
        %2588 = vdwg.mxu0
        %v2589 = vrsqrt.pop %v2581
        %v2590 = vrsqrt.pop %v2586
        %v2591 = vmul.f32 %v2589, %v2367
        %v2592 = vmul.f32 %v2590, %v2368
        %2594 = vset.pattern.permute.xlu0 0
        %2595 = vperm.xlu0 %2594, %v2591
        %v2596 = vpop.permute.xlu0 %2595
        %2599 = vset.pattern.permute.xlu0 0
        %2600 = vperm.xlu0 %2599, %v2592
        %v2601 = vpop.permute.xlu0 %2600
        %v2603 = vmul.f32 %v2480, %v2596
        %v2604 = vmul.f32 %v2481, %v2596
        %v2605 = vmul.f32 %v2482, %v2596
        %v2606 = vmul.f32 %v2483, %v2596
        %v2607 = vmul.f32 %v2484, %v2601
        %v2608 = vmul.f32 %v2485, %v2601
        %v2609 = vmul.f32 %v2486, %v2601
        %v2610 = vmul.f32 %v2487, %v2601
        %2612 = vset.pattern.permute.xlu0 0
        %2613 = vperm.xlu0 %2612, %v2369
        %v2614 = vpop.permute.xlu0 %2613
        %2617 = vset.pattern.permute.xlu0 0
        %2618 = vperm.xlu0 %2617, %v2370
        %v2619 = vpop.permute.xlu0 %2618
        %v2621 = vadd.f32 %v2603, %v2614
        %v2622 = vadd.f32 %v2604, %v2614
        %v2623 = vadd.f32 %v2605, %v2614
        %v2624 = vadd.f32 %v2606, %v2614
        %v2625 = vadd.f32 %v2607, %v2619
        %v2626 = vadd.f32 %v2608, %v2619
        %v2627 = vadd.f32 %v2609, %v2619
        %v2628 = vadd.f32 %v2610, %v2619
        %v2629 = vmul.f32 %v2621, 0.70710677
        %v2630 = vmul.f32 %v2622, 0.70710677
        %v2631 = vmul.f32 %v2623, 0.70710677
        %v2632 = vmul.f32 %v2624, 0.70710677
        %v2633 = vmul.f32 %v2625, 0.70710677
        %v2634 = vmul.f32 %v2626, 0.70710677
        %v2635 = vmul.f32 %v2627, 0.70710677
        %v2636 = vmul.f32 %v2628, 0.70710677
        %vm2637 = vcmp.ge.f32.partialorder %v2629, 0.0
        %vm2638 = vcmp.ge.f32.partialorder %v2630, 0.0
        %vm2639 = vcmp.ge.f32.partialorder %v2631, 0.0
        %vm2640 = vcmp.ge.f32.partialorder %v2632, 0.0
        %vm2641 = vcmp.ge.f32.partialorder %v2633, 0.0
        %vm2642 = vcmp.ge.f32.partialorder %v2634, 0.0
        %vm2643 = vcmp.ge.f32.partialorder %v2635, 0.0
        %vm2644 = vcmp.ge.f32.partialorder %v2636, 0.0
        %v2645 = vsel %vm2637, 1.0, -1.0
        %v2646 = vsel %vm2638, 1.0, -1.0
        %v2647 = vsel %vm2639, 1.0, -1.0
        %v2648 = vsel %vm2640, 1.0, -1.0
        %v2649 = vsel %vm2641, 1.0, -1.0
        %v2650 = vsel %vm2642, 1.0, -1.0
        %v2651 = vsel %vm2643, 1.0, -1.0
        %v2652 = vsel %vm2644, 1.0, -1.0
        %v2653 = vand.u32 2147483647, %v2629
        %v2654 = vand.u32 2147483647, %v2630
        %v2655 = vand.u32 2147483647, %v2631
        %v2656 = vand.u32 2147483647, %v2632
        %v2657 = vand.u32 2147483647, %v2633
        %v2658 = vand.u32 2147483647, %v2634
        %v2659 = vand.u32 2147483647, %v2635
        %v2660 = vand.u32 2147483647, %v2636
        %v2661 = vmul.f32 %v2653, 0.3275911
        %v2662 = vmul.f32 %v2654, 0.3275911
        %v2663 = vmul.f32 %v2655, 0.3275911
        %v2664 = vmul.f32 %v2656, 0.3275911
        %v2665 = vmul.f32 %v2657, 0.3275911
        %v2666 = vmul.f32 %v2658, 0.3275911
        %v2667 = vmul.f32 %v2659, 0.3275911
        %v2668 = vmul.f32 %v2660, 0.3275911
        %v2669 = vadd.f32 %v2661, 1.0
        %v2670 = vadd.f32 %v2662, 1.0
        %v2671 = vadd.f32 %v2663, 1.0
        %v2672 = vadd.f32 %v2664, 1.0
        %v2673 = vadd.f32 %v2665, 1.0
        %v2674 = vadd.f32 %v2666, 1.0
        %v2675 = vadd.f32 %v2667, 1.0
        %v2676 = vadd.f32 %v2668, 1.0
        %v2677 = vrcp.pop %v2669
        %v2678 = vrcp.pop %v2670
        %v2679 = vrcp.pop %v2671
        %v2680 = vrcp.pop %v2672
        %v2681 = vrcp.pop %v2673
        %v2682 = vrcp.pop %v2674
        %v2683 = vrcp.pop %v2675
        %v2684 = vrcp.pop %v2676
        %v2685 = vmul.f32 %v2669, %v2677
        %v2686 = vmul.f32 %v2670, %v2678
        %v2687 = vmul.f32 %v2671, %v2679
        %v2688 = vmul.f32 %v2672, %v2680
        %v2689 = vmul.f32 %v2673, %v2681
        %v2690 = vmul.f32 %v2674, %v2682
        %v2691 = vmul.f32 %v2675, %v2683
        %v2692 = vmul.f32 %v2676, %v2684
        %v2693 = vsub.f32 2.0, %v2685
        %v2694 = vsub.f32 2.0, %v2686
        %v2695 = vsub.f32 2.0, %v2687
        %v2696 = vsub.f32 2.0, %v2688
        %v2697 = vsub.f32 2.0, %v2689
        %v2698 = vsub.f32 2.0, %v2690
        %v2699 = vsub.f32 2.0, %v2691
        %v2700 = vsub.f32 2.0, %v2692
        %v2701 = vmul.f32 %v2677, %v2693
        %v2702 = vmul.f32 %v2678, %v2694
        %v2703 = vmul.f32 %v2679, %v2695
        %v2704 = vmul.f32 %v2680, %v2696
        %v2705 = vmul.f32 %v2681, %v2697
        %v2706 = vmul.f32 %v2682, %v2698
        %v2707 = vmul.f32 %v2683, %v2699
        %v2708 = vmul.f32 %v2684, %v2700
        %v2709 = vmul.f32 %v2701, 1.0614054
        %v2710 = vmul.f32 %v2702, 1.0614054
        %v2711 = vmul.f32 %v2703, 1.0614054
        %v2712 = vmul.f32 %v2704, 1.0614054
        %v2713 = vmul.f32 %v2705, 1.0614054
        %v2714 = vmul.f32 %v2706, 1.0614054
        %v2715 = vmul.f32 %v2707, 1.0614054
        %v2716 = vmul.f32 %v2708, 1.0614054
        %v2717 = vadd.f32 %v2709, -1.4531521
        %v2718 = vadd.f32 %v2710, -1.4531521
        %v2719 = vadd.f32 %v2711, -1.4531521
        %v2720 = vadd.f32 %v2712, -1.4531521
        %v2721 = vadd.f32 %v2713, -1.4531521
        %v2722 = vadd.f32 %v2714, -1.4531521
        %v2723 = vadd.f32 %v2715, -1.4531521
        %v2724 = vadd.f32 %v2716, -1.4531521
        %v2725 = vmul.f32 %v2717, %v2701
        %v2726 = vmul.f32 %v2718, %v2702
        %v2727 = vmul.f32 %v2719, %v2703
        %v2728 = vmul.f32 %v2720, %v2704
        %v2729 = vmul.f32 %v2721, %v2705
        %v2730 = vmul.f32 %v2722, %v2706
        %v2731 = vmul.f32 %v2723, %v2707
        %v2732 = vmul.f32 %v2724, %v2708
        %v2733 = vadd.f32 %v2725, 1.4214138
        %v2734 = vadd.f32 %v2726, 1.4214138
        %v2735 = vadd.f32 %v2727, 1.4214138
        %v2736 = vadd.f32 %v2728, 1.4214138
        %v2737 = vadd.f32 %v2729, 1.4214138
        %v2738 = vadd.f32 %v2730, 1.4214138
        %v2739 = vadd.f32 %v2731, 1.4214138
        %v2740 = vadd.f32 %v2732, 1.4214138
        %v2741 = vmul.f32 %v2733, %v2701
        %v2742 = vmul.f32 %v2734, %v2702
        %v2743 = vmul.f32 %v2735, %v2703
        %v2744 = vmul.f32 %v2736, %v2704
        %v2745 = vmul.f32 %v2737, %v2705
        %v2746 = vmul.f32 %v2738, %v2706
        %v2747 = vmul.f32 %v2739, %v2707
        %v2748 = vmul.f32 %v2740, %v2708
        %v2749 = vadd.f32 %v2741, -0.28449672
        %v2750 = vadd.f32 %v2742, -0.28449672
        %v2751 = vadd.f32 %v2743, -0.28449672
        %v2752 = vadd.f32 %v2744, -0.28449672
        %v2753 = vadd.f32 %v2745, -0.28449672
        %v2754 = vadd.f32 %v2746, -0.28449672
        %v2755 = vadd.f32 %v2747, -0.28449672
        %v2756 = vadd.f32 %v2748, -0.28449672
        %v2757 = vmul.f32 %v2749, %v2701
        %v2758 = vmul.f32 %v2750, %v2702
        %v2759 = vmul.f32 %v2751, %v2703
        %v2760 = vmul.f32 %v2752, %v2704
        %v2761 = vmul.f32 %v2753, %v2705
        %v2762 = vmul.f32 %v2754, %v2706
        %v2763 = vmul.f32 %v2755, %v2707
        %v2764 = vmul.f32 %v2756, %v2708
        %v2765 = vadd.f32 %v2757, 0.2548296
        %v2766 = vadd.f32 %v2758, 0.2548296
        %v2767 = vadd.f32 %v2759, 0.2548296
        %v2768 = vadd.f32 %v2760, 0.2548296
        %v2769 = vadd.f32 %v2761, 0.2548296
        %v2770 = vadd.f32 %v2762, 0.2548296
        %v2771 = vadd.f32 %v2763, 0.2548296
        %v2772 = vadd.f32 %v2764, 0.2548296
        %v2773 = vmul.f32 %v2765, %v2701
        %v2774 = vmul.f32 %v2766, %v2702
        %v2775 = vmul.f32 %v2767, %v2703
        %v2776 = vmul.f32 %v2768, %v2704
        %v2777 = vmul.f32 %v2769, %v2705
        %v2778 = vmul.f32 %v2770, %v2706
        %v2779 = vmul.f32 %v2771, %v2707
        %v2780 = vmul.f32 %v2772, %v2708
        %v2781 = vsub.f32 0.0, %v2653
        %v2782 = vsub.f32 0.0, %v2654
        %v2783 = vsub.f32 0.0, %v2655
        %v2784 = vsub.f32 0.0, %v2656
        %v2785 = vsub.f32 0.0, %v2657
        %v2786 = vsub.f32 0.0, %v2658
        %v2787 = vsub.f32 0.0, %v2659
        %v2788 = vsub.f32 0.0, %v2660
        %v2789 = vmul.f32 %v2781, %v2653
        %v2790 = vmul.f32 %v2782, %v2654
        %v2791 = vmul.f32 %v2783, %v2655
        %v2792 = vmul.f32 %v2784, %v2656
        %v2793 = vmul.f32 %v2785, %v2657
        %v2794 = vmul.f32 %v2786, %v2658
        %v2795 = vmul.f32 %v2787, %v2659
        %v2796 = vmul.f32 %v2788, %v2660
        %v2797 = vmul.f32 %v2789, 1.442695
        %v2798 = vpow.pop %v2797
        %v2799 = vmul.f32 %v2790, 1.442695
        %v2800 = vpow.pop %v2799
        %v2801 = vmul.f32 %v2791, 1.442695
        %v2802 = vpow.pop %v2801
        %v2803 = vmul.f32 %v2792, 1.442695
        %v2804 = vpow.pop %v2803
        %v2805 = vmul.f32 %v2793, 1.442695
        %v2806 = vpow.pop %v2805
        %v2807 = vmul.f32 %v2794, 1.442695
        %v2808 = vpow.pop %v2807
        %v2809 = vmul.f32 %v2795, 1.442695
        %v2810 = vpow.pop %v2809
        %v2811 = vmul.f32 %v2796, 1.442695
        %v2812 = vpow.pop %v2811
        %v2813 = vmul.f32 %v2773, %v2798
        %v2814 = vmul.f32 %v2774, %v2800
        %v2815 = vmul.f32 %v2775, %v2802
        %v2816 = vmul.f32 %v2776, %v2804
        %v2817 = vmul.f32 %v2777, %v2806
        %v2818 = vmul.f32 %v2778, %v2808
        %v2819 = vmul.f32 %v2779, %v2810
        %v2820 = vmul.f32 %v2780, %v2812
        %v2821 = vsub.f32 1.0, %v2813
        %v2822 = vsub.f32 1.0, %v2814
        %v2823 = vsub.f32 1.0, %v2815
        %v2824 = vsub.f32 1.0, %v2816
        %v2825 = vsub.f32 1.0, %v2817
        %v2826 = vsub.f32 1.0, %v2818
        %v2827 = vsub.f32 1.0, %v2819
        %v2828 = vsub.f32 1.0, %v2820
        %v2829 = vmul.f32 %v2645, %v2821
        %v2830 = vmul.f32 %v2646, %v2822
        %v2831 = vmul.f32 %v2647, %v2823
        %v2832 = vmul.f32 %v2648, %v2824
        %v2833 = vmul.f32 %v2649, %v2825
        %v2834 = vmul.f32 %v2650, %v2826
        %v2835 = vmul.f32 %v2651, %v2827
        %v2836 = vmul.f32 %v2652, %v2828
        %v2837 = vmul.f32 %v2621, 0.5
        %v2838 = vmul.f32 %v2622, 0.5
        %v2839 = vmul.f32 %v2623, 0.5
        %v2840 = vmul.f32 %v2624, 0.5
        %v2841 = vmul.f32 %v2625, 0.5
        %v2842 = vmul.f32 %v2626, 0.5
        %v2843 = vmul.f32 %v2627, 0.5
        %v2844 = vmul.f32 %v2628, 0.5
        %v2845 = vadd.f32 %v2829, 1.0
        %v2846 = vadd.f32 %v2830, 1.0
        %v2847 = vadd.f32 %v2831, 1.0
        %v2848 = vadd.f32 %v2832, 1.0
        %v2849 = vadd.f32 %v2833, 1.0
        %v2850 = vadd.f32 %v2834, 1.0
        %v2851 = vadd.f32 %v2835, 1.0
        %v2852 = vadd.f32 %v2836, 1.0
        %v2853 = vmul.f32 %v2837, %v2845
        %v2854 = vmul.f32 %v2838, %v2846
        %v2855 = vmul.f32 %v2839, %v2847
        %v2856 = vmul.f32 %v2840, %v2848
        %v2857 = vmul.f32 %v2841, %v2849
        %v2858 = vmul.f32 %v2842, %v2850
        %v2859 = vmul.f32 %v2843, %v2851
        %v2860 = vmul.f32 %v2844, %v2852
        %2861 = vst [vmem:[%s388] sm:$0xff] %v2853
        %2862 = vst [vmem:[%s388 + $0x8] sm:$0xff] %v2854
        %2863 = vst [vmem:[%s388 + $0x10] sm:$0xff] %v2855
        %2864 = vst [vmem:[%s388 + $0x18] sm:$0xff] %v2856
        %2865 = vst [vmem:[%s388 + $0x20] sm:$0xff] %v2857
        %2866 = vst [vmem:[%s388 + $0x28] sm:$0xff] %v2858
        %2867 = vst [vmem:[%s388 + $0x30] sm:$0xff] %v2859
        %2868 = vst [vmem:[%s388 + $0x38] sm:$0xff] %v2860
        %s2869 = sand.u32 %s251, 1
        %s2870 = scalar_lea.sflag [#allocation5], %s2869
        %s2871 = sand.u32 %s251, 1
        %s2872 = smul.addr %s2871, 64
        %s2873 = scalar_lea.vmem [#allocation8], %s2872
        // Predicated region
        $region69: #{tpu_custom_call.1} parent=59 // pred_check
          %p2874 = pneg %p261
        $region70: #{tpu_custom_call.1} parent=59 // pred_check_branch
          %2876 = sbr.rel (%p2874) target = $region72
        $region71: #{tpu_custom_call.1} parent=59 // pred_region
          %s2878 = ssub.s32 1024, 1024
          %2879 = vsyncadd %s2870, %s2878
          %s2880 = smul.addr %s28, 8
          %s2881 = smul.addr %s2880, 128
          %s2882 = scalar_lea.hbm %s10, %s2881
          %s2883 = sshll.u32 %s2873, 4
          %s2884 = int_to_ptr.vmem [resolvable:$true] %s2883
          %2889 = dma.vmem_to_hbm [thread:$0]  %s2884, 1024, %s2882, %s2870, 512, 512, 32
        $region72: #{tpu_custom_call.1} parent=59 // pred_fallthru
          _
      $region60: #{tpu_custom_call.1} parent=5 // pred_fallthru
        _
      %p2890 = scmp.le.s32.totalorder 2, %s23
      // Predicated region
      $region73: #{tpu_custom_call.1} parent=5 // pred_check
        %p2891 = pneg %p2890
      $region74: #{tpu_custom_call.1} parent=5 // pred_check_branch
        %2893 = sbr.rel (%p2891) target = $region76
      $region75: #{tpu_custom_call.1} parent=5 // pred_region
        %s2894 = ssub.s32 %s23, 2
        // Predicated region
        $region77: #{tpu_custom_call.1} parent=75 // pred_check
          %p2895 = pneg %p267
        $region78: #{tpu_custom_call.1} parent=75 // pred_check_branch
          %2897 = sbr.rel (%p2895) target = $region80
        $region79: #{tpu_custom_call.1} parent=75 // pred_region
          %s2898 = sand.u32 %s252, 1
          %s2899 = scalar_lea.sflag [#allocation5], %s2898
          %s2900 = sand.u32 %s252, 1
          %s2901 = smul.addr %s2900, 64
          %s2902 = scalar_lea.vmem [#allocation8], %s2901
          %2903 = dma.done %s2899, 1024
        $region80: #{tpu_custom_call.1} parent=75 // pred_fallthru
          _
      $region76: #{tpu_custom_call.1} parent=5 // pred_fallthru
        _
    $region6: #{tpu_custom_call.1} parent=1 // loop_footer
      %s27 = sadd.s32 1, %s23
    $region7: #{tpu_custom_call.1} parent=1 // loop_footer_branch
      %22 = sbr.rel target = $region3
    $region8: #{tpu_custom_call.1} parent=1 // loop_exit
      _
    %2904 = vsyncpa [#allocation4], 1
    %s2905 = scalar_lea.sflag [#allocation4], 1
    %2906 = vsyncpa %s2905, 1
    %2907 = vsyncpa [#allocation7], 1
    %2908 = vsyncpa [#allocation5], 1
    %s2909 = scalar_lea.sflag [#allocation5], 1
    %2910 = vsyncpa %s2909, 1

</llo_original>
